<compile_context>
chip_gen: v7x
topology: tpu7x:2x2x1
jax: 0.10.0
libtpu: 0.0.40
codegen_flags: <defaults>
</compile_context>

<pallas_src>
import jax
import jax.numpy as jnp
from jax import lax
from jax.experimental import pallas as pl
from jax.experimental.pallas import tpu as pltpu

SLEN_HW = 5      # HoltsWintersNoTrend default slen
SLEN_ESRNN = 14  # ESRNN.slen (only used for season-forecast indexing; identity for pred_len=14)
HIDDEN = 16      # GRU hidden size
PRED_LEN = 14    # prediction length
LANES = 128      # TPU lane width


def esrnn_kernel(series_ref,       # (T, Bt)    f32 VMEM
                 shifts_ref,       # (1, Bt)    i32 VMEM
                 w_ih_ref,         # (3H, 1)    f32 VMEM
                 w_hh_ref,         # (3H, H)    f32 VMEM
                 b_ih_ref,         # (3H, 1)    f32 VMEM
                 b_hh_ref,         # (3H, 1)    f32 VMEM
                 w_lin_ref,        # (P, H)     f32 VMEM
                 b_lin_ref,        # (P, 1)     f32 VMEM
                 init_season_ref,  # (SLEN_HW,) f32 SMEM
                 alpha_ref,        # (1,)       f32 SMEM
                 out_ref):         # (P, Bt)    f32 VMEM
    T, B = series_ref.shape
    H = w_hh_ref.shape[1]

    alpha = alpha_ref[0]                                 # SMEM scalar
    shift_row = shifts_ref[...]                          # (1, B) int32

    def season_rows(nrows):
        # rows[r, b] = init_season[((r % 5) - shift_b) % 5] == torch.roll(init_season, shift_b)[r % 5]
        r_idx = lax.broadcasted_iota(jnp.int32, (nrows, B), 0)
        idx = jnp.mod(jnp.mod(r_idx, SLEN_HW) - shift_row, SLEN_HW)
        rows = jnp.zeros((nrows, B), jnp.float32)
        for k in range(SLEN_HW):
            rows = jnp.where(idx == k, init_season_ref[k], rows)
        return rows

    # The 5 seasonal phases; the gamma updates of the original module are dead code
    # (read index always < slen), so smoothed_season[:, t] == season5[t % 5].
    season5 = season_rows(SLEN_HW)                       # (5, B)

    # Hoisted (H, 1) weight / bias columns.  Broadcasting to (H, B) happens at the op so that
    # live temporaries stay <= (3H, B) even at wide batch tiles (no (3H, B) resident broadcasts).
    w_hh = w_hh_ref[...]                                 # (3H, H)
    w_ir, w_iz, w_in = (w_ih_ref[0:H, :], w_ih_ref[H:2 * H, :], w_ih_ref[2 * H:3 * H, :])
    b_r = b_ih_ref[0:H, :] + b_hh_ref[0:H, :]            # b_ir + b_hr
    b_z = b_ih_ref[H:2 * H, :] + b_hh_ref[H:2 * H, :]    # b_iz + b_hz
    b_in_c = b_ih_ref[2 * H:3 * H, :]                    # b_in  (not scaled by r)
    b_hn_c = b_hh_ref[2 * H:3 * H, :]                    # b_hn  (scaled by r)

    # Fused Holt-Winters level recurrence + de-season/de-level + GRU: one unrolled time loop.
    # No (T, Bt) intermediates, no scratch buffers, no masked single-row stores.
    # (For production T in the hundreds, switch to lax.fori_loop(..., unroll=4..8) reading
    #  series rows via ref[pl.ds(...)] to bound code size; at T=20 full unroll is best.)
    h = jnp.zeros((H, B), jnp.float32)
    lvl = series_ref[0:1, :]                             # level_0 = series[:, 0]
    for t in range(T):
        s_t = series_ref[t:t + 1, :]                     # (1, B) row load (vld slots have slack)
        p = t % SLEN_HW
        ratio_t = s_t / season5[p:p + 1, :]              # series / season
        if t > 0:
            lvl = alpha * ratio_t + (1.0 - alpha) * lvl  # HW level update (multiplicative)
        x_t = ratio_t / lvl                              # de-seasonalized, de-leveled input
        # GRU cell (PyTorch gate order r, z, n); gi uses VPU broadcast multiplies (no K=1 MXU op)
        gh = jnp.dot(w_hh, h, preferred_element_type=jnp.float32)   # (3H, B) on the MXU
        r = jax.nn.sigmoid(w_ir * x_t + b_r + gh[0:H, :])
        z = jax.nn.sigmoid(w_iz * x_t + b_z + gh[H:2 * H, :])
        n = jnp.tanh(w_in * x_t + b_in_c + r * (gh[2 * H:3 * H, :] + b_hn_c))
        h = (1.0 - z) * n + z * h

    # Linear head on the final hidden state.
    pred = jnp.dot(w_lin_ref[...], h, preferred_element_type=jnp.float32) + b_lin_ref[...]  # (P, B)

    # Season forecast: smoothed_season[:, i % SLEN_ESRNN] == season phase (i % 5) for i < 14.
    sf = season_rows(PRED_LEN)                           # (P, B)

    out_ref[...] = lvl * sf * pred                       # lane-dense (P, Bt) store


def _round_up(x, m):
    return ((x + m - 1) // m) * m


def _choose_tiling(batch, b_tile):
    """Lane-dense batch tiling.  Wide default tile (512) amortizes the serial GRU chain and the
    ~0.35us per-grid-step overhead; it is capped at the padded batch so small batches are not
    over-padded, and a single tile is split in two when possible so the 1-D "parallel" grid can
    shard across both TensorCores on v7x (no effect on single-TC v5e/v6e)."""
    b_tile = max(LANES, (int(b_tile) // LANES) * LANES)
    b_tile = min(b_tile, _round_up(batch, LANES))
    b_pad = _round_up(batch, b_tile)
    n_tiles = b_pad // b_tile
    if n_tiles == 1 and b_tile > LANES:
        b_tile = _round_up(b_tile // 2, LANES)           # keep >= 2 tiles for v7x megacore
        b_pad = _round_up(batch, b_tile)
        n_tiles = b_pad // b_tile
    return b_tile, b_pad, n_tiles


def esrnn_forward(series, shifts, params, b_tile=512):
    """series: (B, T) f32, shifts: (B,) int32.  Returns (B, PRED_LEN) f32."""
    B, T = series.shape
    # The original module indexes smoothed_season[:, i] for i < pred_len -> requires T >= pred_len.
    assert T >= PRED_LEN, f"ESRNN season forecast requires T >= {PRED_LEN} (got T={T})"

    b_tile, b_pad, n_tiles = _choose_tiling(B, b_tile)

    # Time-major, batch on lanes.  Padded lanes use series=1.0 / shift=0, which keeps the
    # multiplicative math finite (do NOT pad with zeros: that creates 0/0 in ratio / de-level).
    series_tb = jnp.pad(jnp.asarray(series, jnp.float32).T,
                        ((0, 0), (0, b_pad - B)), constant_values=1.0)
    shifts_2d = jnp.pad(jnp.asarray(shifts, jnp.int32).reshape(1, B),
                        ((0, 0), (0, b_pad - B)), constant_values=0)

    batch_tiled = lambda rows: pl.BlockSpec((rows, b_tile), lambda i: (0, i))
    # Constant operands: whole-array blocks with a constant index_map (resident across the grid).
    # Each is tiny (< one (8,128) VMEM tile), so default pipelining costs negligible VMEM.
    resident = lambda shape: pl.BlockSpec(shape, lambda i: (0, 0))
    smem = pl.BlockSpec(memory_space=pltpu.MemorySpace.SMEM)     # scalar tables live in SMEM

    out_pb = pl.pallas_call(
        esrnn_kernel,
        out_shape=jax.ShapeDtypeStruct((PRED_LEN, b_pad), jnp.float32),
        grid=(n_tiles,),
        in_specs=[
            batch_tiled(T),                              # series   (T, Bt)
            batch_tiled(1),                              # shifts   (1, Bt)
            resident((3 * HIDDEN, 1)),                   # w_ih
            resident((3 * HIDDEN, HIDDEN)),              # w_hh
            resident((3 * HIDDEN, 1)),                   # b_ih
            resident((3 * HIDDEN, 1)),                   # b_hh
            resident((PRED_LEN, HIDDEN)),                # w_lin
            resident((PRED_LEN, 1)),                     # b_lin
            smem,                                        # init_season (SLEN_HW,) f32
            smem,                                        # alpha       (1,)       f32
        ],
        out_specs=batch_tiled(PRED_LEN),                 # lane-dense (P, Bt) output tile
        compiler_params=pltpu.CompilerParams(
            # shards batch tiles across TensorCores on v7x; no-op on single-TC v5e/v6e
            dimension_semantics=("parallel",)),
        # Per-tile VMEM ~ (2T + 2P + 2) * 4 * b_tile bytes -> well under default scoped VMEM
        # even at b_tile=2048 / T in the hundreds, so no vmem_limit_bytes override is needed.
    )(series_tb, shifts_2d,
      params["w_ih"], params["w_hh"], params["b_ih"], params["b_hh"],
      params["w_lin"], params["b_lin"],
      jnp.asarray(params["init_season"], jnp.float32),
      jnp.full((1,), params["alpha"], jnp.float32))
    return out_pb.T[:B]                                  # (B, PRED_LEN)


def esrnn_reference(series, shifts, params):
    """Pure-JAX reference mirroring the PyTorch forward (for verification)."""
    B, T = series.shape
    H, P = HIDDEN, PRED_LEN
    alpha = params["alpha"]
    init_season = params["init_season"]
    j = jnp.arange(SLEN_HW)
    rolled = init_season[jnp.mod(j[None, :] - shifts[:, None], SLEN_HW)]     # (B, 5)
    season = rolled[:, jnp.mod(jnp.arange(T), SLEN_HW)]                      # (B, T)

    def hw_step(lvl, t):
        lvl_new = alpha * (series[:, t] / season[:, t]) + (1.0 - alpha) * lvl
        return lvl_new, lvl_new

    lvl0 = series[:, 0]
    _, lvls = lax.scan(hw_step, lvl0, jnp.arange(1, T))
    level = jnp.concatenate([lvl0[None, :], lvls], axis=0).T                 # (B, T)
    de_level = series / season / level

    w_ih = params["w_ih"][:, 0]           # (3H,)
    w_hh = params["w_hh"]                 # (3H, H)
    b_ih = params["b_ih"][:, 0]           # (3H,)
    b_hh = params["b_hh"][:, 0]           # (3H,)

    def gru_step(h, x):                   # h: (B, H), x: (B,)
        gi = x[:, None] * w_ih[None, :] + b_ih[None, :]
        gh = h @ w_hh.T + b_hh[None, :]
        r = jax.nn.sigmoid(gi[:, :H] + gh[:, :H])
        z = jax.nn.sigmoid(gi[:, H:2 * H] + gh[:, H:2 * H])
        n = jnp.tanh(gi[:, 2 * H:] + r * gh[:, 2 * H:])
        return (1.0 - z) * n + z * h, None

    h, _ = lax.scan(gru_step, jnp.zeros((B, H), jnp.float32), de_level.T)
    pred = h @ params["w_lin"].T + params["b_lin"][:, 0][None, :]
    sf = season[:, jnp.mod(jnp.arange(P), SLEN_ESRNN)]
    return level[:, -1:] * sf * pred


def init_params(key):
    H, P = HIDDEN, PRED_LEN
    ks = jax.random.split(key, 8)
    bound = 1.0 / jnp.sqrt(H)
    u = lambda k, shape: jax.random.uniform(k, shape, jnp.float32, -bound, bound)
    return {
        "alpha": jnp.float32(0.1),
        # gamma (0.1) exists in the PyTorch module but its seasonal updates are never read back
        "init_season": jax.random.uniform(ks[0], (SLEN_HW,), jnp.float32, 0.2, 1.0),
        "w_ih": u(ks[1], (3 * H, 1)),
        "w_hh": u(ks[2], (3 * H, H)),
        "b_ih": u(ks[3], (3 * H, 1)),
        "b_hh": u(ks[4], (3 * H, 1)),
        "w_lin": u(ks[5], (P, H)),
        "b_lin": u(ks[6], (P, 1)),
    }


if __name__ == "__main__":
    key = jax.random.PRNGKey(0)
    k_par, k_ser = jax.random.split(key)
    params = init_params(k_par)

    B, T = 4, 20
    series = jax.random.uniform(k_ser, (B, T), jnp.float32, 0.5, 1.5)   # positive (multiplicative)
    shifts = jnp.array([0, 1, 2, 3], jnp.int32)

    out = esrnn_forward(series, shifts, params)
    out = jax.block_until_ready(out)

    ref = esrnn_reference(series, shifts, params)
    if not jnp.allclose(out, ref, rtol=1e-3, atol=1e-3):
        raise AssertionError(f"mismatch: max abs err = {jnp.max(jnp.abs(out - ref))}")

    print("KERNEL_OK")
</pallas_src>

<mosaic_0001>
module attributes {stable_mosaic.version = 11 : i64} {
  func.func @esrnn_kernel(%arg0: i32, %arg1: memref<20x128xf32, #tpu.memory_space<vmem>>, %arg2: memref<1x128xi32, #tpu.memory_space<vmem>>, %arg3: memref<48x1xf32, #tpu.memory_space<vmem>>, %arg4: memref<48x16xf32, #tpu.memory_space<vmem>>, %arg5: memref<48x1xf32, #tpu.memory_space<vmem>>, %arg6: memref<48x1xf32, #tpu.memory_space<vmem>>, %arg7: memref<14x16xf32, #tpu.memory_space<vmem>>, %arg8: memref<14x1xf32, #tpu.memory_space<vmem>>, %arg9: memref<5xf32, #tpu.memory_space<smem>>, %arg10: memref<1xf32, #tpu.memory_space<smem>>, %arg11: memref<14x128xf32, #tpu.memory_space<vmem>>) attributes {dimension_semantics = [#tpu.dimension_semantics<parallel>], iteration_bounds = array<i64: 1>, scalar_prefetch = 0 : i64, scratch_operands = 0 : i64, tpu.core_type = #tpu.core_type<tc>, window_params = [{transform_indices = @transform_0, window_bounds = array<i64: 20, 128>}, {transform_indices = @transform_1, window_bounds = array<i64: 1, 128>}, {pipeline_mode = #tpu.pipeline_mode<synchronous>, transform_indices = @transform_2, window_bounds = array<i64: 48, 1>}, {pipeline_mode = #tpu.pipeline_mode<synchronous>, transform_indices = @transform_3, window_bounds = array<i64: 48, 16>}, {pipeline_mode = #tpu.pipeline_mode<synchronous>, transform_indices = @transform_4, window_bounds = array<i64: 48, 1>}, {pipeline_mode = #tpu.pipeline_mode<synchronous>, transform_indices = @transform_5, window_bounds = array<i64: 48, 1>}, {pipeline_mode = #tpu.pipeline_mode<synchronous>, transform_indices = @transform_6, window_bounds = array<i64: 14, 16>}, {pipeline_mode = #tpu.pipeline_mode<synchronous>, transform_indices = @transform_7, window_bounds = array<i64: 14, 1>}, {transform_indices = @transform_8, window_bounds = array<i64: 5>}, {transform_indices = @transform_9, window_bounds = array<i64: 1>}, {transform_indices = @transform_10, window_bounds = array<i64: 14, 128>}]} {
    %c0 = arith.constant 0 : index
    %0 = memref.load %arg10[%c0] : memref<1xf32, #tpu.memory_space<smem>>
    %c0_0 = arith.constant 0 : index
    %c0_1 = arith.constant 0 : index
    %1 = vector.load %arg2[%c0_0, %c0_1] : memref<1x128xi32, #tpu.memory_space<vmem>>, vector<1x128xi32>
    %2 = tpu.iota {dimensions = array<i32: 0>} : vector<5x128xi32>
    %c5_i32 = arith.constant 5 : i32
    %c0_i32 = arith.constant 0 : i32
    %3 = arith.cmpi eq, %c5_i32, %c0_i32 : i32
    %c1_i32 = arith.constant 1 : i32
    %4 = arith.select %3, %c1_i32, %c5_i32 : i32
    %5 = vector.broadcast %4 : i32 to vector<5x128xi32>
    %6 = arith.remsi %2, %5 : vector<5x128xi32>
    %c0_i32_2 = arith.constant 0 : i32
    %7 = vector.broadcast %c0_i32_2 : i32 to vector<5x128xi32>
    %8 = arith.cmpi ne, %6, %7 : vector<5x128xi32>
    %c0_i32_3 = arith.constant 0 : i32
    %9 = vector.broadcast %c0_i32_3 : i32 to vector<5x128xi32>
    %10 = arith.cmpi slt, %6, %9 : vector<5x128xi32>
    %c0_i32_4 = arith.constant 0 : i32
    %11 = arith.cmpi slt, %4, %c0_i32_4 : i32
    %12 = vector.broadcast %11 : i1 to vector<5x128xi1>
    %13 = vector.broadcast %12 : vector<5x128xi1> to vector<5x128xi1>
    %14 = arith.xori %10, %13 : vector<5x128xi1>
    %15 = arith.andi %14, %8 : vector<5x128xi1>
    %16 = vector.broadcast %4 : i32 to vector<5x128xi32>
    %17 = arith.addi %6, %16 : vector<5x128xi32>
    %18 = arith.select %15, %17, %6 : vector<5x128xi1>, vector<5x128xi32>
    %19 = vector.broadcast %1 : vector<1x128xi32> to vector<5x128xi32>
    %20 = arith.subi %18, %19 : vector<5x128xi32>
    %c5_i32_5 = arith.constant 5 : i32
    %c0_i32_6 = arith.constant 0 : i32
    %21 = arith.cmpi eq, %c5_i32_5, %c0_i32_6 : i32
    %c1_i32_7 = arith.constant 1 : i32
    %22 = arith.select %21, %c1_i32_7, %c5_i32_5 : i32
    %23 = vector.broadcast %22 : i32 to vector<5x128xi32>
    %24 = arith.remsi %20, %23 : vector<5x128xi32>
    %c0_i32_8 = arith.constant 0 : i32
    %25 = vector.broadcast %c0_i32_8 : i32 to vector<5x128xi32>
    %26 = arith.cmpi ne, %24, %25 : vector<5x128xi32>
    %c0_i32_9 = arith.constant 0 : i32
    %27 = vector.broadcast %c0_i32_9 : i32 to vector<5x128xi32>
    %28 = arith.cmpi slt, %24, %27 : vector<5x128xi32>
    %c0_i32_10 = arith.constant 0 : i32
    %29 = arith.cmpi slt, %22, %c0_i32_10 : i32
    %30 = vector.broadcast %29 : i1 to vector<5x128xi1>
    %31 = vector.broadcast %30 : vector<5x128xi1> to vector<5x128xi1>
    %32 = arith.xori %28, %31 : vector<5x128xi1>
    %33 = arith.andi %32, %26 : vector<5x128xi1>
    %34 = vector.broadcast %22 : i32 to vector<5x128xi32>
    %35 = arith.addi %24, %34 : vector<5x128xi32>
    %36 = arith.select %33, %35, %24 : vector<5x128xi1>, vector<5x128xi32>
    %cst = arith.constant 0.000000e+00 : f32
    %37 = vector.broadcast %cst : f32 to vector<5x128xf32>
    %c0_i32_11 = arith.constant 0 : i32
    %38 = vector.broadcast %c0_i32_11 : i32 to vector<5x128xi32>
    %39 = arith.cmpi eq, %36, %38 : vector<5x128xi32>
    %c0_12 = arith.constant 0 : index
    %40 = memref.load %arg9[%c0_12] : memref<5xf32, #tpu.memory_space<smem>>
    %41 = vector.broadcast %40 : f32 to vector<5x128xf32>
    %42 = arith.select %39, %41, %37 : vector<5x128xi1>, vector<5x128xf32>
    %c1_i32_13 = arith.constant 1 : i32
    %43 = vector.broadcast %c1_i32_13 : i32 to vector<5x128xi32>
    %44 = arith.cmpi eq, %36, %43 : vector<5x128xi32>
    %c1 = arith.constant 1 : index
    %45 = memref.load %arg9[%c1] : memref<5xf32, #tpu.memory_space<smem>>
    %46 = vector.broadcast %45 : f32 to vector<5x128xf32>
    %47 = arith.select %44, %46, %42 : vector<5x128xi1>, vector<5x128xf32>
    %c2_i32 = arith.constant 2 : i32
    %48 = vector.broadcast %c2_i32 : i32 to vector<5x128xi32>
    %49 = arith.cmpi eq, %36, %48 : vector<5x128xi32>
    %c2 = arith.constant 2 : index
    %50 = memref.load %arg9[%c2] : memref<5xf32, #tpu.memory_space<smem>>
    %51 = vector.broadcast %50 : f32 to vector<5x128xf32>
    %52 = arith.select %49, %51, %47 : vector<5x128xi1>, vector<5x128xf32>
    %c3_i32 = arith.constant 3 : i32
    %53 = vector.broadcast %c3_i32 : i32 to vector<5x128xi32>
    %54 = arith.cmpi eq, %36, %53 : vector<5x128xi32>
    %c3 = arith.constant 3 : index
    %55 = memref.load %arg9[%c3] : memref<5xf32, #tpu.memory_space<smem>>
    %56 = vector.broadcast %55 : f32 to vector<5x128xf32>
    %57 = arith.select %54, %56, %52 : vector<5x128xi1>, vector<5x128xf32>
    %c4_i32 = arith.constant 4 : i32
    %58 = vector.broadcast %c4_i32 : i32 to vector<5x128xi32>
    %59 = arith.cmpi eq, %36, %58 : vector<5x128xi32>
    %c4 = arith.constant 4 : index
    %60 = memref.load %arg9[%c4] : memref<5xf32, #tpu.memory_space<smem>>
    %61 = vector.broadcast %60 : f32 to vector<5x128xf32>
    %62 = arith.select %59, %61, %57 : vector<5x128xi1>, vector<5x128xf32>
    %c0_14 = arith.constant 0 : index
    %c0_15 = arith.constant 0 : index
    %63 = vector.load %arg4[%c0_14, %c0_15] : memref<48x16xf32, #tpu.memory_space<vmem>>, vector<48x16xf32>
    %c0_16 = arith.constant 0 : index
    %c0_17 = arith.constant 0 : index
    %64 = vector.load %arg3[%c0_16, %c0_17] : memref<48x1xf32, #tpu.memory_space<vmem>>, vector<16x1xf32>
    %c16 = arith.constant 16 : index
    %c0_18 = arith.constant 0 : index
    %65 = vector.load %arg3[%c16, %c0_18] : memref<48x1xf32, #tpu.memory_space<vmem>>, vector<16x1xf32>
    %c32 = arith.constant 32 : index
    %c0_19 = arith.constant 0 : index
    %66 = vector.load %arg3[%c32, %c0_19] : memref<48x1xf32, #tpu.memory_space<vmem>>, vector<16x1xf32>
    %c0_20 = arith.constant 0 : index
    %c0_21 = arith.constant 0 : index
    %67 = vector.load %arg5[%c0_20, %c0_21] : memref<48x1xf32, #tpu.memory_space<vmem>>, vector<16x1xf32>
    %c0_22 = arith.constant 0 : index
    %c0_23 = arith.constant 0 : index
    %68 = vector.load %arg6[%c0_22, %c0_23] : memref<48x1xf32, #tpu.memory_space<vmem>>, vector<16x1xf32>
    %69 = arith.addf %67, %68 : vector<16x1xf32>
    %c16_24 = arith.constant 16 : index
    %c0_25 = arith.constant 0 : index
    %70 = vector.load %arg5[%c16_24, %c0_25] : memref<48x1xf32, #tpu.memory_space<vmem>>, vector<16x1xf32>
    %c16_26 = arith.constant 16 : index
    %c0_27 = arith.constant 0 : index
    %71 = vector.load %arg6[%c16_26, %c0_27] : memref<48x1xf32, #tpu.memory_space<vmem>>, vector<16x1xf32>
    %72 = arith.addf %70, %71 : vector<16x1xf32>
    %c32_28 = arith.constant 32 : index
    %c0_29 = arith.constant 0 : index
    %73 = vector.load %arg5[%c32_28, %c0_29] : memref<48x1xf32, #tpu.memory_space<vmem>>, vector<16x1xf32>
    %c32_30 = arith.constant 32 : index
    %c0_31 = arith.constant 0 : index
    %74 = vector.load %arg6[%c32_30, %c0_31] : memref<48x1xf32, #tpu.memory_space<vmem>>, vector<16x1xf32>
    %cst_32 = arith.constant 0.000000e+00 : f32
    %75 = vector.broadcast %cst_32 : f32 to vector<16x128xf32>
    %c0_33 = arith.constant 0 : index
    %c0_34 = arith.constant 0 : index
    %76 = vector.load %arg1[%c0_33, %c0_34] : memref<20x128xf32, #tpu.memory_space<vmem>>, vector<1x128xf32>
    %c0_35 = arith.constant 0 : index
    %c0_36 = arith.constant 0 : index
    %77 = vector.load %arg1[%c0_35, %c0_36] : memref<20x128xf32, #tpu.memory_space<vmem>>, vector<1x128xf32>
    %78 = vector.extract_strided_slice %62 {offsets = [0, 0], sizes = [1, 128], strides = [1, 1]} : vector<5x128xf32> to vector<1x128xf32>
    %79 = arith.divf %77, %78 : vector<1x128xf32>
    %80 = arith.divf %79, %76 : vector<1x128xf32>
    %cst_37 = arith.constant dense<0.000000e+00> : vector<48x128xf32>
    %81 = tpu.matmul %63, %75, %cst_37 {dimension_numbers = #tpu.dot_dimension_numbers<[1], [0], [0], [1], [0, 0, 1, 1], [], []>} : vector<48x16xf32>, vector<16x128xf32>, vector<48x128xf32> -> vector<48x128xf32>
    %82 = vector.broadcast %64 : vector<16x1xf32> to vector<16x128xf32>
    %83 = vector.broadcast %80 : vector<1x128xf32> to vector<16x128xf32>
    %84 = arith.mulf %82, %83 : vector<16x128xf32>
    %85 = vector.broadcast %69 : vector<16x1xf32> to vector<16x128xf32>
    %86 = arith.addf %84, %85 : vector<16x128xf32>
    %87 = vector.extract_strided_slice %81 {offsets = [0, 0], sizes = [16, 128], strides = [1, 1]} : vector<48x128xf32> to vector<16x128xf32>
    %88 = arith.addf %86, %87 : vector<16x128xf32>
    %89 = arith.negf %88 : vector<16x128xf32>
    %90 = math.exp %89 : vector<16x128xf32>
    %cst_38 = arith.constant 1.000000e+00 : f32
    %91 = vector.broadcast %cst_38 : f32 to vector<16x128xf32>
    %92 = arith.addf %91, %90 : vector<16x128xf32>
    %93 = arith.divf %91, %92 : vector<16x128xf32>
    %94 = vector.broadcast %65 : vector<16x1xf32> to vector<16x128xf32>
    %95 = vector.broadcast %80 : vector<1x128xf32> to vector<16x128xf32>
    %96 = arith.mulf %94, %95 : vector<16x128xf32>
    %97 = vector.broadcast %72 : vector<16x1xf32> to vector<16x128xf32>
    %98 = arith.addf %96, %97 : vector<16x128xf32>
    %99 = vector.extract_strided_slice %81 {offsets = [16, 0], sizes = [16, 128], strides = [1, 1]} : vector<48x128xf32> to vector<16x128xf32>
    %100 = arith.addf %98, %99 : vector<16x128xf32>
    %101 = arith.negf %100 : vector<16x128xf32>
    %102 = math.exp %101 : vector<16x128xf32>
    %cst_39 = arith.constant 1.000000e+00 : f32
    %103 = vector.broadcast %cst_39 : f32 to vector<16x128xf32>
    %104 = arith.addf %103, %102 : vector<16x128xf32>
    %105 = arith.divf %103, %104 : vector<16x128xf32>
    %106 = vector.broadcast %66 : vector<16x1xf32> to vector<16x128xf32>
    %107 = vector.broadcast %80 : vector<1x128xf32> to vector<16x128xf32>
    %108 = arith.mulf %106, %107 : vector<16x128xf32>
    %109 = vector.broadcast %73 : vector<16x1xf32> to vector<16x128xf32>
    %110 = arith.addf %108, %109 : vector<16x128xf32>
    %111 = vector.extract_strided_slice %81 {offsets = [32, 0], sizes = [16, 128], strides = [1, 1]} : vector<48x128xf32> to vector<16x128xf32>
    %112 = vector.broadcast %74 : vector<16x1xf32> to vector<16x128xf32>
    %113 = arith.addf %111, %112 : vector<16x128xf32>
    %114 = arith.mulf %93, %113 : vector<16x128xf32>
    %115 = arith.addf %110, %114 : vector<16x128xf32>
    %116 = math.tanh %115 : vector<16x128xf32>
    %cst_40 = arith.constant 1.000000e+00 : f32
    %117 = vector.broadcast %cst_40 : f32 to vector<16x128xf32>
    %118 = arith.subf %117, %105 : vector<16x128xf32>
    %119 = arith.mulf %118, %116 : vector<16x128xf32>
    %120 = arith.mulf %105, %75 : vector<16x128xf32>
    %121 = arith.addf %119, %120 : vector<16x128xf32>
    %c1_41 = arith.constant 1 : index
    %c0_42 = arith.constant 0 : index
    %122 = vector.load %arg1[%c1_41, %c0_42] : memref<20x128xf32, #tpu.memory_space<vmem>>, vector<1x128xf32>
    %123 = vector.extract_strided_slice %62 {offsets = [1, 0], sizes = [1, 128], strides = [1, 1]} : vector<5x128xf32> to vector<1x128xf32>
    %124 = arith.divf %122, %123 : vector<1x128xf32>
    %125 = vector.broadcast %0 : f32 to vector<1x128xf32>
    %126 = arith.mulf %125, %124 : vector<1x128xf32>
    %cst_43 = arith.constant 1.000000e+00 : f32
    %127 = arith.subf %cst_43, %0 : f32
    %128 = vector.broadcast %127 : f32 to vector<1x128xf32>
    %129 = arith.mulf %128, %76 : vector<1x128xf32>
    %130 = arith.addf %126, %129 : vector<1x128xf32>
    %131 = arith.divf %124, %130 : vector<1x128xf32>
    %cst_44 = arith.constant dense<0.000000e+00> : vector<48x128xf32>
    %132 = tpu.matmul %63, %121, %cst_44 {dimension_numbers = #tpu.dot_dimension_numbers<[1], [0], [0], [1], [0, 0, 1, 1], [], []>} : vector<48x16xf32>, vector<16x128xf32>, vector<48x128xf32> -> vector<48x128xf32>
    %133 = vector.broadcast %64 : vector<16x1xf32> to vector<16x128xf32>
    %134 = vector.broadcast %131 : vector<1x128xf32> to vector<16x128xf32>
    %135 = arith.mulf %133, %134 : vector<16x128xf32>
    %136 = vector.broadcast %69 : vector<16x1xf32> to vector<16x128xf32>
    %137 = arith.addf %135, %136 : vector<16x128xf32>
    %138 = vector.extract_strided_slice %132 {offsets = [0, 0], sizes = [16, 128], strides = [1, 1]} : vector<48x128xf32> to vector<16x128xf32>
    %139 = arith.addf %137, %138 : vector<16x128xf32>
    %140 = arith.negf %139 : vector<16x128xf32>
    %141 = math.exp %140 : vector<16x128xf32>
    %cst_45 = arith.constant 1.000000e+00 : f32
    %142 = vector.broadcast %cst_45 : f32 to vector<16x128xf32>
    %143 = arith.addf %142, %141 : vector<16x128xf32>
    %144 = arith.divf %142, %143 : vector<16x128xf32>
    %145 = vector.broadcast %65 : vector<16x1xf32> to vector<16x128xf32>
    %146 = vector.broadcast %131 : vector<1x128xf32> to vector<16x128xf32>
    %147 = arith.mulf %145, %146 : vector<16x128xf32>
    %148 = vector.broadcast %72 : vector<16x1xf32> to vector<16x128xf32>
    %149 = arith.addf %147, %148 : vector<16x128xf32>
    %150 = vector.extract_strided_slice %132 {offsets = [16, 0], sizes = [16, 128], strides = [1, 1]} : vector<48x128xf32> to vector<16x128xf32>
    %151 = arith.addf %149, %150 : vector<16x128xf32>
    %152 = arith.negf %151 : vector<16x128xf32>
    %153 = math.exp %152 : vector<16x128xf32>
    %cst_46 = arith.constant 1.000000e+00 : f32
    %154 = vector.broadcast %cst_46 : f32 to vector<16x128xf32>
    %155 = arith.addf %154, %153 : vector<16x128xf32>
    %156 = arith.divf %154, %155 : vector<16x128xf32>
    %157 = vector.broadcast %66 : vector<16x1xf32> to vector<16x128xf32>
    %158 = vector.broadcast %131 : vector<1x128xf32> to vector<16x128xf32>
    %159 = arith.mulf %157, %158 : vector<16x128xf32>
    %160 = vector.broadcast %73 : vector<16x1xf32> to vector<16x128xf32>
    %161 = arith.addf %159, %160 : vector<16x128xf32>
    %162 = vector.extract_strided_slice %132 {offsets = [32, 0], sizes = [16, 128], strides = [1, 1]} : vector<48x128xf32> to vector<16x128xf32>
    %163 = vector.broadcast %74 : vector<16x1xf32> to vector<16x128xf32>
    %164 = arith.addf %162, %163 : vector<16x128xf32>
    %165 = arith.mulf %144, %164 : vector<16x128xf32>
    %166 = arith.addf %161, %165 : vector<16x128xf32>
    %167 = math.tanh %166 : vector<16x128xf32>
    %cst_47 = arith.constant 1.000000e+00 : f32
    %168 = vector.broadcast %cst_47 : f32 to vector<16x128xf32>
    %169 = arith.subf %168, %156 : vector<16x128xf32>
    %170 = arith.mulf %169, %167 : vector<16x128xf32>
    %171 = arith.mulf %156, %121 : vector<16x128xf32>
    %172 = arith.addf %170, %171 : vector<16x128xf32>
    %c2_48 = arith.constant 2 : index
    %c0_49 = arith.constant 0 : index
    %173 = vector.load %arg1[%c2_48, %c0_49] : memref<20x128xf32, #tpu.memory_space<vmem>>, vector<1x128xf32>
    %174 = vector.extract_strided_slice %62 {offsets = [2, 0], sizes = [1, 128], strides = [1, 1]} : vector<5x128xf32> to vector<1x128xf32>
    %175 = arith.divf %173, %174 : vector<1x128xf32>
    %176 = vector.broadcast %0 : f32 to vector<1x128xf32>
    %177 = arith.mulf %176, %175 : vector<1x128xf32>
    %cst_50 = arith.constant 1.000000e+00 : f32
    %178 = arith.subf %cst_50, %0 : f32
    %179 = vector.broadcast %178 : f32 to vector<1x128xf32>
    %180 = arith.mulf %179, %130 : vector<1x128xf32>
    %181 = arith.addf %177, %180 : vector<1x128xf32>
    %182 = arith.divf %175, %181 : vector<1x128xf32>
    %cst_51 = arith.constant dense<0.000000e+00> : vector<48x128xf32>
    %183 = tpu.matmul %63, %172, %cst_51 {dimension_numbers = #tpu.dot_dimension_numbers<[1], [0], [0], [1], [0, 0, 1, 1], [], []>} : vector<48x16xf32>, vector<16x128xf32>, vector<48x128xf32> -> vector<48x128xf32>
    %184 = vector.broadcast %64 : vector<16x1xf32> to vector<16x128xf32>
    %185 = vector.broadcast %182 : vector<1x128xf32> to vector<16x128xf32>
    %186 = arith.mulf %184, %185 : vector<16x128xf32>
    %187 = vector.broadcast %69 : vector<16x1xf32> to vector<16x128xf32>
    %188 = arith.addf %186, %187 : vector<16x128xf32>
    %189 = vector.extract_strided_slice %183 {offsets = [0, 0], sizes = [16, 128], strides = [1, 1]} : vector<48x128xf32> to vector<16x128xf32>
    %190 = arith.addf %188, %189 : vector<16x128xf32>
    %191 = arith.negf %190 : vector<16x128xf32>
    %192 = math.exp %191 : vector<16x128xf32>
    %cst_52 = arith.constant 1.000000e+00 : f32
    %193 = vector.broadcast %cst_52 : f32 to vector<16x128xf32>
    %194 = arith.addf %193, %192 : vector<16x128xf32>
    %195 = arith.divf %193, %194 : vector<16x128xf32>
    %196 = vector.broadcast %65 : vector<16x1xf32> to vector<16x128xf32>
    %197 = vector.broadcast %182 : vector<1x128xf32> to vector<16x128xf32>
    %198 = arith.mulf %196, %197 : vector<16x128xf32>
    %199 = vector.broadcast %72 : vector<16x1xf32> to vector<16x128xf32>
    %200 = arith.addf %198, %199 : vector<16x128xf32>
    %201 = vector.extract_strided_slice %183 {offsets = [16, 0], sizes = [16, 128], strides = [1, 1]} : vector<48x128xf32> to vector<16x128xf32>
    %202 = arith.addf %200, %201 : vector<16x128xf32>
    %203 = arith.negf %202 : vector<16x128xf32>
    %204 = math.exp %203 : vector<16x128xf32>
    %cst_53 = arith.constant 1.000000e+00 : f32
    %205 = vector.broadcast %cst_53 : f32 to vector<16x128xf32>
    %206 = arith.addf %205, %204 : vector<16x128xf32>
    %207 = arith.divf %205, %206 : vector<16x128xf32>
    %208 = vector.broadcast %66 : vector<16x1xf32> to vector<16x128xf32>
    %209 = vector.broadcast %182 : vector<1x128xf32> to vector<16x128xf32>
    %210 = arith.mulf %208, %209 : vector<16x128xf32>
    %211 = vector.broadcast %73 : vector<16x1xf32> to vector<16x128xf32>
    %212 = arith.addf %210, %211 : vector<16x128xf32>
    %213 = vector.extract_strided_slice %183 {offsets = [32, 0], sizes = [16, 128], strides = [1, 1]} : vector<48x128xf32> to vector<16x128xf32>
    %214 = vector.broadcast %74 : vector<16x1xf32> to vector<16x128xf32>
    %215 = arith.addf %213, %214 : vector<16x128xf32>
    %216 = arith.mulf %195, %215 : vector<16x128xf32>
    %217 = arith.addf %212, %216 : vector<16x128xf32>
    %218 = math.tanh %217 : vector<16x128xf32>
    %cst_54 = arith.constant 1.000000e+00 : f32
    %219 = vector.broadcast %cst_54 : f32 to vector<16x128xf32>
    %220 = arith.subf %219, %207 : vector<16x128xf32>
    %221 = arith.mulf %220, %218 : vector<16x128xf32>
    %222 = arith.mulf %207, %172 : vector<16x128xf32>
    %223 = arith.addf %221, %222 : vector<16x128xf32>
    %c3_55 = arith.constant 3 : index
    %c0_56 = arith.constant 0 : index
    %224 = vector.load %arg1[%c3_55, %c0_56] : memref<20x128xf32, #tpu.memory_space<vmem>>, vector<1x128xf32>
    %225 = vector.extract_strided_slice %62 {offsets = [3, 0], sizes = [1, 128], strides = [1, 1]} : vector<5x128xf32> to vector<1x128xf32>
    %226 = arith.divf %224, %225 : vector<1x128xf32>
    %227 = vector.broadcast %0 : f32 to vector<1x128xf32>
    %228 = arith.mulf %227, %226 : vector<1x128xf32>
    %cst_57 = arith.constant 1.000000e+00 : f32
    %229 = arith.subf %cst_57, %0 : f32
    %230 = vector.broadcast %229 : f32 to vector<1x128xf32>
    %231 = arith.mulf %230, %181 : vector<1x128xf32>
    %232 = arith.addf %228, %231 : vector<1x128xf32>
    %233 = arith.divf %226, %232 : vector<1x128xf32>
    %cst_58 = arith.constant dense<0.000000e+00> : vector<48x128xf32>
    %234 = tpu.matmul %63, %223, %cst_58 {dimension_numbers = #tpu.dot_dimension_numbers<[1], [0], [0], [1], [0, 0, 1, 1], [], []>} : vector<48x16xf32>, vector<16x128xf32>, vector<48x128xf32> -> vector<48x128xf32>
    %235 = vector.broadcast %64 : vector<16x1xf32> to vector<16x128xf32>
    %236 = vector.broadcast %233 : vector<1x128xf32> to vector<16x128xf32>
    %237 = arith.mulf %235, %236 : vector<16x128xf32>
    %238 = vector.broadcast %69 : vector<16x1xf32> to vector<16x128xf32>
    %239 = arith.addf %237, %238 : vector<16x128xf32>
    %240 = vector.extract_strided_slice %234 {offsets = [0, 0], sizes = [16, 128], strides = [1, 1]} : vector<48x128xf32> to vector<16x128xf32>
    %241 = arith.addf %239, %240 : vector<16x128xf32>
    %242 = arith.negf %241 : vector<16x128xf32>
    %243 = math.exp %242 : vector<16x128xf32>
    %cst_59 = arith.constant 1.000000e+00 : f32
    %244 = vector.broadcast %cst_59 : f32 to vector<16x128xf32>
    %245 = arith.addf %244, %243 : vector<16x128xf32>
    %246 = arith.divf %244, %245 : vector<16x128xf32>
    %247 = vector.broadcast %65 : vector<16x1xf32> to vector<16x128xf32>
    %248 = vector.broadcast %233 : vector<1x128xf32> to vector<16x128xf32>
    %249 = arith.mulf %247, %248 : vector<16x128xf32>
    %250 = vector.broadcast %72 : vector<16x1xf32> to vector<16x128xf32>
    %251 = arith.addf %249, %250 : vector<16x128xf32>
    %252 = vector.extract_strided_slice %234 {offsets = [16, 0], sizes = [16, 128], strides = [1, 1]} : vector<48x128xf32> to vector<16x128xf32>
    %253 = arith.addf %251, %252 : vector<16x128xf32>
    %254 = arith.negf %253 : vector<16x128xf32>
    %255 = math.exp %254 : vector<16x128xf32>
    %cst_60 = arith.constant 1.000000e+00 : f32
    %256 = vector.broadcast %cst_60 : f32 to vector<16x128xf32>
    %257 = arith.addf %256, %255 : vector<16x128xf32>
    %258 = arith.divf %256, %257 : vector<16x128xf32>
    %259 = vector.broadcast %66 : vector<16x1xf32> to vector<16x128xf32>
    %260 = vector.broadcast %233 : vector<1x128xf32> to vector<16x128xf32>
    %261 = arith.mulf %259, %260 : vector<16x128xf32>
    %262 = vector.broadcast %73 : vector<16x1xf32> to vector<16x128xf32>
    %263 = arith.addf %261, %262 : vector<16x128xf32>
    %264 = vector.extract_strided_slice %234 {offsets = [32, 0], sizes = [16, 128], strides = [1, 1]} : vector<48x128xf32> to vector<16x128xf32>
    %265 = vector.broadcast %74 : vector<16x1xf32> to vector<16x128xf32>
    %266 = arith.addf %264, %265 : vector<16x128xf32>
    %267 = arith.mulf %246, %266 : vector<16x128xf32>
    %268 = arith.addf %263, %267 : vector<16x128xf32>
    %269 = math.tanh %268 : vector<16x128xf32>
    %cst_61 = arith.constant 1.000000e+00 : f32
    %270 = vector.broadcast %cst_61 : f32 to vector<16x128xf32>
    %271 = arith.subf %270, %258 : vector<16x128xf32>
    %272 = arith.mulf %271, %269 : vector<16x128xf32>
    %273 = arith.mulf %258, %223 : vector<16x128xf32>
    %274 = arith.addf %272, %273 : vector<16x128xf32>
    %c4_62 = arith.constant 4 : index
    %c0_63 = arith.constant 0 : index
    %275 = vector.load %arg1[%c4_62, %c0_63] : memref<20x128xf32, #tpu.memory_space<vmem>>, vector<1x128xf32>
    %276 = vector.extract_strided_slice %62 {offsets = [4, 0], sizes = [1, 128], strides = [1, 1]} : vector<5x128xf32> to vector<1x128xf32>
    %277 = arith.divf %275, %276 : vector<1x128xf32>
    %278 = vector.broadcast %0 : f32 to vector<1x128xf32>
    %279 = arith.mulf %278, %277 : vector<1x128xf32>
    %cst_64 = arith.constant 1.000000e+00 : f32
    %280 = arith.subf %cst_64, %0 : f32
    %281 = vector.broadcast %280 : f32 to vector<1x128xf32>
    %282 = arith.mulf %281, %232 : vector<1x128xf32>
    %283 = arith.addf %279, %282 : vector<1x128xf32>
    %284 = arith.divf %277, %283 : vector<1x128xf32>
    %cst_65 = arith.constant dense<0.000000e+00> : vector<48x128xf32>
    %285 = tpu.matmul %63, %274, %cst_65 {dimension_numbers = #tpu.dot_dimension_numbers<[1], [0], [0], [1], [0, 0, 1, 1], [], []>} : vector<48x16xf32>, vector<16x128xf32>, vector<48x128xf32> -> vector<48x128xf32>
    %286 = vector.broadcast %64 : vector<16x1xf32> to vector<16x128xf32>
    %287 = vector.broadcast %284 : vector<1x128xf32> to vector<16x128xf32>
    %288 = arith.mulf %286, %287 : vector<16x128xf32>
    %289 = vector.broadcast %69 : vector<16x1xf32> to vector<16x128xf32>
    %290 = arith.addf %288, %289 : vector<16x128xf32>
    %291 = vector.extract_strided_slice %285 {offsets = [0, 0], sizes = [16, 128], strides = [1, 1]} : vector<48x128xf32> to vector<16x128xf32>
    %292 = arith.addf %290, %291 : vector<16x128xf32>
    %293 = arith.negf %292 : vector<16x128xf32>
    %294 = math.exp %293 : vector<16x128xf32>
    %cst_66 = arith.constant 1.000000e+00 : f32
    %295 = vector.broadcast %cst_66 : f32 to vector<16x128xf32>
    %296 = arith.addf %295, %294 : vector<16x128xf32>
    %297 = arith.divf %295, %296 : vector<16x128xf32>
    %298 = vector.broadcast %65 : vector<16x1xf32> to vector<16x128xf32>
    %299 = vector.broadcast %284 : vector<1x128xf32> to vector<16x128xf32>
    %300 = arith.mulf %298, %299 : vector<16x128xf32>
    %301 = vector.broadcast %72 : vector<16x1xf32> to vector<16x128xf32>
    %302 = arith.addf %300, %301 : vector<16x128xf32>
    %303 = vector.extract_strided_slice %285 {offsets = [16, 0], sizes = [16, 128], strides = [1, 1]} : vector<48x128xf32> to vector<16x128xf32>
    %304 = arith.addf %302, %303 : vector<16x128xf32>
    %305 = arith.negf %304 : vector<16x128xf32>
    %306 = math.exp %305 : vector<16x128xf32>
    %cst_67 = arith.constant 1.000000e+00 : f32
    %307 = vector.broadcast %cst_67 : f32 to vector<16x128xf32>
    %308 = arith.addf %307, %306 : vector<16x128xf32>
    %309 = arith.divf %307, %308 : vector<16x128xf32>
    %310 = vector.broadcast %66 : vector<16x1xf32> to vector<16x128xf32>
    %311 = vector.broadcast %284 : vector<1x128xf32> to vector<16x128xf32>
    %312 = arith.mulf %310, %311 : vector<16x128xf32>
    %313 = vector.broadcast %73 : vector<16x1xf32> to vector<16x128xf32>
    %314 = arith.addf %312, %313 : vector<16x128xf32>
    %315 = vector.extract_strided_slice %285 {offsets = [32, 0], sizes = [16, 128], strides = [1, 1]} : vector<48x128xf32> to vector<16x128xf32>
    %316 = vector.broadcast %74 : vector<16x1xf32> to vector<16x128xf32>
    %317 = arith.addf %315, %316 : vector<16x128xf32>
    %318 = arith.mulf %297, %317 : vector<16x128xf32>
    %319 = arith.addf %314, %318 : vector<16x128xf32>
    %320 = math.tanh %319 : vector<16x128xf32>
    %cst_68 = arith.constant 1.000000e+00 : f32
    %321 = vector.broadcast %cst_68 : f32 to vector<16x128xf32>
    %322 = arith.subf %321, %309 : vector<16x128xf32>
    %323 = arith.mulf %322, %320 : vector<16x128xf32>
    %324 = arith.mulf %309, %274 : vector<16x128xf32>
    %325 = arith.addf %323, %324 : vector<16x128xf32>
    %c5 = arith.constant 5 : index
    %c0_69 = arith.constant 0 : index
    %326 = vector.load %arg1[%c5, %c0_69] : memref<20x128xf32, #tpu.memory_space<vmem>>, vector<1x128xf32>
    %327 = vector.extract_strided_slice %62 {offsets = [0, 0], sizes = [1, 128], strides = [1, 1]} : vector<5x128xf32> to vector<1x128xf32>
    %328 = arith.divf %326, %327 : vector<1x128xf32>
    %329 = vector.broadcast %0 : f32 to vector<1x128xf32>
    %330 = arith.mulf %329, %328 : vector<1x128xf32>
    %cst_70 = arith.constant 1.000000e+00 : f32
    %331 = arith.subf %cst_70, %0 : f32
    %332 = vector.broadcast %331 : f32 to vector<1x128xf32>
    %333 = arith.mulf %332, %283 : vector<1x128xf32>
    %334 = arith.addf %330, %333 : vector<1x128xf32>
    %335 = arith.divf %328, %334 : vector<1x128xf32>
    %cst_71 = arith.constant dense<0.000000e+00> : vector<48x128xf32>
    %336 = tpu.matmul %63, %325, %cst_71 {dimension_numbers = #tpu.dot_dimension_numbers<[1], [0], [0], [1], [0, 0, 1, 1], [], []>} : vector<48x16xf32>, vector<16x128xf32>, vector<48x128xf32> -> vector<48x128xf32>
    %337 = vector.broadcast %64 : vector<16x1xf32> to vector<16x128xf32>
    %338 = vector.broadcast %335 : vector<1x128xf32> to vector<16x128xf32>
    %339 = arith.mulf %337, %338 : vector<16x128xf32>
    %340 = vector.broadcast %69 : vector<16x1xf32> to vector<16x128xf32>
    %341 = arith.addf %339, %340 : vector<16x128xf32>
    %342 = vector.extract_strided_slice %336 {offsets = [0, 0], sizes = [16, 128], strides = [1, 1]} : vector<48x128xf32> to vector<16x128xf32>
    %343 = arith.addf %341, %342 : vector<16x128xf32>
    %344 = arith.negf %343 : vector<16x128xf32>
    %345 = math.exp %344 : vector<16x128xf32>
    %cst_72 = arith.constant 1.000000e+00 : f32
    %346 = vector.broadcast %cst_72 : f32 to vector<16x128xf32>
    %347 = arith.addf %346, %345 : vector<16x128xf32>
    %348 = arith.divf %346, %347 : vector<16x128xf32>
    %349 = vector.broadcast %65 : vector<16x1xf32> to vector<16x128xf32>
    %350 = vector.broadcast %335 : vector<1x128xf32> to vector<16x128xf32>
    %351 = arith.mulf %349, %350 : vector<16x128xf32>
    %352 = vector.broadcast %72 : vector<16x1xf32> to vector<16x128xf32>
    %353 = arith.addf %351, %352 : vector<16x128xf32>
    %354 = vector.extract_strided_slice %336 {offsets = [16, 0], sizes = [16, 128], strides = [1, 1]} : vector<48x128xf32> to vector<16x128xf32>
    %355 = arith.addf %353, %354 : vector<16x128xf32>
    %356 = arith.negf %355 : vector<16x128xf32>
    %357 = math.exp %356 : vector<16x128xf32>
    %cst_73 = arith.constant 1.000000e+00 : f32
    %358 = vector.broadcast %cst_73 : f32 to vector<16x128xf32>
    %359 = arith.addf %358, %357 : vector<16x128xf32>
    %360 = arith.divf %358, %359 : vector<16x128xf32>
    %361 = vector.broadcast %66 : vector<16x1xf32> to vector<16x128xf32>
    %362 = vector.broadcast %335 : vector<1x128xf32> to vector<16x128xf32>
    %363 = arith.mulf %361, %362 : vector<16x128xf32>
    %364 = vector.broadcast %73 : vector<16x1xf32> to vector<16x128xf32>
    %365 = arith.addf %363, %364 : vector<16x128xf32>
    %366 = vector.extract_strided_slice %336 {offsets = [32, 0], sizes = [16, 128], strides = [1, 1]} : vector<48x128xf32> to vector<16x128xf32>
    %367 = vector.broadcast %74 : vector<16x1xf32> to vector<16x128xf32>
    %368 = arith.addf %366, %367 : vector<16x128xf32>
    %369 = arith.mulf %348, %368 : vector<16x128xf32>
    %370 = arith.addf %365, %369 : vector<16x128xf32>
    %371 = math.tanh %370 : vector<16x128xf32>
    %cst_74 = arith.constant 1.000000e+00 : f32
    %372 = vector.broadcast %cst_74 : f32 to vector<16x128xf32>
    %373 = arith.subf %372, %360 : vector<16x128xf32>
    %374 = arith.mulf %373, %371 : vector<16x128xf32>
    %375 = arith.mulf %360, %325 : vector<16x128xf32>
    %376 = arith.addf %374, %375 : vector<16x128xf32>
    %c6 = arith.constant 6 : index
    %c0_75 = arith.constant 0 : index
    %377 = vector.load %arg1[%c6, %c0_75] : memref<20x128xf32, #tpu.memory_space<vmem>>, vector<1x128xf32>
    %378 = vector.extract_strided_slice %62 {offsets = [1, 0], sizes = [1, 128], strides = [1, 1]} : vector<5x128xf32> to vector<1x128xf32>
    %379 = arith.divf %377, %378 : vector<1x128xf32>
    %380 = vector.broadcast %0 : f32 to vector<1x128xf32>
    %381 = arith.mulf %380, %379 : vector<1x128xf32>
    %cst_76 = arith.constant 1.000000e+00 : f32
    %382 = arith.subf %cst_76, %0 : f32
    %383 = vector.broadcast %382 : f32 to vector<1x128xf32>
    %384 = arith.mulf %383, %334 : vector<1x128xf32>
    %385 = arith.addf %381, %384 : vector<1x128xf32>
    %386 = arith.divf %379, %385 : vector<1x128xf32>
    %cst_77 = arith.constant dense<0.000000e+00> : vector<48x128xf32>
    %387 = tpu.matmul %63, %376, %cst_77 {dimension_numbers = #tpu.dot_dimension_numbers<[1], [0], [0], [1], [0, 0, 1, 1], [], []>} : vector<48x16xf32>, vector<16x128xf32>, vector<48x128xf32> -> vector<48x128xf32>
    %388 = vector.broadcast %64 : vector<16x1xf32> to vector<16x128xf32>
    %389 = vector.broadcast %386 : vector<1x128xf32> to vector<16x128xf32>
    %390 = arith.mulf %388, %389 : vector<16x128xf32>
    %391 = vector.broadcast %69 : vector<16x1xf32> to vector<16x128xf32>
    %392 = arith.addf %390, %391 : vector<16x128xf32>
    %393 = vector.extract_strided_slice %387 {offsets = [0, 0], sizes = [16, 128], strides = [1, 1]} : vector<48x128xf32> to vector<16x128xf32>
    %394 = arith.addf %392, %393 : vector<16x128xf32>
    %395 = arith.negf %394 : vector<16x128xf32>
    %396 = math.exp %395 : vector<16x128xf32>
    %cst_78 = arith.constant 1.000000e+00 : f32
    %397 = vector.broadcast %cst_78 : f32 to vector<16x128xf32>
    %398 = arith.addf %397, %396 : vector<16x128xf32>
    %399 = arith.divf %397, %398 : vector<16x128xf32>
    %400 = vector.broadcast %65 : vector<16x1xf32> to vector<16x128xf32>
    %401 = vector.broadcast %386 : vector<1x128xf32> to vector<16x128xf32>
    %402 = arith.mulf %400, %401 : vector<16x128xf32>
    %403 = vector.broadcast %72 : vector<16x1xf32> to vector<16x128xf32>
    %404 = arith.addf %402, %403 : vector<16x128xf32>
    %405 = vector.extract_strided_slice %387 {offsets = [16, 0], sizes = [16, 128], strides = [1, 1]} : vector<48x128xf32> to vector<16x128xf32>
    %406 = arith.addf %404, %405 : vector<16x128xf32>
    %407 = arith.negf %406 : vector<16x128xf32>
    %408 = math.exp %407 : vector<16x128xf32>
    %cst_79 = arith.constant 1.000000e+00 : f32
    %409 = vector.broadcast %cst_79 : f32 to vector<16x128xf32>
    %410 = arith.addf %409, %408 : vector<16x128xf32>
    %411 = arith.divf %409, %410 : vector<16x128xf32>
    %412 = vector.broadcast %66 : vector<16x1xf32> to vector<16x128xf32>
    %413 = vector.broadcast %386 : vector<1x128xf32> to vector<16x128xf32>
    %414 = arith.mulf %412, %413 : vector<16x128xf32>
    %415 = vector.broadcast %73 : vector<16x1xf32> to vector<16x128xf32>
    %416 = arith.addf %414, %415 : vector<16x128xf32>
    %417 = vector.extract_strided_slice %387 {offsets = [32, 0], sizes = [16, 128], strides = [1, 1]} : vector<48x128xf32> to vector<16x128xf32>
    %418 = vector.broadcast %74 : vector<16x1xf32> to vector<16x128xf32>
    %419 = arith.addf %417, %418 : vector<16x128xf32>
    %420 = arith.mulf %399, %419 : vector<16x128xf32>
    %421 = arith.addf %416, %420 : vector<16x128xf32>
    %422 = math.tanh %421 : vector<16x128xf32>
    %cst_80 = arith.constant 1.000000e+00 : f32
    %423 = vector.broadcast %cst_80 : f32 to vector<16x128xf32>
    %424 = arith.subf %423, %411 : vector<16x128xf32>
    %425 = arith.mulf %424, %422 : vector<16x128xf32>
    %426 = arith.mulf %411, %376 : vector<16x128xf32>
    %427 = arith.addf %425, %426 : vector<16x128xf32>
    %c7 = arith.constant 7 : index
    %c0_81 = arith.constant 0 : index
    %428 = vector.load %arg1[%c7, %c0_81] : memref<20x128xf32, #tpu.memory_space<vmem>>, vector<1x128xf32>
    %429 = vector.extract_strided_slice %62 {offsets = [2, 0], sizes = [1, 128], strides = [1, 1]} : vector<5x128xf32> to vector<1x128xf32>
    %430 = arith.divf %428, %429 : vector<1x128xf32>
    %431 = vector.broadcast %0 : f32 to vector<1x128xf32>
    %432 = arith.mulf %431, %430 : vector<1x128xf32>
    %cst_82 = arith.constant 1.000000e+00 : f32
    %433 = arith.subf %cst_82, %0 : f32
    %434 = vector.broadcast %433 : f32 to vector<1x128xf32>
    %435 = arith.mulf %434, %385 : vector<1x128xf32>
    %436 = arith.addf %432, %435 : vector<1x128xf32>
    %437 = arith.divf %430, %436 : vector<1x128xf32>
    %cst_83 = arith.constant dense<0.000000e+00> : vector<48x128xf32>
    %438 = tpu.matmul %63, %427, %cst_83 {dimension_numbers = #tpu.dot_dimension_numbers<[1], [0], [0], [1], [0, 0, 1, 1], [], []>} : vector<48x16xf32>, vector<16x128xf32>, vector<48x128xf32> -> vector<48x128xf32>
    %439 = vector.broadcast %64 : vector<16x1xf32> to vector<16x128xf32>
    %440 = vector.broadcast %437 : vector<1x128xf32> to vector<16x128xf32>
    %441 = arith.mulf %439, %440 : vector<16x128xf32>
    %442 = vector.broadcast %69 : vector<16x1xf32> to vector<16x128xf32>
    %443 = arith.addf %441, %442 : vector<16x128xf32>
    %444 = vector.extract_strided_slice %438 {offsets = [0, 0], sizes = [16, 128], strides = [1, 1]} : vector<48x128xf32> to vector<16x128xf32>
    %445 = arith.addf %443, %444 : vector<16x128xf32>
    %446 = arith.negf %445 : vector<16x128xf32>
    %447 = math.exp %446 : vector<16x128xf32>
    %cst_84 = arith.constant 1.000000e+00 : f32
    %448 = vector.broadcast %cst_84 : f32 to vector<16x128xf32>
    %449 = arith.addf %448, %447 : vector<16x128xf32>
    %450 = arith.divf %448, %449 : vector<16x128xf32>
    %451 = vector.broadcast %65 : vector<16x1xf32> to vector<16x128xf32>
    %452 = vector.broadcast %437 : vector<1x128xf32> to vector<16x128xf32>
    %453 = arith.mulf %451, %452 : vector<16x128xf32>
    %454 = vector.broadcast %72 : vector<16x1xf32> to vector<16x128xf32>
    %455 = arith.addf %453, %454 : vector<16x128xf32>
    %456 = vector.extract_strided_slice %438 {offsets = [16, 0], sizes = [16, 128], strides = [1, 1]} : vector<48x128xf32> to vector<16x128xf32>
    %457 = arith.addf %455, %456 : vector<16x128xf32>
    %458 = arith.negf %457 : vector<16x128xf32>
    %459 = math.exp %458 : vector<16x128xf32>
    %cst_85 = arith.constant 1.000000e+00 : f32
    %460 = vector.broadcast %cst_85 : f32 to vector<16x128xf32>
    %461 = arith.addf %460, %459 : vector<16x128xf32>
    %462 = arith.divf %460, %461 : vector<16x128xf32>
    %463 = vector.broadcast %66 : vector<16x1xf32> to vector<16x128xf32>
    %464 = vector.broadcast %437 : vector<1x128xf32> to vector<16x128xf32>
    %465 = arith.mulf %463, %464 : vector<16x128xf32>
    %466 = vector.broadcast %73 : vector<16x1xf32> to vector<16x128xf32>
    %467 = arith.addf %465, %466 : vector<16x128xf32>
    %468 = vector.extract_strided_slice %438 {offsets = [32, 0], sizes = [16, 128], strides = [1, 1]} : vector<48x128xf32> to vector<16x128xf32>
    %469 = vector.broadcast %74 : vector<16x1xf32> to vector<16x128xf32>
    %470 = arith.addf %468, %469 : vector<16x128xf32>
    %471 = arith.mulf %450, %470 : vector<16x128xf32>
    %472 = arith.addf %467, %471 : vector<16x128xf32>
    %473 = math.tanh %472 : vector<16x128xf32>
    %cst_86 = arith.constant 1.000000e+00 : f32
    %474 = vector.broadcast %cst_86 : f32 to vector<16x128xf32>
    %475 = arith.subf %474, %462 : vector<16x128xf32>
    %476 = arith.mulf %475, %473 : vector<16x128xf32>
    %477 = arith.mulf %462, %427 : vector<16x128xf32>
    %478 = arith.addf %476, %477 : vector<16x128xf32>
    %c8 = arith.constant 8 : index
    %c0_87 = arith.constant 0 : index
    %479 = vector.load %arg1[%c8, %c0_87] : memref<20x128xf32, #tpu.memory_space<vmem>>, vector<1x128xf32>
    %480 = vector.extract_strided_slice %62 {offsets = [3, 0], sizes = [1, 128], strides = [1, 1]} : vector<5x128xf32> to vector<1x128xf32>
    %481 = arith.divf %479, %480 : vector<1x128xf32>
    %482 = vector.broadcast %0 : f32 to vector<1x128xf32>
    %483 = arith.mulf %482, %481 : vector<1x128xf32>
    %cst_88 = arith.constant 1.000000e+00 : f32
    %484 = arith.subf %cst_88, %0 : f32
    %485 = vector.broadcast %484 : f32 to vector<1x128xf32>
    %486 = arith.mulf %485, %436 : vector<1x128xf32>
    %487 = arith.addf %483, %486 : vector<1x128xf32>
    %488 = arith.divf %481, %487 : vector<1x128xf32>
    %cst_89 = arith.constant dense<0.000000e+00> : vector<48x128xf32>
    %489 = tpu.matmul %63, %478, %cst_89 {dimension_numbers = #tpu.dot_dimension_numbers<[1], [0], [0], [1], [0, 0, 1, 1], [], []>} : vector<48x16xf32>, vector<16x128xf32>, vector<48x128xf32> -> vector<48x128xf32>
    %490 = vector.broadcast %64 : vector<16x1xf32> to vector<16x128xf32>
    %491 = vector.broadcast %488 : vector<1x128xf32> to vector<16x128xf32>
    %492 = arith.mulf %490, %491 : vector<16x128xf32>
    %493 = vector.broadcast %69 : vector<16x1xf32> to vector<16x128xf32>
    %494 = arith.addf %492, %493 : vector<16x128xf32>
    %495 = vector.extract_strided_slice %489 {offsets = [0, 0], sizes = [16, 128], strides = [1, 1]} : vector<48x128xf32> to vector<16x128xf32>
    %496 = arith.addf %494, %495 : vector<16x128xf32>
    %497 = arith.negf %496 : vector<16x128xf32>
    %498 = math.exp %497 : vector<16x128xf32>
    %cst_90 = arith.constant 1.000000e+00 : f32
    %499 = vector.broadcast %cst_90 : f32 to vector<16x128xf32>
    %500 = arith.addf %499, %498 : vector<16x128xf32>
    %501 = arith.divf %499, %500 : vector<16x128xf32>
    %502 = vector.broadcast %65 : vector<16x1xf32> to vector<16x128xf32>
    %503 = vector.broadcast %488 : vector<1x128xf32> to vector<16x128xf32>
    %504 = arith.mulf %502, %503 : vector<16x128xf32>
    %505 = vector.broadcast %72 : vector<16x1xf32> to vector<16x128xf32>
    %506 = arith.addf %504, %505 : vector<16x128xf32>
    %507 = vector.extract_strided_slice %489 {offsets = [16, 0], sizes = [16, 128], strides = [1, 1]} : vector<48x128xf32> to vector<16x128xf32>
    %508 = arith.addf %506, %507 : vector<16x128xf32>
    %509 = arith.negf %508 : vector<16x128xf32>
    %510 = math.exp %509 : vector<16x128xf32>
    %cst_91 = arith.constant 1.000000e+00 : f32
    %511 = vector.broadcast %cst_91 : f32 to vector<16x128xf32>
    %512 = arith.addf %511, %510 : vector<16x128xf32>
    %513 = arith.divf %511, %512 : vector<16x128xf32>
    %514 = vector.broadcast %66 : vector<16x1xf32> to vector<16x128xf32>
    %515 = vector.broadcast %488 : vector<1x128xf32> to vector<16x128xf32>
    %516 = arith.mulf %514, %515 : vector<16x128xf32>
    %517 = vector.broadcast %73 : vector<16x1xf32> to vector<16x128xf32>
    %518 = arith.addf %516, %517 : vector<16x128xf32>
    %519 = vector.extract_strided_slice %489 {offsets = [32, 0], sizes = [16, 128], strides = [1, 1]} : vector<48x128xf32> to vector<16x128xf32>
    %520 = vector.broadcast %74 : vector<16x1xf32> to vector<16x128xf32>
    %521 = arith.addf %519, %520 : vector<16x128xf32>
    %522 = arith.mulf %501, %521 : vector<16x128xf32>
    %523 = arith.addf %518, %522 : vector<16x128xf32>
    %524 = math.tanh %523 : vector<16x128xf32>
    %cst_92 = arith.constant 1.000000e+00 : f32
    %525 = vector.broadcast %cst_92 : f32 to vector<16x128xf32>
    %526 = arith.subf %525, %513 : vector<16x128xf32>
    %527 = arith.mulf %526, %524 : vector<16x128xf32>
    %528 = arith.mulf %513, %478 : vector<16x128xf32>
    %529 = arith.addf %527, %528 : vector<16x128xf32>
    %c9 = arith.constant 9 : index
    %c0_93 = arith.constant 0 : index
    %530 = vector.load %arg1[%c9, %c0_93] : memref<20x128xf32, #tpu.memory_space<vmem>>, vector<1x128xf32>
    %531 = vector.extract_strided_slice %62 {offsets = [4, 0], sizes = [1, 128], strides = [1, 1]} : vector<5x128xf32> to vector<1x128xf32>
    %532 = arith.divf %530, %531 : vector<1x128xf32>
    %533 = vector.broadcast %0 : f32 to vector<1x128xf32>
    %534 = arith.mulf %533, %532 : vector<1x128xf32>
    %cst_94 = arith.constant 1.000000e+00 : f32
    %535 = arith.subf %cst_94, %0 : f32
    %536 = vector.broadcast %535 : f32 to vector<1x128xf32>
    %537 = arith.mulf %536, %487 : vector<1x128xf32>
    %538 = arith.addf %534, %537 : vector<1x128xf32>
    %539 = arith.divf %532, %538 : vector<1x128xf32>
    %cst_95 = arith.constant dense<0.000000e+00> : vector<48x128xf32>
    %540 = tpu.matmul %63, %529, %cst_95 {dimension_numbers = #tpu.dot_dimension_numbers<[1], [0], [0], [1], [0, 0, 1, 1], [], []>} : vector<48x16xf32>, vector<16x128xf32>, vector<48x128xf32> -> vector<48x128xf32>
    %541 = vector.broadcast %64 : vector<16x1xf32> to vector<16x128xf32>
    %542 = vector.broadcast %539 : vector<1x128xf32> to vector<16x128xf32>
    %543 = arith.mulf %541, %542 : vector<16x128xf32>
    %544 = vector.broadcast %69 : vector<16x1xf32> to vector<16x128xf32>
    %545 = arith.addf %543, %544 : vector<16x128xf32>
    %546 = vector.extract_strided_slice %540 {offsets = [0, 0], sizes = [16, 128], strides = [1, 1]} : vector<48x128xf32> to vector<16x128xf32>
    %547 = arith.addf %545, %546 : vector<16x128xf32>
    %548 = arith.negf %547 : vector<16x128xf32>
    %549 = math.exp %548 : vector<16x128xf32>
    %cst_96 = arith.constant 1.000000e+00 : f32
    %550 = vector.broadcast %cst_96 : f32 to vector<16x128xf32>
    %551 = arith.addf %550, %549 : vector<16x128xf32>
    %552 = arith.divf %550, %551 : vector<16x128xf32>
    %553 = vector.broadcast %65 : vector<16x1xf32> to vector<16x128xf32>
    %554 = vector.broadcast %539 : vector<1x128xf32> to vector<16x128xf32>
    %555 = arith.mulf %553, %554 : vector<16x128xf32>
    %556 = vector.broadcast %72 : vector<16x1xf32> to vector<16x128xf32>
    %557 = arith.addf %555, %556 : vector<16x128xf32>
    %558 = vector.extract_strided_slice %540 {offsets = [16, 0], sizes = [16, 128], strides = [1, 1]} : vector<48x128xf32> to vector<16x128xf32>
    %559 = arith.addf %557, %558 : vector<16x128xf32>
    %560 = arith.negf %559 : vector<16x128xf32>
    %561 = math.exp %560 : vector<16x128xf32>
    %cst_97 = arith.constant 1.000000e+00 : f32
    %562 = vector.broadcast %cst_97 : f32 to vector<16x128xf32>
    %563 = arith.addf %562, %561 : vector<16x128xf32>
    %564 = arith.divf %562, %563 : vector<16x128xf32>
    %565 = vector.broadcast %66 : vector<16x1xf32> to vector<16x128xf32>
    %566 = vector.broadcast %539 : vector<1x128xf32> to vector<16x128xf32>
    %567 = arith.mulf %565, %566 : vector<16x128xf32>
    %568 = vector.broadcast %73 : vector<16x1xf32> to vector<16x128xf32>
    %569 = arith.addf %567, %568 : vector<16x128xf32>
    %570 = vector.extract_strided_slice %540 {offsets = [32, 0], sizes = [16, 128], strides = [1, 1]} : vector<48x128xf32> to vector<16x128xf32>
    %571 = vector.broadcast %74 : vector<16x1xf32> to vector<16x128xf32>
    %572 = arith.addf %570, %571 : vector<16x128xf32>
    %573 = arith.mulf %552, %572 : vector<16x128xf32>
    %574 = arith.addf %569, %573 : vector<16x128xf32>
    %575 = math.tanh %574 : vector<16x128xf32>
    %cst_98 = arith.constant 1.000000e+00 : f32
    %576 = vector.broadcast %cst_98 : f32 to vector<16x128xf32>
    %577 = arith.subf %576, %564 : vector<16x128xf32>
    %578 = arith.mulf %577, %575 : vector<16x128xf32>
    %579 = arith.mulf %564, %529 : vector<16x128xf32>
    %580 = arith.addf %578, %579 : vector<16x128xf32>
    %c10 = arith.constant 10 : index
    %c0_99 = arith.constant 0 : index
    %581 = vector.load %arg1[%c10, %c0_99] : memref<20x128xf32, #tpu.memory_space<vmem>>, vector<1x128xf32>
    %582 = vector.extract_strided_slice %62 {offsets = [0, 0], sizes = [1, 128], strides = [1, 1]} : vector<5x128xf32> to vector<1x128xf32>
    %583 = arith.divf %581, %582 : vector<1x128xf32>
    %584 = vector.broadcast %0 : f32 to vector<1x128xf32>
    %585 = arith.mulf %584, %583 : vector<1x128xf32>
    %cst_100 = arith.constant 1.000000e+00 : f32
    %586 = arith.subf %cst_100, %0 : f32
    %587 = vector.broadcast %586 : f32 to vector<1x128xf32>
    %588 = arith.mulf %587, %538 : vector<1x128xf32>
    %589 = arith.addf %585, %588 : vector<1x128xf32>
    %590 = arith.divf %583, %589 : vector<1x128xf32>
    %cst_101 = arith.constant dense<0.000000e+00> : vector<48x128xf32>
    %591 = tpu.matmul %63, %580, %cst_101 {dimension_numbers = #tpu.dot_dimension_numbers<[1], [0], [0], [1], [0, 0, 1, 1], [], []>} : vector<48x16xf32>, vector<16x128xf32>, vector<48x128xf32> -> vector<48x128xf32>
    %592 = vector.broadcast %64 : vector<16x1xf32> to vector<16x128xf32>
    %593 = vector.broadcast %590 : vector<1x128xf32> to vector<16x128xf32>
    %594 = arith.mulf %592, %593 : vector<16x128xf32>
    %595 = vector.broadcast %69 : vector<16x1xf32> to vector<16x128xf32>
    %596 = arith.addf %594, %595 : vector<16x128xf32>
    %597 = vector.extract_strided_slice %591 {offsets = [0, 0], sizes = [16, 128], strides = [1, 1]} : vector<48x128xf32> to vector<16x128xf32>
    %598 = arith.addf %596, %597 : vector<16x128xf32>
    %599 = arith.negf %598 : vector<16x128xf32>
    %600 = math.exp %599 : vector<16x128xf32>
    %cst_102 = arith.constant 1.000000e+00 : f32
    %601 = vector.broadcast %cst_102 : f32 to vector<16x128xf32>
    %602 = arith.addf %601, %600 : vector<16x128xf32>
    %603 = arith.divf %601, %602 : vector<16x128xf32>
    %604 = vector.broadcast %65 : vector<16x1xf32> to vector<16x128xf32>
    %605 = vector.broadcast %590 : vector<1x128xf32> to vector<16x128xf32>
    %606 = arith.mulf %604, %605 : vector<16x128xf32>
    %607 = vector.broadcast %72 : vector<16x1xf32> to vector<16x128xf32>
    %608 = arith.addf %606, %607 : vector<16x128xf32>
    %609 = vector.extract_strided_slice %591 {offsets = [16, 0], sizes = [16, 128], strides = [1, 1]} : vector<48x128xf32> to vector<16x128xf32>
    %610 = arith.addf %608, %609 : vector<16x128xf32>
    %611 = arith.negf %610 : vector<16x128xf32>
    %612 = math.exp %611 : vector<16x128xf32>
    %cst_103 = arith.constant 1.000000e+00 : f32
    %613 = vector.broadcast %cst_103 : f32 to vector<16x128xf32>
    %614 = arith.addf %613, %612 : vector<16x128xf32>
    %615 = arith.divf %613, %614 : vector<16x128xf32>
    %616 = vector.broadcast %66 : vector<16x1xf32> to vector<16x128xf32>
    %617 = vector.broadcast %590 : vector<1x128xf32> to vector<16x128xf32>
    %618 = arith.mulf %616, %617 : vector<16x128xf32>
    %619 = vector.broadcast %73 : vector<16x1xf32> to vector<16x128xf32>
    %620 = arith.addf %618, %619 : vector<16x128xf32>
    %621 = vector.extract_strided_slice %591 {offsets = [32, 0], sizes = [16, 128], strides = [1, 1]} : vector<48x128xf32> to vector<16x128xf32>
    %622 = vector.broadcast %74 : vector<16x1xf32> to vector<16x128xf32>
    %623 = arith.addf %621, %622 : vector<16x128xf32>
    %624 = arith.mulf %603, %623 : vector<16x128xf32>
    %625 = arith.addf %620, %624 : vector<16x128xf32>
    %626 = math.tanh %625 : vector<16x128xf32>
    %cst_104 = arith.constant 1.000000e+00 : f32
    %627 = vector.broadcast %cst_104 : f32 to vector<16x128xf32>
    %628 = arith.subf %627, %615 : vector<16x128xf32>
    %629 = arith.mulf %628, %626 : vector<16x128xf32>
    %630 = arith.mulf %615, %580 : vector<16x128xf32>
    %631 = arith.addf %629, %630 : vector<16x128xf32>
    %c11 = arith.constant 11 : index
    %c0_105 = arith.constant 0 : index
    %632 = vector.load %arg1[%c11, %c0_105] : memref<20x128xf32, #tpu.memory_space<vmem>>, vector<1x128xf32>
    %633 = vector.extract_strided_slice %62 {offsets = [1, 0], sizes = [1, 128], strides = [1, 1]} : vector<5x128xf32> to vector<1x128xf32>
    %634 = arith.divf %632, %633 : vector<1x128xf32>
    %635 = vector.broadcast %0 : f32 to vector<1x128xf32>
    %636 = arith.mulf %635, %634 : vector<1x128xf32>
    %cst_106 = arith.constant 1.000000e+00 : f32
    %637 = arith.subf %cst_106, %0 : f32
    %638 = vector.broadcast %637 : f32 to vector<1x128xf32>
    %639 = arith.mulf %638, %589 : vector<1x128xf32>
    %640 = arith.addf %636, %639 : vector<1x128xf32>
    %641 = arith.divf %634, %640 : vector<1x128xf32>
    %cst_107 = arith.constant dense<0.000000e+00> : vector<48x128xf32>
    %642 = tpu.matmul %63, %631, %cst_107 {dimension_numbers = #tpu.dot_dimension_numbers<[1], [0], [0], [1], [0, 0, 1, 1], [], []>} : vector<48x16xf32>, vector<16x128xf32>, vector<48x128xf32> -> vector<48x128xf32>
    %643 = vector.broadcast %64 : vector<16x1xf32> to vector<16x128xf32>
    %644 = vector.broadcast %641 : vector<1x128xf32> to vector<16x128xf32>
    %645 = arith.mulf %643, %644 : vector<16x128xf32>
    %646 = vector.broadcast %69 : vector<16x1xf32> to vector<16x128xf32>
    %647 = arith.addf %645, %646 : vector<16x128xf32>
    %648 = vector.extract_strided_slice %642 {offsets = [0, 0], sizes = [16, 128], strides = [1, 1]} : vector<48x128xf32> to vector<16x128xf32>
    %649 = arith.addf %647, %648 : vector<16x128xf32>
    %650 = arith.negf %649 : vector<16x128xf32>
    %651 = math.exp %650 : vector<16x128xf32>
    %cst_108 = arith.constant 1.000000e+00 : f32
    %652 = vector.broadcast %cst_108 : f32 to vector<16x128xf32>
    %653 = arith.addf %652, %651 : vector<16x128xf32>
    %654 = arith.divf %652, %653 : vector<16x128xf32>
    %655 = vector.broadcast %65 : vector<16x1xf32> to vector<16x128xf32>
    %656 = vector.broadcast %641 : vector<1x128xf32> to vector<16x128xf32>
    %657 = arith.mulf %655, %656 : vector<16x128xf32>
    %658 = vector.broadcast %72 : vector<16x1xf32> to vector<16x128xf32>
    %659 = arith.addf %657, %658 : vector<16x128xf32>
    %660 = vector.extract_strided_slice %642 {offsets = [16, 0], sizes = [16, 128], strides = [1, 1]} : vector<48x128xf32> to vector<16x128xf32>
    %661 = arith.addf %659, %660 : vector<16x128xf32>
    %662 = arith.negf %661 : vector<16x128xf32>
    %663 = math.exp %662 : vector<16x128xf32>
    %cst_109 = arith.constant 1.000000e+00 : f32
    %664 = vector.broadcast %cst_109 : f32 to vector<16x128xf32>
    %665 = arith.addf %664, %663 : vector<16x128xf32>
    %666 = arith.divf %664, %665 : vector<16x128xf32>
    %667 = vector.broadcast %66 : vector<16x1xf32> to vector<16x128xf32>
    %668 = vector.broadcast %641 : vector<1x128xf32> to vector<16x128xf32>
    %669 = arith.mulf %667, %668 : vector<16x128xf32>
    %670 = vector.broadcast %73 : vector<16x1xf32> to vector<16x128xf32>
    %671 = arith.addf %669, %670 : vector<16x128xf32>
    %672 = vector.extract_strided_slice %642 {offsets = [32, 0], sizes = [16, 128], strides = [1, 1]} : vector<48x128xf32> to vector<16x128xf32>
    %673 = vector.broadcast %74 : vector<16x1xf32> to vector<16x128xf32>
    %674 = arith.addf %672, %673 : vector<16x128xf32>
    %675 = arith.mulf %654, %674 : vector<16x128xf32>
    %676 = arith.addf %671, %675 : vector<16x128xf32>
    %677 = math.tanh %676 : vector<16x128xf32>
    %cst_110 = arith.constant 1.000000e+00 : f32
    %678 = vector.broadcast %cst_110 : f32 to vector<16x128xf32>
    %679 = arith.subf %678, %666 : vector<16x128xf32>
    %680 = arith.mulf %679, %677 : vector<16x128xf32>
    %681 = arith.mulf %666, %631 : vector<16x128xf32>
    %682 = arith.addf %680, %681 : vector<16x128xf32>
    %c12 = arith.constant 12 : index
    %c0_111 = arith.constant 0 : index
    %683 = vector.load %arg1[%c12, %c0_111] : memref<20x128xf32, #tpu.memory_space<vmem>>, vector<1x128xf32>
    %684 = vector.extract_strided_slice %62 {offsets = [2, 0], sizes = [1, 128], strides = [1, 1]} : vector<5x128xf32> to vector<1x128xf32>
    %685 = arith.divf %683, %684 : vector<1x128xf32>
    %686 = vector.broadcast %0 : f32 to vector<1x128xf32>
    %687 = arith.mulf %686, %685 : vector<1x128xf32>
    %cst_112 = arith.constant 1.000000e+00 : f32
    %688 = arith.subf %cst_112, %0 : f32
    %689 = vector.broadcast %688 : f32 to vector<1x128xf32>
    %690 = arith.mulf %689, %640 : vector<1x128xf32>
    %691 = arith.addf %687, %690 : vector<1x128xf32>
    %692 = arith.divf %685, %691 : vector<1x128xf32>
    %cst_113 = arith.constant dense<0.000000e+00> : vector<48x128xf32>
    %693 = tpu.matmul %63, %682, %cst_113 {dimension_numbers = #tpu.dot_dimension_numbers<[1], [0], [0], [1], [0, 0, 1, 1], [], []>} : vector<48x16xf32>, vector<16x128xf32>, vector<48x128xf32> -> vector<48x128xf32>
    %694 = vector.broadcast %64 : vector<16x1xf32> to vector<16x128xf32>
    %695 = vector.broadcast %692 : vector<1x128xf32> to vector<16x128xf32>
    %696 = arith.mulf %694, %695 : vector<16x128xf32>
    %697 = vector.broadcast %69 : vector<16x1xf32> to vector<16x128xf32>
    %698 = arith.addf %696, %697 : vector<16x128xf32>
    %699 = vector.extract_strided_slice %693 {offsets = [0, 0], sizes = [16, 128], strides = [1, 1]} : vector<48x128xf32> to vector<16x128xf32>
    %700 = arith.addf %698, %699 : vector<16x128xf32>
    %701 = arith.negf %700 : vector<16x128xf32>
    %702 = math.exp %701 : vector<16x128xf32>
    %cst_114 = arith.constant 1.000000e+00 : f32
    %703 = vector.broadcast %cst_114 : f32 to vector<16x128xf32>
    %704 = arith.addf %703, %702 : vector<16x128xf32>
    %705 = arith.divf %703, %704 : vector<16x128xf32>
    %706 = vector.broadcast %65 : vector<16x1xf32> to vector<16x128xf32>
    %707 = vector.broadcast %692 : vector<1x128xf32> to vector<16x128xf32>
    %708 = arith.mulf %706, %707 : vector<16x128xf32>
    %709 = vector.broadcast %72 : vector<16x1xf32> to vector<16x128xf32>
    %710 = arith.addf %708, %709 : vector<16x128xf32>
    %711 = vector.extract_strided_slice %693 {offsets = [16, 0], sizes = [16, 128], strides = [1, 1]} : vector<48x128xf32> to vector<16x128xf32>
    %712 = arith.addf %710, %711 : vector<16x128xf32>
    %713 = arith.negf %712 : vector<16x128xf32>
    %714 = math.exp %713 : vector<16x128xf32>
    %cst_115 = arith.constant 1.000000e+00 : f32
    %715 = vector.broadcast %cst_115 : f32 to vector<16x128xf32>
    %716 = arith.addf %715, %714 : vector<16x128xf32>
    %717 = arith.divf %715, %716 : vector<16x128xf32>
    %718 = vector.broadcast %66 : vector<16x1xf32> to vector<16x128xf32>
    %719 = vector.broadcast %692 : vector<1x128xf32> to vector<16x128xf32>
    %720 = arith.mulf %718, %719 : vector<16x128xf32>
    %721 = vector.broadcast %73 : vector<16x1xf32> to vector<16x128xf32>
    %722 = arith.addf %720, %721 : vector<16x128xf32>
    %723 = vector.extract_strided_slice %693 {offsets = [32, 0], sizes = [16, 128], strides = [1, 1]} : vector<48x128xf32> to vector<16x128xf32>
    %724 = vector.broadcast %74 : vector<16x1xf32> to vector<16x128xf32>
    %725 = arith.addf %723, %724 : vector<16x128xf32>
    %726 = arith.mulf %705, %725 : vector<16x128xf32>
    %727 = arith.addf %722, %726 : vector<16x128xf32>
    %728 = math.tanh %727 : vector<16x128xf32>
    %cst_116 = arith.constant 1.000000e+00 : f32
    %729 = vector.broadcast %cst_116 : f32 to vector<16x128xf32>
    %730 = arith.subf %729, %717 : vector<16x128xf32>
    %731 = arith.mulf %730, %728 : vector<16x128xf32>
    %732 = arith.mulf %717, %682 : vector<16x128xf32>
    %733 = arith.addf %731, %732 : vector<16x128xf32>
    %c13 = arith.constant 13 : index
    %c0_117 = arith.constant 0 : index
    %734 = vector.load %arg1[%c13, %c0_117] : memref<20x128xf32, #tpu.memory_space<vmem>>, vector<1x128xf32>
    %735 = vector.extract_strided_slice %62 {offsets = [3, 0], sizes = [1, 128], strides = [1, 1]} : vector<5x128xf32> to vector<1x128xf32>
    %736 = arith.divf %734, %735 : vector<1x128xf32>
    %737 = vector.broadcast %0 : f32 to vector<1x128xf32>
    %738 = arith.mulf %737, %736 : vector<1x128xf32>
    %cst_118 = arith.constant 1.000000e+00 : f32
    %739 = arith.subf %cst_118, %0 : f32
    %740 = vector.broadcast %739 : f32 to vector<1x128xf32>
    %741 = arith.mulf %740, %691 : vector<1x128xf32>
    %742 = arith.addf %738, %741 : vector<1x128xf32>
    %743 = arith.divf %736, %742 : vector<1x128xf32>
    %cst_119 = arith.constant dense<0.000000e+00> : vector<48x128xf32>
    %744 = tpu.matmul %63, %733, %cst_119 {dimension_numbers = #tpu.dot_dimension_numbers<[1], [0], [0], [1], [0, 0, 1, 1], [], []>} : vector<48x16xf32>, vector<16x128xf32>, vector<48x128xf32> -> vector<48x128xf32>
    %745 = vector.broadcast %64 : vector<16x1xf32> to vector<16x128xf32>
    %746 = vector.broadcast %743 : vector<1x128xf32> to vector<16x128xf32>
    %747 = arith.mulf %745, %746 : vector<16x128xf32>
    %748 = vector.broadcast %69 : vector<16x1xf32> to vector<16x128xf32>
    %749 = arith.addf %747, %748 : vector<16x128xf32>
    %750 = vector.extract_strided_slice %744 {offsets = [0, 0], sizes = [16, 128], strides = [1, 1]} : vector<48x128xf32> to vector<16x128xf32>
    %751 = arith.addf %749, %750 : vector<16x128xf32>
    %752 = arith.negf %751 : vector<16x128xf32>
    %753 = math.exp %752 : vector<16x128xf32>
    %cst_120 = arith.constant 1.000000e+00 : f32
    %754 = vector.broadcast %cst_120 : f32 to vector<16x128xf32>
    %755 = arith.addf %754, %753 : vector<16x128xf32>
    %756 = arith.divf %754, %755 : vector<16x128xf32>
    %757 = vector.broadcast %65 : vector<16x1xf32> to vector<16x128xf32>
    %758 = vector.broadcast %743 : vector<1x128xf32> to vector<16x128xf32>
    %759 = arith.mulf %757, %758 : vector<16x128xf32>
    %760 = vector.broadcast %72 : vector<16x1xf32> to vector<16x128xf32>
    %761 = arith.addf %759, %760 : vector<16x128xf32>
    %762 = vector.extract_strided_slice %744 {offsets = [16, 0], sizes = [16, 128], strides = [1, 1]} : vector<48x128xf32> to vector<16x128xf32>
    %763 = arith.addf %761, %762 : vector<16x128xf32>
    %764 = arith.negf %763 : vector<16x128xf32>
    %765 = math.exp %764 : vector<16x128xf32>
    %cst_121 = arith.constant 1.000000e+00 : f32
    %766 = vector.broadcast %cst_121 : f32 to vector<16x128xf32>
    %767 = arith.addf %766, %765 : vector<16x128xf32>
    %768 = arith.divf %766, %767 : vector<16x128xf32>
    %769 = vector.broadcast %66 : vector<16x1xf32> to vector<16x128xf32>
    %770 = vector.broadcast %743 : vector<1x128xf32> to vector<16x128xf32>
    %771 = arith.mulf %769, %770 : vector<16x128xf32>
    %772 = vector.broadcast %73 : vector<16x1xf32> to vector<16x128xf32>
    %773 = arith.addf %771, %772 : vector<16x128xf32>
    %774 = vector.extract_strided_slice %744 {offsets = [32, 0], sizes = [16, 128], strides = [1, 1]} : vector<48x128xf32> to vector<16x128xf32>
    %775 = vector.broadcast %74 : vector<16x1xf32> to vector<16x128xf32>
    %776 = arith.addf %774, %775 : vector<16x128xf32>
    %777 = arith.mulf %756, %776 : vector<16x128xf32>
    %778 = arith.addf %773, %777 : vector<16x128xf32>
    %779 = math.tanh %778 : vector<16x128xf32>
    %cst_122 = arith.constant 1.000000e+00 : f32
    %780 = vector.broadcast %cst_122 : f32 to vector<16x128xf32>
    %781 = arith.subf %780, %768 : vector<16x128xf32>
    %782 = arith.mulf %781, %779 : vector<16x128xf32>
    %783 = arith.mulf %768, %733 : vector<16x128xf32>
    %784 = arith.addf %782, %783 : vector<16x128xf32>
    %c14 = arith.constant 14 : index
    %c0_123 = arith.constant 0 : index
    %785 = vector.load %arg1[%c14, %c0_123] : memref<20x128xf32, #tpu.memory_space<vmem>>, vector<1x128xf32>
    %786 = vector.extract_strided_slice %62 {offsets = [4, 0], sizes = [1, 128], strides = [1, 1]} : vector<5x128xf32> to vector<1x128xf32>
    %787 = arith.divf %785, %786 : vector<1x128xf32>
    %788 = vector.broadcast %0 : f32 to vector<1x128xf32>
    %789 = arith.mulf %788, %787 : vector<1x128xf32>
    %cst_124 = arith.constant 1.000000e+00 : f32
    %790 = arith.subf %cst_124, %0 : f32
    %791 = vector.broadcast %790 : f32 to vector<1x128xf32>
    %792 = arith.mulf %791, %742 : vector<1x128xf32>
    %793 = arith.addf %789, %792 : vector<1x128xf32>
    %794 = arith.divf %787, %793 : vector<1x128xf32>
    %cst_125 = arith.constant dense<0.000000e+00> : vector<48x128xf32>
    %795 = tpu.matmul %63, %784, %cst_125 {dimension_numbers = #tpu.dot_dimension_numbers<[1], [0], [0], [1], [0, 0, 1, 1], [], []>} : vector<48x16xf32>, vector<16x128xf32>, vector<48x128xf32> -> vector<48x128xf32>
    %796 = vector.broadcast %64 : vector<16x1xf32> to vector<16x128xf32>
    %797 = vector.broadcast %794 : vector<1x128xf32> to vector<16x128xf32>
    %798 = arith.mulf %796, %797 : vector<16x128xf32>
    %799 = vector.broadcast %69 : vector<16x1xf32> to vector<16x128xf32>
    %800 = arith.addf %798, %799 : vector<16x128xf32>
    %801 = vector.extract_strided_slice %795 {offsets = [0, 0], sizes = [16, 128], strides = [1, 1]} : vector<48x128xf32> to vector<16x128xf32>
    %802 = arith.addf %800, %801 : vector<16x128xf32>
    %803 = arith.negf %802 : vector<16x128xf32>
    %804 = math.exp %803 : vector<16x128xf32>
    %cst_126 = arith.constant 1.000000e+00 : f32
    %805 = vector.broadcast %cst_126 : f32 to vector<16x128xf32>
    %806 = arith.addf %805, %804 : vector<16x128xf32>
    %807 = arith.divf %805, %806 : vector<16x128xf32>
    %808 = vector.broadcast %65 : vector<16x1xf32> to vector<16x128xf32>
    %809 = vector.broadcast %794 : vector<1x128xf32> to vector<16x128xf32>
    %810 = arith.mulf %808, %809 : vector<16x128xf32>
    %811 = vector.broadcast %72 : vector<16x1xf32> to vector<16x128xf32>
    %812 = arith.addf %810, %811 : vector<16x128xf32>
    %813 = vector.extract_strided_slice %795 {offsets = [16, 0], sizes = [16, 128], strides = [1, 1]} : vector<48x128xf32> to vector<16x128xf32>
    %814 = arith.addf %812, %813 : vector<16x128xf32>
    %815 = arith.negf %814 : vector<16x128xf32>
    %816 = math.exp %815 : vector<16x128xf32>
    %cst_127 = arith.constant 1.000000e+00 : f32
    %817 = vector.broadcast %cst_127 : f32 to vector<16x128xf32>
    %818 = arith.addf %817, %816 : vector<16x128xf32>
    %819 = arith.divf %817, %818 : vector<16x128xf32>
    %820 = vector.broadcast %66 : vector<16x1xf32> to vector<16x128xf32>
    %821 = vector.broadcast %794 : vector<1x128xf32> to vector<16x128xf32>
    %822 = arith.mulf %820, %821 : vector<16x128xf32>
    %823 = vector.broadcast %73 : vector<16x1xf32> to vector<16x128xf32>
    %824 = arith.addf %822, %823 : vector<16x128xf32>
    %825 = vector.extract_strided_slice %795 {offsets = [32, 0], sizes = [16, 128], strides = [1, 1]} : vector<48x128xf32> to vector<16x128xf32>
    %826 = vector.broadcast %74 : vector<16x1xf32> to vector<16x128xf32>
    %827 = arith.addf %825, %826 : vector<16x128xf32>
    %828 = arith.mulf %807, %827 : vector<16x128xf32>
    %829 = arith.addf %824, %828 : vector<16x128xf32>
    %830 = math.tanh %829 : vector<16x128xf32>
    %cst_128 = arith.constant 1.000000e+00 : f32
    %831 = vector.broadcast %cst_128 : f32 to vector<16x128xf32>
    %832 = arith.subf %831, %819 : vector<16x128xf32>
    %833 = arith.mulf %832, %830 : vector<16x128xf32>
    %834 = arith.mulf %819, %784 : vector<16x128xf32>
    %835 = arith.addf %833, %834 : vector<16x128xf32>
    %c15 = arith.constant 15 : index
    %c0_129 = arith.constant 0 : index
    %836 = vector.load %arg1[%c15, %c0_129] : memref<20x128xf32, #tpu.memory_space<vmem>>, vector<1x128xf32>
    %837 = vector.extract_strided_slice %62 {offsets = [0, 0], sizes = [1, 128], strides = [1, 1]} : vector<5x128xf32> to vector<1x128xf32>
    %838 = arith.divf %836, %837 : vector<1x128xf32>
    %839 = vector.broadcast %0 : f32 to vector<1x128xf32>
    %840 = arith.mulf %839, %838 : vector<1x128xf32>
    %cst_130 = arith.constant 1.000000e+00 : f32
    %841 = arith.subf %cst_130, %0 : f32
    %842 = vector.broadcast %841 : f32 to vector<1x128xf32>
    %843 = arith.mulf %842, %793 : vector<1x128xf32>
    %844 = arith.addf %840, %843 : vector<1x128xf32>
    %845 = arith.divf %838, %844 : vector<1x128xf32>
    %cst_131 = arith.constant dense<0.000000e+00> : vector<48x128xf32>
    %846 = tpu.matmul %63, %835, %cst_131 {dimension_numbers = #tpu.dot_dimension_numbers<[1], [0], [0], [1], [0, 0, 1, 1], [], []>} : vector<48x16xf32>, vector<16x128xf32>, vector<48x128xf32> -> vector<48x128xf32>
    %847 = vector.broadcast %64 : vector<16x1xf32> to vector<16x128xf32>
    %848 = vector.broadcast %845 : vector<1x128xf32> to vector<16x128xf32>
    %849 = arith.mulf %847, %848 : vector<16x128xf32>
    %850 = vector.broadcast %69 : vector<16x1xf32> to vector<16x128xf32>
    %851 = arith.addf %849, %850 : vector<16x128xf32>
    %852 = vector.extract_strided_slice %846 {offsets = [0, 0], sizes = [16, 128], strides = [1, 1]} : vector<48x128xf32> to vector<16x128xf32>
    %853 = arith.addf %851, %852 : vector<16x128xf32>
    %854 = arith.negf %853 : vector<16x128xf32>
    %855 = math.exp %854 : vector<16x128xf32>
    %cst_132 = arith.constant 1.000000e+00 : f32
    %856 = vector.broadcast %cst_132 : f32 to vector<16x128xf32>
    %857 = arith.addf %856, %855 : vector<16x128xf32>
    %858 = arith.divf %856, %857 : vector<16x128xf32>
    %859 = vector.broadcast %65 : vector<16x1xf32> to vector<16x128xf32>
    %860 = vector.broadcast %845 : vector<1x128xf32> to vector<16x128xf32>
    %861 = arith.mulf %859, %860 : vector<16x128xf32>
    %862 = vector.broadcast %72 : vector<16x1xf32> to vector<16x128xf32>
    %863 = arith.addf %861, %862 : vector<16x128xf32>
    %864 = vector.extract_strided_slice %846 {offsets = [16, 0], sizes = [16, 128], strides = [1, 1]} : vector<48x128xf32> to vector<16x128xf32>
    %865 = arith.addf %863, %864 : vector<16x128xf32>
    %866 = arith.negf %865 : vector<16x128xf32>
    %867 = math.exp %866 : vector<16x128xf32>
    %cst_133 = arith.constant 1.000000e+00 : f32
    %868 = vector.broadcast %cst_133 : f32 to vector<16x128xf32>
    %869 = arith.addf %868, %867 : vector<16x128xf32>
    %870 = arith.divf %868, %869 : vector<16x128xf32>
    %871 = vector.broadcast %66 : vector<16x1xf32> to vector<16x128xf32>
    %872 = vector.broadcast %845 : vector<1x128xf32> to vector<16x128xf32>
    %873 = arith.mulf %871, %872 : vector<16x128xf32>
    %874 = vector.broadcast %73 : vector<16x1xf32> to vector<16x128xf32>
    %875 = arith.addf %873, %874 : vector<16x128xf32>
    %876 = vector.extract_strided_slice %846 {offsets = [32, 0], sizes = [16, 128], strides = [1, 1]} : vector<48x128xf32> to vector<16x128xf32>
    %877 = vector.broadcast %74 : vector<16x1xf32> to vector<16x128xf32>
    %878 = arith.addf %876, %877 : vector<16x128xf32>
    %879 = arith.mulf %858, %878 : vector<16x128xf32>
    %880 = arith.addf %875, %879 : vector<16x128xf32>
    %881 = math.tanh %880 : vector<16x128xf32>
    %cst_134 = arith.constant 1.000000e+00 : f32
    %882 = vector.broadcast %cst_134 : f32 to vector<16x128xf32>
    %883 = arith.subf %882, %870 : vector<16x128xf32>
    %884 = arith.mulf %883, %881 : vector<16x128xf32>
    %885 = arith.mulf %870, %835 : vector<16x128xf32>
    %886 = arith.addf %884, %885 : vector<16x128xf32>
    %c16_135 = arith.constant 16 : index
    %c0_136 = arith.constant 0 : index
    %887 = vector.load %arg1[%c16_135, %c0_136] : memref<20x128xf32, #tpu.memory_space<vmem>>, vector<1x128xf32>
    %888 = vector.extract_strided_slice %62 {offsets = [1, 0], sizes = [1, 128], strides = [1, 1]} : vector<5x128xf32> to vector<1x128xf32>
    %889 = arith.divf %887, %888 : vector<1x128xf32>
    %890 = vector.broadcast %0 : f32 to vector<1x128xf32>
    %891 = arith.mulf %890, %889 : vector<1x128xf32>
    %cst_137 = arith.constant 1.000000e+00 : f32
    %892 = arith.subf %cst_137, %0 : f32
    %893 = vector.broadcast %892 : f32 to vector<1x128xf32>
    %894 = arith.mulf %893, %844 : vector<1x128xf32>
    %895 = arith.addf %891, %894 : vector<1x128xf32>
    %896 = arith.divf %889, %895 : vector<1x128xf32>
    %cst_138 = arith.constant dense<0.000000e+00> : vector<48x128xf32>
    %897 = tpu.matmul %63, %886, %cst_138 {dimension_numbers = #tpu.dot_dimension_numbers<[1], [0], [0], [1], [0, 0, 1, 1], [], []>} : vector<48x16xf32>, vector<16x128xf32>, vector<48x128xf32> -> vector<48x128xf32>
    %898 = vector.broadcast %64 : vector<16x1xf32> to vector<16x128xf32>
    %899 = vector.broadcast %896 : vector<1x128xf32> to vector<16x128xf32>
    %900 = arith.mulf %898, %899 : vector<16x128xf32>
    %901 = vector.broadcast %69 : vector<16x1xf32> to vector<16x128xf32>
    %902 = arith.addf %900, %901 : vector<16x128xf32>
    %903 = vector.extract_strided_slice %897 {offsets = [0, 0], sizes = [16, 128], strides = [1, 1]} : vector<48x128xf32> to vector<16x128xf32>
    %904 = arith.addf %902, %903 : vector<16x128xf32>
    %905 = arith.negf %904 : vector<16x128xf32>
    %906 = math.exp %905 : vector<16x128xf32>
    %cst_139 = arith.constant 1.000000e+00 : f32
    %907 = vector.broadcast %cst_139 : f32 to vector<16x128xf32>
    %908 = arith.addf %907, %906 : vector<16x128xf32>
    %909 = arith.divf %907, %908 : vector<16x128xf32>
    %910 = vector.broadcast %65 : vector<16x1xf32> to vector<16x128xf32>
    %911 = vector.broadcast %896 : vector<1x128xf32> to vector<16x128xf32>
    %912 = arith.mulf %910, %911 : vector<16x128xf32>
    %913 = vector.broadcast %72 : vector<16x1xf32> to vector<16x128xf32>
    %914 = arith.addf %912, %913 : vector<16x128xf32>
    %915 = vector.extract_strided_slice %897 {offsets = [16, 0], sizes = [16, 128], strides = [1, 1]} : vector<48x128xf32> to vector<16x128xf32>
    %916 = arith.addf %914, %915 : vector<16x128xf32>
    %917 = arith.negf %916 : vector<16x128xf32>
    %918 = math.exp %917 : vector<16x128xf32>
    %cst_140 = arith.constant 1.000000e+00 : f32
    %919 = vector.broadcast %cst_140 : f32 to vector<16x128xf32>
    %920 = arith.addf %919, %918 : vector<16x128xf32>
    %921 = arith.divf %919, %920 : vector<16x128xf32>
    %922 = vector.broadcast %66 : vector<16x1xf32> to vector<16x128xf32>
    %923 = vector.broadcast %896 : vector<1x128xf32> to vector<16x128xf32>
    %924 = arith.mulf %922, %923 : vector<16x128xf32>
    %925 = vector.broadcast %73 : vector<16x1xf32> to vector<16x128xf32>
    %926 = arith.addf %924, %925 : vector<16x128xf32>
    %927 = vector.extract_strided_slice %897 {offsets = [32, 0], sizes = [16, 128], strides = [1, 1]} : vector<48x128xf32> to vector<16x128xf32>
    %928 = vector.broadcast %74 : vector<16x1xf32> to vector<16x128xf32>
    %929 = arith.addf %927, %928 : vector<16x128xf32>
    %930 = arith.mulf %909, %929 : vector<16x128xf32>
    %931 = arith.addf %926, %930 : vector<16x128xf32>
    %932 = math.tanh %931 : vector<16x128xf32>
    %cst_141 = arith.constant 1.000000e+00 : f32
    %933 = vector.broadcast %cst_141 : f32 to vector<16x128xf32>
    %934 = arith.subf %933, %921 : vector<16x128xf32>
    %935 = arith.mulf %934, %932 : vector<16x128xf32>
    %936 = arith.mulf %921, %886 : vector<16x128xf32>
    %937 = arith.addf %935, %936 : vector<16x128xf32>
    %c17 = arith.constant 17 : index
    %c0_142 = arith.constant 0 : index
    %938 = vector.load %arg1[%c17, %c0_142] : memref<20x128xf32, #tpu.memory_space<vmem>>, vector<1x128xf32>
    %939 = vector.extract_strided_slice %62 {offsets = [2, 0], sizes = [1, 128], strides = [1, 1]} : vector<5x128xf32> to vector<1x128xf32>
    %940 = arith.divf %938, %939 : vector<1x128xf32>
    %941 = vector.broadcast %0 : f32 to vector<1x128xf32>
    %942 = arith.mulf %941, %940 : vector<1x128xf32>
    %cst_143 = arith.constant 1.000000e+00 : f32
    %943 = arith.subf %cst_143, %0 : f32
    %944 = vector.broadcast %943 : f32 to vector<1x128xf32>
    %945 = arith.mulf %944, %895 : vector<1x128xf32>
    %946 = arith.addf %942, %945 : vector<1x128xf32>
    %947 = arith.divf %940, %946 : vector<1x128xf32>
    %cst_144 = arith.constant dense<0.000000e+00> : vector<48x128xf32>
    %948 = tpu.matmul %63, %937, %cst_144 {dimension_numbers = #tpu.dot_dimension_numbers<[1], [0], [0], [1], [0, 0, 1, 1], [], []>} : vector<48x16xf32>, vector<16x128xf32>, vector<48x128xf32> -> vector<48x128xf32>
    %949 = vector.broadcast %64 : vector<16x1xf32> to vector<16x128xf32>
    %950 = vector.broadcast %947 : vector<1x128xf32> to vector<16x128xf32>
    %951 = arith.mulf %949, %950 : vector<16x128xf32>
    %952 = vector.broadcast %69 : vector<16x1xf32> to vector<16x128xf32>
    %953 = arith.addf %951, %952 : vector<16x128xf32>
    %954 = vector.extract_strided_slice %948 {offsets = [0, 0], sizes = [16, 128], strides = [1, 1]} : vector<48x128xf32> to vector<16x128xf32>
    %955 = arith.addf %953, %954 : vector<16x128xf32>
    %956 = arith.negf %955 : vector<16x128xf32>
    %957 = math.exp %956 : vector<16x128xf32>
    %cst_145 = arith.constant 1.000000e+00 : f32
    %958 = vector.broadcast %cst_145 : f32 to vector<16x128xf32>
    %959 = arith.addf %958, %957 : vector<16x128xf32>
    %960 = arith.divf %958, %959 : vector<16x128xf32>
    %961 = vector.broadcast %65 : vector<16x1xf32> to vector<16x128xf32>
    %962 = vector.broadcast %947 : vector<1x128xf32> to vector<16x128xf32>
    %963 = arith.mulf %961, %962 : vector<16x128xf32>
    %964 = vector.broadcast %72 : vector<16x1xf32> to vector<16x128xf32>
    %965 = arith.addf %963, %964 : vector<16x128xf32>
    %966 = vector.extract_strided_slice %948 {offsets = [16, 0], sizes = [16, 128], strides = [1, 1]} : vector<48x128xf32> to vector<16x128xf32>
    %967 = arith.addf %965, %966 : vector<16x128xf32>
    %968 = arith.negf %967 : vector<16x128xf32>
    %969 = math.exp %968 : vector<16x128xf32>
    %cst_146 = arith.constant 1.000000e+00 : f32
    %970 = vector.broadcast %cst_146 : f32 to vector<16x128xf32>
    %971 = arith.addf %970, %969 : vector<16x128xf32>
    %972 = arith.divf %970, %971 : vector<16x128xf32>
    %973 = vector.broadcast %66 : vector<16x1xf32> to vector<16x128xf32>
    %974 = vector.broadcast %947 : vector<1x128xf32> to vector<16x128xf32>
    %975 = arith.mulf %973, %974 : vector<16x128xf32>
    %976 = vector.broadcast %73 : vector<16x1xf32> to vector<16x128xf32>
    %977 = arith.addf %975, %976 : vector<16x128xf32>
    %978 = vector.extract_strided_slice %948 {offsets = [32, 0], sizes = [16, 128], strides = [1, 1]} : vector<48x128xf32> to vector<16x128xf32>
    %979 = vector.broadcast %74 : vector<16x1xf32> to vector<16x128xf32>
    %980 = arith.addf %978, %979 : vector<16x128xf32>
    %981 = arith.mulf %960, %980 : vector<16x128xf32>
    %982 = arith.addf %977, %981 : vector<16x128xf32>
    %983 = math.tanh %982 : vector<16x128xf32>
    %cst_147 = arith.constant 1.000000e+00 : f32
    %984 = vector.broadcast %cst_147 : f32 to vector<16x128xf32>
    %985 = arith.subf %984, %972 : vector<16x128xf32>
    %986 = arith.mulf %985, %983 : vector<16x128xf32>
    %987 = arith.mulf %972, %937 : vector<16x128xf32>
    %988 = arith.addf %986, %987 : vector<16x128xf32>
    %c18 = arith.constant 18 : index
    %c0_148 = arith.constant 0 : index
    %989 = vector.load %arg1[%c18, %c0_148] : memref<20x128xf32, #tpu.memory_space<vmem>>, vector<1x128xf32>
    %990 = vector.extract_strided_slice %62 {offsets = [3, 0], sizes = [1, 128], strides = [1, 1]} : vector<5x128xf32> to vector<1x128xf32>
    %991 = arith.divf %989, %990 : vector<1x128xf32>
    %992 = vector.broadcast %0 : f32 to vector<1x128xf32>
    %993 = arith.mulf %992, %991 : vector<1x128xf32>
    %cst_149 = arith.constant 1.000000e+00 : f32
    %994 = arith.subf %cst_149, %0 : f32
    %995 = vector.broadcast %994 : f32 to vector<1x128xf32>
    %996 = arith.mulf %995, %946 : vector<1x128xf32>
    %997 = arith.addf %993, %996 : vector<1x128xf32>
    %998 = arith.divf %991, %997 : vector<1x128xf32>
    %cst_150 = arith.constant dense<0.000000e+00> : vector<48x128xf32>
    %999 = tpu.matmul %63, %988, %cst_150 {dimension_numbers = #tpu.dot_dimension_numbers<[1], [0], [0], [1], [0, 0, 1, 1], [], []>} : vector<48x16xf32>, vector<16x128xf32>, vector<48x128xf32> -> vector<48x128xf32>
    %1000 = vector.broadcast %64 : vector<16x1xf32> to vector<16x128xf32>
    %1001 = vector.broadcast %998 : vector<1x128xf32> to vector<16x128xf32>
    %1002 = arith.mulf %1000, %1001 : vector<16x128xf32>
    %1003 = vector.broadcast %69 : vector<16x1xf32> to vector<16x128xf32>
    %1004 = arith.addf %1002, %1003 : vector<16x128xf32>
    %1005 = vector.extract_strided_slice %999 {offsets = [0, 0], sizes = [16, 128], strides = [1, 1]} : vector<48x128xf32> to vector<16x128xf32>
    %1006 = arith.addf %1004, %1005 : vector<16x128xf32>
    %1007 = arith.negf %1006 : vector<16x128xf32>
    %1008 = math.exp %1007 : vector<16x128xf32>
    %cst_151 = arith.constant 1.000000e+00 : f32
    %1009 = vector.broadcast %cst_151 : f32 to vector<16x128xf32>
    %1010 = arith.addf %1009, %1008 : vector<16x128xf32>
    %1011 = arith.divf %1009, %1010 : vector<16x128xf32>
    %1012 = vector.broadcast %65 : vector<16x1xf32> to vector<16x128xf32>
    %1013 = vector.broadcast %998 : vector<1x128xf32> to vector<16x128xf32>
    %1014 = arith.mulf %1012, %1013 : vector<16x128xf32>
    %1015 = vector.broadcast %72 : vector<16x1xf32> to vector<16x128xf32>
    %1016 = arith.addf %1014, %1015 : vector<16x128xf32>
    %1017 = vector.extract_strided_slice %999 {offsets = [16, 0], sizes = [16, 128], strides = [1, 1]} : vector<48x128xf32> to vector<16x128xf32>
    %1018 = arith.addf %1016, %1017 : vector<16x128xf32>
    %1019 = arith.negf %1018 : vector<16x128xf32>
    %1020 = math.exp %1019 : vector<16x128xf32>
    %cst_152 = arith.constant 1.000000e+00 : f32
    %1021 = vector.broadcast %cst_152 : f32 to vector<16x128xf32>
    %1022 = arith.addf %1021, %1020 : vector<16x128xf32>
    %1023 = arith.divf %1021, %1022 : vector<16x128xf32>
    %1024 = vector.broadcast %66 : vector<16x1xf32> to vector<16x128xf32>
    %1025 = vector.broadcast %998 : vector<1x128xf32> to vector<16x128xf32>
    %1026 = arith.mulf %1024, %1025 : vector<16x128xf32>
    %1027 = vector.broadcast %73 : vector<16x1xf32> to vector<16x128xf32>
    %1028 = arith.addf %1026, %1027 : vector<16x128xf32>
    %1029 = vector.extract_strided_slice %999 {offsets = [32, 0], sizes = [16, 128], strides = [1, 1]} : vector<48x128xf32> to vector<16x128xf32>
    %1030 = vector.broadcast %74 : vector<16x1xf32> to vector<16x128xf32>
    %1031 = arith.addf %1029, %1030 : vector<16x128xf32>
    %1032 = arith.mulf %1011, %1031 : vector<16x128xf32>
    %1033 = arith.addf %1028, %1032 : vector<16x128xf32>
    %1034 = math.tanh %1033 : vector<16x128xf32>
    %cst_153 = arith.constant 1.000000e+00 : f32
    %1035 = vector.broadcast %cst_153 : f32 to vector<16x128xf32>
    %1036 = arith.subf %1035, %1023 : vector<16x128xf32>
    %1037 = arith.mulf %1036, %1034 : vector<16x128xf32>
    %1038 = arith.mulf %1023, %988 : vector<16x128xf32>
    %1039 = arith.addf %1037, %1038 : vector<16x128xf32>
    %c19 = arith.constant 19 : index
    %c0_154 = arith.constant 0 : index
    %1040 = vector.load %arg1[%c19, %c0_154] : memref<20x128xf32, #tpu.memory_space<vmem>>, vector<1x128xf32>
    %1041 = vector.extract_strided_slice %62 {offsets = [4, 0], sizes = [1, 128], strides = [1, 1]} : vector<5x128xf32> to vector<1x128xf32>
    %1042 = arith.divf %1040, %1041 : vector<1x128xf32>
    %1043 = vector.broadcast %0 : f32 to vector<1x128xf32>
    %1044 = arith.mulf %1043, %1042 : vector<1x128xf32>
    %cst_155 = arith.constant 1.000000e+00 : f32
    %1045 = arith.subf %cst_155, %0 : f32
    %1046 = vector.broadcast %1045 : f32 to vector<1x128xf32>
    %1047 = arith.mulf %1046, %997 : vector<1x128xf32>
    %1048 = arith.addf %1044, %1047 : vector<1x128xf32>
    %1049 = arith.divf %1042, %1048 : vector<1x128xf32>
    %cst_156 = arith.constant dense<0.000000e+00> : vector<48x128xf32>
    %1050 = tpu.matmul %63, %1039, %cst_156 {dimension_numbers = #tpu.dot_dimension_numbers<[1], [0], [0], [1], [0, 0, 1, 1], [], []>} : vector<48x16xf32>, vector<16x128xf32>, vector<48x128xf32> -> vector<48x128xf32>
    %1051 = vector.broadcast %64 : vector<16x1xf32> to vector<16x128xf32>
    %1052 = vector.broadcast %1049 : vector<1x128xf32> to vector<16x128xf32>
    %1053 = arith.mulf %1051, %1052 : vector<16x128xf32>
    %1054 = vector.broadcast %69 : vector<16x1xf32> to vector<16x128xf32>
    %1055 = arith.addf %1053, %1054 : vector<16x128xf32>
    %1056 = vector.extract_strided_slice %1050 {offsets = [0, 0], sizes = [16, 128], strides = [1, 1]} : vector<48x128xf32> to vector<16x128xf32>
    %1057 = arith.addf %1055, %1056 : vector<16x128xf32>
    %1058 = arith.negf %1057 : vector<16x128xf32>
    %1059 = math.exp %1058 : vector<16x128xf32>
    %cst_157 = arith.constant 1.000000e+00 : f32
    %1060 = vector.broadcast %cst_157 : f32 to vector<16x128xf32>
    %1061 = arith.addf %1060, %1059 : vector<16x128xf32>
    %1062 = arith.divf %1060, %1061 : vector<16x128xf32>
    %1063 = vector.broadcast %65 : vector<16x1xf32> to vector<16x128xf32>
    %1064 = vector.broadcast %1049 : vector<1x128xf32> to vector<16x128xf32>
    %1065 = arith.mulf %1063, %1064 : vector<16x128xf32>
    %1066 = vector.broadcast %72 : vector<16x1xf32> to vector<16x128xf32>
    %1067 = arith.addf %1065, %1066 : vector<16x128xf32>
    %1068 = vector.extract_strided_slice %1050 {offsets = [16, 0], sizes = [16, 128], strides = [1, 1]} : vector<48x128xf32> to vector<16x128xf32>
    %1069 = arith.addf %1067, %1068 : vector<16x128xf32>
    %1070 = arith.negf %1069 : vector<16x128xf32>
    %1071 = math.exp %1070 : vector<16x128xf32>
    %cst_158 = arith.constant 1.000000e+00 : f32
    %1072 = vector.broadcast %cst_158 : f32 to vector<16x128xf32>
    %1073 = arith.addf %1072, %1071 : vector<16x128xf32>
    %1074 = arith.divf %1072, %1073 : vector<16x128xf32>
    %1075 = vector.broadcast %66 : vector<16x1xf32> to vector<16x128xf32>
    %1076 = vector.broadcast %1049 : vector<1x128xf32> to vector<16x128xf32>
    %1077 = arith.mulf %1075, %1076 : vector<16x128xf32>
    %1078 = vector.broadcast %73 : vector<16x1xf32> to vector<16x128xf32>
    %1079 = arith.addf %1077, %1078 : vector<16x128xf32>
    %1080 = vector.extract_strided_slice %1050 {offsets = [32, 0], sizes = [16, 128], strides = [1, 1]} : vector<48x128xf32> to vector<16x128xf32>
    %1081 = vector.broadcast %74 : vector<16x1xf32> to vector<16x128xf32>
    %1082 = arith.addf %1080, %1081 : vector<16x128xf32>
    %1083 = arith.mulf %1062, %1082 : vector<16x128xf32>
    %1084 = arith.addf %1079, %1083 : vector<16x128xf32>
    %1085 = math.tanh %1084 : vector<16x128xf32>
    %cst_159 = arith.constant 1.000000e+00 : f32
    %1086 = vector.broadcast %cst_159 : f32 to vector<16x128xf32>
    %1087 = arith.subf %1086, %1074 : vector<16x128xf32>
    %1088 = arith.mulf %1087, %1085 : vector<16x128xf32>
    %1089 = arith.mulf %1074, %1039 : vector<16x128xf32>
    %1090 = arith.addf %1088, %1089 : vector<16x128xf32>
    %c0_160 = arith.constant 0 : index
    %c0_161 = arith.constant 0 : index
    %1091 = vector.load %arg7[%c0_160, %c0_161] : memref<14x16xf32, #tpu.memory_space<vmem>>, vector<14x16xf32>
    %cst_162 = arith.constant dense<0.000000e+00> : vector<14x128xf32>
    %1092 = tpu.matmul %1091, %1090, %cst_162 {dimension_numbers = #tpu.dot_dimension_numbers<[1], [0], [0], [1], [0, 0, 1, 1], [], []>} : vector<14x16xf32>, vector<16x128xf32>, vector<14x128xf32> -> vector<14x128xf32>
    %c0_163 = arith.constant 0 : index
    %c0_164 = arith.constant 0 : index
    %1093 = vector.load %arg8[%c0_163, %c0_164] : memref<14x1xf32, #tpu.memory_space<vmem>>, vector<14x1xf32>
    %1094 = vector.broadcast %1093 : vector<14x1xf32> to vector<14x128xf32>
    %1095 = arith.addf %1092, %1094 : vector<14x128xf32>
    %1096 = tpu.iota {dimensions = array<i32: 0>} : vector<14x128xi32>
    %c5_i32_165 = arith.constant 5 : i32
    %c0_i32_166 = arith.constant 0 : i32
    %1097 = arith.cmpi eq, %c5_i32_165, %c0_i32_166 : i32
    %c1_i32_167 = arith.constant 1 : i32
    %1098 = arith.select %1097, %c1_i32_167, %c5_i32_165 : i32
    %1099 = vector.broadcast %1098 : i32 to vector<14x128xi32>
    %1100 = arith.remsi %1096, %1099 : vector<14x128xi32>
    %c0_i32_168 = arith.constant 0 : i32
    %1101 = vector.broadcast %c0_i32_168 : i32 to vector<14x128xi32>
    %1102 = arith.cmpi ne, %1100, %1101 : vector<14x128xi32>
    %c0_i32_169 = arith.constant 0 : i32
    %1103 = vector.broadcast %c0_i32_169 : i32 to vector<14x128xi32>
    %1104 = arith.cmpi slt, %1100, %1103 : vector<14x128xi32>
    %c0_i32_170 = arith.constant 0 : i32
    %1105 = arith.cmpi slt, %1098, %c0_i32_170 : i32
    %1106 = vector.broadcast %1105 : i1 to vector<14x128xi1>
    %1107 = vector.broadcast %1106 : vector<14x128xi1> to vector<14x128xi1>
    %1108 = arith.xori %1104, %1107 : vector<14x128xi1>
    %1109 = arith.andi %1108, %1102 : vector<14x128xi1>
    %1110 = vector.broadcast %1098 : i32 to vector<14x128xi32>
    %1111 = arith.addi %1100, %1110 : vector<14x128xi32>
    %1112 = arith.select %1109, %1111, %1100 : vector<14x128xi1>, vector<14x128xi32>
    %1113 = vector.broadcast %1 : vector<1x128xi32> to vector<14x128xi32>
    %1114 = arith.subi %1112, %1113 : vector<14x128xi32>
    %c5_i32_171 = arith.constant 5 : i32
    %c0_i32_172 = arith.constant 0 : i32
    %1115 = arith.cmpi eq, %c5_i32_171, %c0_i32_172 : i32
    %c1_i32_173 = arith.constant 1 : i32
    %1116 = arith.select %1115, %c1_i32_173, %c5_i32_171 : i32
    %1117 = vector.broadcast %1116 : i32 to vector<14x128xi32>
    %1118 = arith.remsi %1114, %1117 : vector<14x128xi32>
    %c0_i32_174 = arith.constant 0 : i32
    %1119 = vector.broadcast %c0_i32_174 : i32 to vector<14x128xi32>
    %1120 = arith.cmpi ne, %1118, %1119 : vector<14x128xi32>
    %c0_i32_175 = arith.constant 0 : i32
    %1121 = vector.broadcast %c0_i32_175 : i32 to vector<14x128xi32>
    %1122 = arith.cmpi slt, %1118, %1121 : vector<14x128xi32>
    %c0_i32_176 = arith.constant 0 : i32
    %1123 = arith.cmpi slt, %1116, %c0_i32_176 : i32
    %1124 = vector.broadcast %1123 : i1 to vector<14x128xi1>
    %1125 = vector.broadcast %1124 : vector<14x128xi1> to vector<14x128xi1>
    %1126 = arith.xori %1122, %1125 : vector<14x128xi1>
    %1127 = arith.andi %1126, %1120 : vector<14x128xi1>
    %1128 = vector.broadcast %1116 : i32 to vector<14x128xi32>
    %1129 = arith.addi %1118, %1128 : vector<14x128xi32>
    %1130 = arith.select %1127, %1129, %1118 : vector<14x128xi1>, vector<14x128xi32>
    %cst_177 = arith.constant 0.000000e+00 : f32
    %1131 = vector.broadcast %cst_177 : f32 to vector<14x128xf32>
    %c0_i32_178 = arith.constant 0 : i32
    %1132 = vector.broadcast %c0_i32_178 : i32 to vector<14x128xi32>
    %1133 = arith.cmpi eq, %1130, %1132 : vector<14x128xi32>
    %c0_179 = arith.constant 0 : index
    %1134 = memref.load %arg9[%c0_179] : memref<5xf32, #tpu.memory_space<smem>>
    %1135 = vector.broadcast %1134 : f32 to vector<14x128xf32>
    %1136 = arith.select %1133, %1135, %1131 : vector<14x128xi1>, vector<14x128xf32>
    %c1_i32_180 = arith.constant 1 : i32
    %1137 = vector.broadcast %c1_i32_180 : i32 to vector<14x128xi32>
    %1138 = arith.cmpi eq, %1130, %1137 : vector<14x128xi32>
    %c1_181 = arith.constant 1 : index
    %1139 = memref.load %arg9[%c1_181] : memref<5xf32, #tpu.memory_space<smem>>
    %1140 = vector.broadcast %1139 : f32 to vector<14x128xf32>
    %1141 = arith.select %1138, %1140, %1136 : vector<14x128xi1>, vector<14x128xf32>
    %c2_i32_182 = arith.constant 2 : i32
    %1142 = vector.broadcast %c2_i32_182 : i32 to vector<14x128xi32>
    %1143 = arith.cmpi eq, %1130, %1142 : vector<14x128xi32>
    %c2_183 = arith.constant 2 : index
    %1144 = memref.load %arg9[%c2_183] : memref<5xf32, #tpu.memory_space<smem>>
    %1145 = vector.broadcast %1144 : f32 to vector<14x128xf32>
    %1146 = arith.select %1143, %1145, %1141 : vector<14x128xi1>, vector<14x128xf32>
    %c3_i32_184 = arith.constant 3 : i32
    %1147 = vector.broadcast %c3_i32_184 : i32 to vector<14x128xi32>
    %1148 = arith.cmpi eq, %1130, %1147 : vector<14x128xi32>
    %c3_185 = arith.constant 3 : index
    %1149 = memref.load %arg9[%c3_185] : memref<5xf32, #tpu.memory_space<smem>>
    %1150 = vector.broadcast %1149 : f32 to vector<14x128xf32>
    %1151 = arith.select %1148, %1150, %1146 : vector<14x128xi1>, vector<14x128xf32>
    %c4_i32_186 = arith.constant 4 : i32
    %1152 = vector.broadcast %c4_i32_186 : i32 to vector<14x128xi32>
    %1153 = arith.cmpi eq, %1130, %1152 : vector<14x128xi32>
    %c4_187 = arith.constant 4 : index
    %1154 = memref.load %arg9[%c4_187] : memref<5xf32, #tpu.memory_space<smem>>
    %1155 = vector.broadcast %1154 : f32 to vector<14x128xf32>
    %1156 = arith.select %1153, %1155, %1151 : vector<14x128xi1>, vector<14x128xf32>
    %1157 = vector.broadcast %1048 : vector<1x128xf32> to vector<14x128xf32>
    %1158 = arith.mulf %1157, %1156 : vector<14x128xf32>
    %1159 = arith.mulf %1158, %1095 : vector<14x128xf32>
    %c0_188 = arith.constant 0 : index
    %c0_189 = arith.constant 0 : index
    %1160 = vector.load %arg11[%c0_188, %c0_189] : memref<14x128xf32, #tpu.memory_space<vmem>>, vector<14x128xf32>
    tpu.vector_store %arg11[%c0_188, %c0_189], %1159 {strides = array<i32>} : memref<14x128xf32, #tpu.memory_space<vmem>>, vector<14x128xf32>,
    return
  }
  func.func @transform_0(%arg0: i32) -> (i32, i32) {
    %c0_i32 = arith.constant 0 : i32
    %c0_i32_0 = arith.constant 0 : i32
    return %c0_i32, %arg0 : i32, i32
  }
  func.func @transform_1(%arg0: i32) -> (i32, i32) {
    %c0_i32 = arith.constant 0 : i32
    %c0_i32_0 = arith.constant 0 : i32
    return %c0_i32, %arg0 : i32, i32
  }
  func.func @transform_2(%arg0: i32) -> (i32, i32) {
    %c0_i32 = arith.constant 0 : i32
    %c0_i32_0 = arith.constant 0 : i32
    %c0_i32_1 = arith.constant 0 : i32
    return %c0_i32, %c0_i32_0 : i32, i32
  }
  func.func @transform_3(%arg0: i32) -> (i32, i32) {
    %c0_i32 = arith.constant 0 : i32
    %c0_i32_0 = arith.constant 0 : i32
    %c0_i32_1 = arith.constant 0 : i32
    return %c0_i32, %c0_i32_0 : i32, i32
  }
  func.func @transform_4(%arg0: i32) -> (i32, i32) {
    %c0_i32 = arith.constant 0 : i32
    %c0_i32_0 = arith.constant 0 : i32
    %c0_i32_1 = arith.constant 0 : i32
    return %c0_i32, %c0_i32_0 : i32, i32
  }
  func.func @transform_5(%arg0: i32) -> (i32, i32) {
    %c0_i32 = arith.constant 0 : i32
    %c0_i32_0 = arith.constant 0 : i32
    %c0_i32_1 = arith.constant 0 : i32
    return %c0_i32, %c0_i32_0 : i32, i32
  }
  func.func @transform_6(%arg0: i32) -> (i32, i32) {
    %c0_i32 = arith.constant 0 : i32
    %c0_i32_0 = arith.constant 0 : i32
    %c0_i32_1 = arith.constant 0 : i32
    return %c0_i32, %c0_i32_0 : i32, i32
  }
  func.func @transform_7(%arg0: i32) -> (i32, i32) {
    %c0_i32 = arith.constant 0 : i32
    %c0_i32_0 = arith.constant 0 : i32
    %c0_i32_1 = arith.constant 0 : i32
    return %c0_i32, %c0_i32_0 : i32, i32
  }
  func.func @transform_8(%arg0: i32) -> i32 {
    %c0_i32 = arith.constant 0 : i32
    %c0_i32_0 = arith.constant 0 : i32
    return %c0_i32 : i32
  }
  func.func @transform_9(%arg0: i32) -> i32 {
    %c0_i32 = arith.constant 0 : i32
    %c0_i32_0 = arith.constant 0 : i32
    return %c0_i32 : i32
  }
  func.func @transform_10(%arg0: i32) -> (i32, i32) {
    %c0_i32 = arith.constant 0 : i32
    %c0_i32_0 = arith.constant 0 : i32
    return %c0_i32, %arg0 : i32, i32
  }
}

</mosaic_0001>

<llo_original>
// kernel: tpu_custom_call.1
$region0: #{tpu_custom_call.1}
  #allocation0 [shape = 'u32[]', space=smem, size = 0x4, offset = 0x4, fixed_abs, tag = 'smem constant byte address 0x4 - core index']
  #allocation1 [shape = 'u32[144,128]{1,0:T(1,128)}', space=vmem, size = 0x12000, scoped, tag = 'internal scratch']
  #allocation2 [shape = 'f32[1]{0:T(128)S(6)}', space=smem, size = 0x200, scoped, tag = 'scoped memory for tpu_custom_call.1']
  %s0 = inlined_call_operand.vmem [shape: f32[20,128], index: 0, kind: input, shape index: {}]
  %s1 = inlined_call_operand.vmem [shape: s32[1,128], index: 1, kind: input, shape index: {}]
  %s2 = inlined_call_operand.vmem [shape: f32[48,1], index: 2, kind: input, shape index: {}]
  %s3 = inlined_call_operand.vmem [shape: f32[48,16], index: 3, kind: input, shape index: {}]
  %s4 = inlined_call_operand.vmem [shape: f32[48,1], index: 4, kind: input, shape index: {}]
  %s5 = inlined_call_operand.vmem [shape: f32[48,1], index: 5, kind: input, shape index: {}]
  %s6 = inlined_call_operand.vmem [shape: f32[14,16], index: 6, kind: input, shape index: {}]
  %s7 = inlined_call_operand.vmem [shape: f32[14,1], index: 7, kind: input, shape index: {}]
  %s8 = inlined_call_operand.vmem [shape: f32[5], index: 8, kind: input, shape index: {}]
  %s9 = inlined_call_operand.<no memory space> [shape: f32[1], index: 9, kind: input, shape index: {}]
  %s10 = inlined_call_operand.hbm [shape: f32[14,128], index: 10, kind: output, shape index: {}]
  %s11 = sld [smem:[#allocation0]]
  $region54: #{tpu_custom_call.1} parent=0
    _
  %s13 = ssub.s32 1, %s11
  %s14 = scalar_select 0, %s13, %s11
  %15 = sst [smem:[#allocation2]] %s9
  $region1: #{tpu_custom_call.1} parent=0
    #allocation3 [shape = 'u8[512]{0}', space=smem, size = 0x200, scoped, tag = 'input window, operand 8, single buffered']
    #allocation4 [shape = 's32[1]{0}', space=sflag, size = 0x4, scoped, tag = 'scoped memory for tpu_custom_call.1']
    #allocation5 [shape = 's32[1]{0}', space=sflag, size = 0x4, scoped, tag = 'scoped memory for tpu_custom_call.1']
    #allocation6 [shape = 'u8[8192]{0}', space=vmem, size = 0x2000, scoped, tag = 'output window, operand 0, single buffered']
    %16 = vsyncpa [#allocation5], 0
    %17 = vsyncpa [#allocation4], 0
    // Predicated region
    $region2: #{tpu_custom_call.1} parent=1 // pred_check
      _
    $region3: #{tpu_custom_call.1} parent=1 // pred_check_branch
      %19 = sbr.rel (0) target = $region5
    $region4: #{tpu_custom_call.1} parent=1 // pred_region
      _
    $region5: #{tpu_custom_call.1} parent=1 // pred_fallthru
      _
    // Predicated region
    $region6: #{tpu_custom_call.1} parent=1 // pred_check
      _
    $region7: #{tpu_custom_call.1} parent=1 // pred_check_branch
      %21 = sbr.rel (0) target = $region9
    $region8: #{tpu_custom_call.1} parent=1 // pred_region
      _
    $region9: #{tpu_custom_call.1} parent=1 // pred_fallthru
      _
    // Predicated region
    $region10: #{tpu_custom_call.1} parent=1 // pred_check
      _
    $region11: #{tpu_custom_call.1} parent=1 // pred_check_branch
      %23 = sbr.rel (0) target = $region13
    $region12: #{tpu_custom_call.1} parent=1 // pred_region
      _
    $region13: #{tpu_custom_call.1} parent=1 // pred_fallthru
      _
    // Predicated region
    $region14: #{tpu_custom_call.1} parent=1 // pred_check
      _
    $region15: #{tpu_custom_call.1} parent=1 // pred_check_branch
      %25 = sbr.rel (0) target = $region17
    $region16: #{tpu_custom_call.1} parent=1 // pred_region
      _
    $region17: #{tpu_custom_call.1} parent=1 // pred_fallthru
      _
    // Predicated region
    $region18: #{tpu_custom_call.1} parent=1 // pred_check
      _
    $region19: #{tpu_custom_call.1} parent=1 // pred_check_branch
      %27 = sbr.rel (0) target = $region21
    $region20: #{tpu_custom_call.1} parent=1 // pred_region
      _
    $region21: #{tpu_custom_call.1} parent=1 // pred_fallthru
      _
    // Predicated region
    $region22: #{tpu_custom_call.1} parent=1 // pred_check
      _
    $region23: #{tpu_custom_call.1} parent=1 // pred_check_branch
      %29 = sbr.rel (0) target = $region25
    $region24: #{tpu_custom_call.1} parent=1 // pred_region
      _
    $region25: #{tpu_custom_call.1} parent=1 // pred_fallthru
      _
    // Predicated region
    $region26: #{tpu_custom_call.1} parent=1 // pred_check
      _
    $region27: #{tpu_custom_call.1} parent=1 // pred_check_branch
      %31 = sbr.rel (0) target = $region29
    $region28: #{tpu_custom_call.1} parent=1 // pred_region
      _
    $region29: #{tpu_custom_call.1} parent=1 // pred_fallthru
      _
    // Predicated region
    $region30: #{tpu_custom_call.1} parent=1 // pred_check
      _
    $region31: #{tpu_custom_call.1} parent=1 // pred_check_branch
      %33 = sbr.rel (0) target = $region33
    $region32: #{tpu_custom_call.1} parent=1 // pred_region
      _
    $region33: #{tpu_custom_call.1} parent=1 // pred_fallthru
      _
    // Predicated region
    $region34: #{tpu_custom_call.1} parent=1 // pred_check
      _
    $region35: #{tpu_custom_call.1} parent=1 // pred_check_branch
      %35 = sbr.rel (0) target = $region37
    $region36: #{tpu_custom_call.1} parent=1 // pred_region
      %s37 = ssub.s32 16, 16
      %38 = vsyncadd [#allocation5], %s37
      %s40 = sshll.u32 %s8, 4
      %s41 = int_to_ptr.vmem [resolvable:$true] %s40
      %43 = dma.vmem_to_smem %s41, 16, [#allocation3], [#allocation5]
    $region37: #{tpu_custom_call.1} parent=1 // pred_fallthru
      _
    // Predicated region
    $region38: #{tpu_custom_call.1} parent=1 // pred_check
      _
    $region39: #{tpu_custom_call.1} parent=1 // pred_check_branch
      %45 = sbr.rel (0) target = $region41
    $region40: #{tpu_custom_call.1} parent=1 // pred_region
      _
    $region41: #{tpu_custom_call.1} parent=1 // pred_fallthru
      _
    // Predicated region
    $region42: #{tpu_custom_call.1} parent=1 // pred_check
      _
    $region43: #{tpu_custom_call.1} parent=1 // pred_check_branch
      %47 = sbr.rel (0) target = $region45
    $region44: #{tpu_custom_call.1} parent=1 // pred_region
      %48 = dma.done [#allocation5], 16
    $region45: #{tpu_custom_call.1} parent=1 // pred_fallthru
      _
    %49 = sfence
    %s50 = sld [smem:[#allocation2]]
    %v51 = vld [vmem:[%s1] sm:$0x1]
    %v52 = vlaneseq
    %v53 = vshrl.u32 %v52, 7
    %vm54 = vcmp.lt.s32.totalorder %v53, 0
    %v55 = vsub.s32 0, %v53
    %v56 = vsel %vm54, %v55, %v53
    %v57 = vmul.u32.u64.compose %v56, 3435973837
    %v58 = vextract.low.u32 %v57
    %v59 = vextract.high.u32 %v57
    %v60 = vshrl.u32 %v59, 2
    %v61 = vmul.u32 %v60, 5
    %v62 = vsub.s32 %v56, %v61
    %v63 = vsub.s32 0, %v62
    %v64 = vsel %vm54, %v63, %v62
    %vm65 = vcmp.ne.s32.totalorder %v64, 0
    %vm66 = vcmp.lt.s32.totalorder %v64, 0
    %vm67 = vmand %vm66, %vm65
    %v68 = vadd.s32 %v64, 5
    %v69 = vsel %vm67, %v68, %v64
    %v70 = vlaneseq
    %v71 = vshrl.u32 %v70, 7
    %v72 = vsub.s32 0, %v71
    %v73 = vrot.slane %v51, %v72
    %v74 = vsub.s32 %v69, %v73
    %vm75 = vcmp.lt.s32.totalorder %v74, 0
    %v76 = vsub.s32 0, %v74
    %v77 = vsel %vm75, %v76, %v74
    %v78 = vmul.u32.u64.compose %v77, 3435973837
    %v79 = vextract.low.u32 %v78
    %v80 = vextract.high.u32 %v78
    %v81 = vshrl.u32 %v80, 2
    %v82 = vmul.u32 %v81, 5
    %v83 = vsub.s32 %v77, %v82
    %v84 = vsub.s32 0, %v83
    %v85 = vsel %vm75, %v84, %v83
    %vm86 = vcmp.ne.s32.totalorder %v85, 0
    %vm87 = vcmp.lt.s32.totalorder %v85, 0
    %vm88 = vmand %vm87, %vm86
    %v89 = vadd.s32 %v85, 5
    %v90 = vsel %vm88, %v89, %v85
    %vm91 = vcmp.eq.s32.totalorder %v90, 0
    %s92 = sld [smem:[#allocation3]]
    %v93 = vstv %s92
    %v94 = vsel %vm91, %v93, 0.0
    %vm95 = vcmp.eq.s32.totalorder %v90, 1
    %s96 = sld [smem:[#allocation3 + $0x1]]
    %v97 = vstv %s96
    %v98 = vsel %vm95, %v97, %v94
    %vm99 = vcmp.eq.s32.totalorder %v90, 2
    %s100 = sld [smem:[#allocation3 + $0x2]]
    %v101 = vstv %s100
    %v102 = vsel %vm99, %v101, %v98
    %vm103 = vcmp.eq.s32.totalorder %v90, 3
    %s104 = sld [smem:[#allocation3 + $0x3]]
    %v105 = vstv %s104
    %v106 = vsel %vm103, %v105, %v102
    %vm107 = vcmp.eq.s32.totalorder %v90, 4
    %s108 = sld [smem:[#allocation3 + $0x4]]
    %v109 = vstv %s108
    %v110 = vsel %vm107, %v109, %v106
    %v111 = vld [vmem:[%s3] sm:$0xff]
    %v112 = vld [vmem:[%s3 + $0x8] sm:$0xff]
    %v113 = vld [vmem:[%s3 + $0x10] sm:$0xff]
    %v114 = vld [vmem:[%s3 + $0x18] sm:$0xff]
    %v115 = vld [vmem:[%s3 + $0x20] sm:$0xff]
    %v116 = vld [vmem:[%s3 + $0x28] sm:$0xff]
    %v117 = vld [vmem:[%s2] sm:$0xff]
    %v118 = vld [vmem:[%s2 + $0x8] sm:$0xff]
    %v119 = vld [vmem:[%s2 + $0x10] sm:$0xff]
    %v120 = vld [vmem:[%s2 + $0x18] sm:$0xff]
    %v121 = vld [vmem:[%s2 + $0x20] sm:$0xff]
    %v122 = vld [vmem:[%s2 + $0x28] sm:$0xff]
    %v123 = vld [vmem:[%s4] sm:$0xff]
    %v124 = vld [vmem:[%s4 + $0x8] sm:$0xff]
    %v125 = vld [vmem:[%s5] sm:$0xff]
    %v126 = vld [vmem:[%s5 + $0x8] sm:$0xff]
    %v127 = vadd.f32 %v123, %v125
    %v128 = vadd.f32 %v124, %v126
    %v129 = vld [vmem:[%s4 + $0x10] sm:$0xff]
    %v130 = vld [vmem:[%s4 + $0x18] sm:$0xff]
    %v131 = vld [vmem:[%s5 + $0x10] sm:$0xff]
    %v132 = vld [vmem:[%s5 + $0x18] sm:$0xff]
    %v133 = vadd.f32 %v129, %v131
    %v134 = vadd.f32 %v130, %v132
    %v135 = vld [vmem:[%s4 + $0x20] sm:$0xff]
    %v136 = vld [vmem:[%s4 + $0x28] sm:$0xff]
    %v137 = vld [vmem:[%s5 + $0x20] sm:$0xff]
    %v138 = vld [vmem:[%s5 + $0x28] sm:$0xff]
    %v139 = vld [vmem:[%s0] sm:$0x1]
    %v140 = vrcp.pop %v110
    %v141 = vmul.f32 %v139, %v140
    %v142 = vrcp.pop %v139
    %v143 = vmul.f32 %v141, %v142
    %vm144 = vcmask 130048
    %v146 = vsel %vm144, %v111, 0
    %v149 = vsel %vm144, %v112, 0
    %v152 = vsel %vm144, %v113, 0
    %v155 = vsel %vm144, %v114, 0
    %v158 = vsel %vm144, %v115, 0
    %v161 = vsel %vm144, %v116, 0
    %163 = vmatprep.subr.mxu0 0.0
    %164 = vmatpush1.msra.mxu0 0.0
    %165 = vmatprep.subr.mxu0 0.0
    %166 = vmatpush1.msra.mxu0 0.0
    %167 = vmatprep.subr.mxu0 0.0
    %168 = vmatpush1.msra.mxu0 0.0
    %169 = vmatprep.subr.mxu0 0.0
    %170 = vmatpush1.msra.mxu0 0.0
    %171 = vmatprep.subr.mxu0 0.0
    %172 = vmatpush1.msra.mxu0 0.0
    %173 = vmatprep.subr.mxu0 0.0
    %174 = vmatpush1.msra.mxu0 0.0
    %175 = vmatprep.subr.mxu0 0.0
    %176 = vmatpush1.msra.mxu0 0.0
    %177 = vmatprep.subr.mxu0 0.0
    %178 = vmatpush1.msra.mxu0 0.0
    %179 = vmatprep.subr.mxu0 0.0
    %180 = vmatpush1.msra.mxu0 0.0
    %181 = vmatprep.subr.mxu0 0.0
    %182 = vmatpush1.msra.mxu0 0.0
    %183 = vmatprep.subr.mxu0 0.0
    %184 = vmatpush1.msra.mxu0 0.0
    %185 = vmatprep.subr.mxu0 0.0
    %186 = vmatpush1.msra.mxu0 0.0
    %187 = vmatprep.subr.mxu0 0.0
    %188 = vmatpush1.msra.mxu0 0.0
    %189 = vmatprep.subr.mxu0 0.0
    %190 = vmatpush1.msra.mxu0 0.0
    %191 = vmatprep.subr.mxu0 0.0
    %192 = vmatpush1.msra.mxu0 0.0
    %193 = vmatprep.subr.mxu0 0.0
    %194 = vmatpush1.msra.mxu0 0.0
    %195 = vmatprep.subr.mxu0 0.0
    %196 = vmatpush1.msra.mxu0 0.0
    %197 = vmatprep.subr.mxu0 0.0
    %198 = vmatpush1.msra.mxu0 0.0
    %199 = vmatprep.subr.mxu0 0.0
    %200 = vmatpush1.msra.mxu0 0.0
    %201 = vmatprep.subr.mxu0 0.0
    %202 = vmatpush1.msra.mxu0 0.0
    %203 = vmatprep.subr.mxu0 0.0
    %204 = vmatpush1.msra.mxu0 0.0
    %205 = vmatprep.subr.mxu0 0.0
    %206 = vmatpush1.msra.mxu0 0.0
    %207 = vmatprep.subr.mxu0 0.0
    %208 = vmatpush1.msra.mxu0 0.0
    %209 = vmatprep.subr.mxu0 0.0
    %210 = vmatpush1.msra.mxu0 0.0
    %211 = vmatprep.subr.mxu0 0.0
    %212 = vmatpush1.msra.mxu0 0.0
    %213 = vmatprep.subr.mxu0 0.0
    %214 = vmatpush1.msra.mxu0 0.0
    %215 = vmatprep.subr.mxu0 0.0
    %216 = vmatpush1.msra.mxu0 0.0
    %217 = vmatprep.subr.mxu0 0.0
    %218 = vmatpush1.msra.mxu0 0.0
    %219 = vmatprep.subr.mxu0 0.0
    %220 = vmatpush1.msra.mxu0 0.0
    %221 = vmatprep.subr.mxu0 0.0
    %222 = vmatpush1.msra.mxu0 0.0
    %223 = vmatprep.subr.mxu0 0.0
    %224 = vmatpush1.msra.mxu0 0.0
    %225 = vmatprep.subr.mxu0 0.0
    %226 = vmatpush1.msra.mxu0 0.0
    %227 = vmatprep.mubr.f32.mxu0 0.0
    %228 = vmatmul.mubr.f32.gmra.mrb[0].mxu0 %v146
    %v229 = vpop.f32.mrb[0].mxu0
    %v230 = vadd.f32 0.0, %v229
    %v231 = vpop.f32.mrb[0].mxu0
    %232 = vmatprep.mubr.f32.mxu0 0.0
    %233 = vmatmul.mubr.f32.gmra.mrb[0].mxu0 %v149
    %v234 = vpop.f32.mrb[0].mxu0
    %v235 = vadd.f32 0.0, %v234
    %v236 = vpop.f32.mrb[0].mxu0
    %237 = vmatprep.mubr.f32.mxu0 0.0
    %238 = vmatmul.mubr.f32.gmra.mrb[0].mxu0 %v152
    %v239 = vpop.f32.mrb[0].mxu0
    %v240 = vadd.f32 0.0, %v239
    %v241 = vpop.f32.mrb[0].mxu0
    %242 = vmatprep.mubr.f32.mxu0 0.0
    %243 = vmatmul.mubr.f32.gmra.mrb[0].mxu0 %v155
    %v244 = vpop.f32.mrb[0].mxu0
    %v245 = vadd.f32 0.0, %v244
    %v246 = vpop.f32.mrb[0].mxu0
    %247 = vmatprep.mubr.f32.mxu0 0.0
    %248 = vmatmul.mubr.f32.gmra.mrb[0].mxu0 %v158
    %v249 = vpop.f32.mrb[0].mxu0
    %v250 = vadd.f32 0.0, %v249
    %v251 = vpop.f32.mrb[0].mxu0
    %252 = vmatprep.mubr.f32.mxu0 0.0
    %253 = vmatmul.mubr.f32.gmra.mrb[0].mxu0 %v161
    %v254 = vpop.f32.mrb[0].mxu0
    %v255 = vadd.f32 0.0, %v254
    %v256 = vpop.f32.mrb[0].mxu0
    %257 = vdwg.mxu0
    %259 = vset.pattern.permute.xlu0 0
    %260 = vperm.xlu0 %259, %v117
    %v261 = vpop.permute.xlu0 %260
    %264 = vset.pattern.permute.xlu0 0
    %265 = vperm.xlu0 %264, %v118
    %v266 = vpop.permute.xlu0 %265
    %v268 = vlaneseq
    %v269 = vshrl.u32 %v268, 7
    %v270 = vsub.s32 0, %v269
    %v271 = vrot.slane %v143, %v270
    %v272 = vmul.f32 %v261, %v271
    %v273 = vmul.f32 %v266, %v271
    %275 = vset.pattern.permute.xlu0 0
    %276 = vperm.xlu0 %275, %v127
    %v277 = vpop.permute.xlu0 %276
    %280 = vset.pattern.permute.xlu0 0
    %281 = vperm.xlu0 %280, %v128
    %v282 = vpop.permute.xlu0 %281
    %v284 = vadd.f32 %v272, %v277
    %v285 = vadd.f32 %v273, %v282
    %v286 = vadd.f32 %v284, %v230
    %v287 = vadd.f32 %v285, %v235
    %v288 = vxor.u32 %v286, 2147483648
    %v289 = vxor.u32 %v287, 2147483648
    %v290 = vmul.f32 %v288, 1.442695
    %v291 = vpow.pop %v290
    %v292 = vmul.f32 %v289, 1.442695
    %v293 = vpow.pop %v292
    %v294 = vadd.f32 %v291, 1.0
    %v295 = vadd.f32 %v293, 1.0
    %v296 = vrcp.pop %v294
    %v297 = vmul.f32 1.0, %v296
    %v298 = vrcp.pop %v295
    %v299 = vmul.f32 1.0, %v298
    %301 = vset.pattern.permute.xlu0 0
    %302 = vperm.xlu0 %301, %v119
    %v303 = vpop.permute.xlu0 %302
    %306 = vset.pattern.permute.xlu0 0
    %307 = vperm.xlu0 %306, %v120
    %v308 = vpop.permute.xlu0 %307
    %v310 = vmul.f32 %v303, %v271
    %v311 = vmul.f32 %v308, %v271
    %313 = vset.pattern.permute.xlu0 0
    %314 = vperm.xlu0 %313, %v133
    %v315 = vpop.permute.xlu0 %314
    %318 = vset.pattern.permute.xlu0 0
    %319 = vperm.xlu0 %318, %v134
    %v320 = vpop.permute.xlu0 %319
    %v322 = vadd.f32 %v310, %v315
    %v323 = vadd.f32 %v311, %v320
    %v324 = vadd.f32 %v322, %v240
    %v325 = vadd.f32 %v323, %v245
    %v326 = vxor.u32 %v324, 2147483648
    %v327 = vxor.u32 %v325, 2147483648
    %v328 = vmul.f32 %v326, 1.442695
    %v329 = vpow.pop %v328
    %v330 = vmul.f32 %v327, 1.442695
    %v331 = vpow.pop %v330
    %v332 = vadd.f32 %v329, 1.0
    %v333 = vadd.f32 %v331, 1.0
    %v334 = vrcp.pop %v332
    %v335 = vmul.f32 1.0, %v334
    %v336 = vrcp.pop %v333
    %v337 = vmul.f32 1.0, %v336
    %339 = vset.pattern.permute.xlu0 0
    %340 = vperm.xlu0 %339, %v121
    %v341 = vpop.permute.xlu0 %340
    %344 = vset.pattern.permute.xlu0 0
    %345 = vperm.xlu0 %344, %v122
    %v346 = vpop.permute.xlu0 %345
    %v348 = vmul.f32 %v341, %v271
    %v349 = vmul.f32 %v346, %v271
    %351 = vset.pattern.permute.xlu0 0
    %352 = vperm.xlu0 %351, %v135
    %v353 = vpop.permute.xlu0 %352
    %356 = vset.pattern.permute.xlu0 0
    %357 = vperm.xlu0 %356, %v136
    %v358 = vpop.permute.xlu0 %357
    %v360 = vadd.f32 %v348, %v353
    %v361 = vadd.f32 %v349, %v358
    %363 = vset.pattern.permute.xlu0 0
    %364 = vperm.xlu0 %363, %v137
    %v365 = vpop.permute.xlu0 %364
    %368 = vset.pattern.permute.xlu0 0
    %369 = vperm.xlu0 %368, %v138
    %v370 = vpop.permute.xlu0 %369
    %v372 = vadd.f32 %v250, %v365
    %v373 = vadd.f32 %v255, %v370
    %v374 = vmul.f32 %v297, %v372
    %v375 = vmul.f32 %v299, %v373
    %v376 = vadd.f32 %v360, %v374
    %v377 = vadd.f32 %v361, %v375
    %v378 = vtanh.pop %v376
    %v379 = vtanh.pop %v377
    %v380 = vsub.f32 1.0, %v335
    %v381 = vsub.f32 1.0, %v337
    %v382 = vmul.f32 %v380, %v378
    %v383 = vmul.f32 %v381, %v379
    %v384 = vmul.f32 %v335, 0.0
    %v385 = vmul.f32 %v337, 0.0
    %v386 = vadd.f32 %v382, %v384
    %v387 = vadd.f32 %v383, %v385
    %v388 = vld [vmem:[%s0 + $0x1] sm:$0x1]
    %v390 = vrot.slane %v110, 1
    %v392 = vrcp.pop %v390
    %v393 = vmul.f32 %v388, %v392
    %v394 = vstv %s50
    %v395 = vmul.f32 %v394, %v393
    %s396 = ssub.f32 1.0, %s50
    %v397 = vstv %s396
    %v398 = vmul.f32 %v397, %v139
    %v399 = vadd.f32 %v395, %v398
    %v400 = vrcp.pop %v399
    %v401 = vmul.f32 %v393, %v400
    %402 = vmatprep.subr.mxu0 0.0
    %403 = vmatpush1.msra.mxu0 %v386
    %404 = vmatprep.subr.mxu0 0.0
    %405 = vmatpush1.msra.mxu0 %v387
    %406 = vmatprep.subr.mxu0 0.0
    %407 = vmatpush1.msra.mxu0 0.0
    %408 = vmatprep.subr.mxu0 0.0
    %409 = vmatpush1.msra.mxu0 0.0
    %410 = vmatprep.subr.mxu0 0.0
    %411 = vmatpush1.msra.mxu0 0.0
    %412 = vmatprep.subr.mxu0 0.0
    %413 = vmatpush1.msra.mxu0 0.0
    %414 = vmatprep.subr.mxu0 0.0
    %415 = vmatpush1.msra.mxu0 0.0
    %416 = vmatprep.subr.mxu0 0.0
    %417 = vmatpush1.msra.mxu0 0.0
    %418 = vmatprep.subr.mxu0 0.0
    %419 = vmatpush1.msra.mxu0 0.0
    %420 = vmatprep.subr.mxu0 0.0
    %421 = vmatpush1.msra.mxu0 0.0
    %422 = vmatprep.subr.mxu0 0.0
    %423 = vmatpush1.msra.mxu0 0.0
    %424 = vmatprep.subr.mxu0 0.0
    %425 = vmatpush1.msra.mxu0 0.0
    %426 = vmatprep.subr.mxu0 0.0
    %427 = vmatpush1.msra.mxu0 0.0
    %428 = vmatprep.subr.mxu0 0.0
    %429 = vmatpush1.msra.mxu0 0.0
    %430 = vmatprep.subr.mxu0 0.0
    %431 = vmatpush1.msra.mxu0 0.0
    %432 = vmatprep.subr.mxu0 0.0
    %433 = vmatpush1.msra.mxu0 0.0
    %434 = vmatprep.subr.mxu0 0.0
    %435 = vmatpush1.msra.mxu0 0.0
    %436 = vmatprep.subr.mxu0 0.0
    %437 = vmatpush1.msra.mxu0 0.0
    %438 = vmatprep.subr.mxu0 0.0
    %439 = vmatpush1.msra.mxu0 0.0
    %440 = vmatprep.subr.mxu0 0.0
    %441 = vmatpush1.msra.mxu0 0.0
    %442 = vmatprep.subr.mxu0 0.0
    %443 = vmatpush1.msra.mxu0 0.0
    %444 = vmatprep.subr.mxu0 0.0
    %445 = vmatpush1.msra.mxu0 0.0
    %446 = vmatprep.subr.mxu0 0.0
    %447 = vmatpush1.msra.mxu0 0.0
    %448 = vmatprep.subr.mxu0 0.0
    %449 = vmatpush1.msra.mxu0 0.0
    %450 = vmatprep.subr.mxu0 0.0
    %451 = vmatpush1.msra.mxu0 0.0
    %452 = vmatprep.subr.mxu0 0.0
    %453 = vmatpush1.msra.mxu0 0.0
    %454 = vmatprep.subr.mxu0 0.0
    %455 = vmatpush1.msra.mxu0 0.0
    %456 = vmatprep.subr.mxu0 0.0
    %457 = vmatpush1.msra.mxu0 0.0
    %458 = vmatprep.subr.mxu0 0.0
    %459 = vmatpush1.msra.mxu0 0.0
    %460 = vmatprep.subr.mxu0 0.0
    %461 = vmatpush1.msra.mxu0 0.0
    %462 = vmatprep.subr.mxu0 0.0
    %463 = vmatpush1.msra.mxu0 0.0
    %464 = vmatprep.subr.mxu0 0.0
    %465 = vmatpush1.msra.mxu0 0.0
    %466 = vmatprep.mubr.f32.mxu0 0.0
    %467 = vmatmul.mubr.f32.gmra.mrb[0].mxu0 %v146
    %v468 = vpop.f32.mrb[0].mxu0
    %v469 = vadd.f32 0.0, %v468
    %v470 = vpop.f32.mrb[0].mxu0
    %471 = vmatprep.mubr.f32.mxu0 0.0
    %472 = vmatmul.mubr.f32.gmra.mrb[0].mxu0 %v149
    %v473 = vpop.f32.mrb[0].mxu0
    %v474 = vadd.f32 0.0, %v473
    %v475 = vpop.f32.mrb[0].mxu0
    %476 = vmatprep.mubr.f32.mxu0 0.0
    %477 = vmatmul.mubr.f32.gmra.mrb[0].mxu0 %v152
    %v478 = vpop.f32.mrb[0].mxu0
    %v479 = vadd.f32 0.0, %v478
    %v480 = vpop.f32.mrb[0].mxu0
    %481 = vmatprep.mubr.f32.mxu0 0.0
    %482 = vmatmul.mubr.f32.gmra.mrb[0].mxu0 %v155
    %v483 = vpop.f32.mrb[0].mxu0
    %v484 = vadd.f32 0.0, %v483
    %v485 = vpop.f32.mrb[0].mxu0
    %486 = vmatprep.mubr.f32.mxu0 0.0
    %487 = vmatmul.mubr.f32.gmra.mrb[0].mxu0 %v158
    %v488 = vpop.f32.mrb[0].mxu0
    %v489 = vadd.f32 0.0, %v488
    %v490 = vpop.f32.mrb[0].mxu0
    %491 = vmatprep.mubr.f32.mxu0 0.0
    %492 = vmatmul.mubr.f32.gmra.mrb[0].mxu0 %v161
    %v493 = vpop.f32.mrb[0].mxu0
    %v494 = vadd.f32 0.0, %v493
    %v495 = vpop.f32.mrb[0].mxu0
    %496 = vdwg.mxu0
    %v497 = vlaneseq
    %v498 = vshrl.u32 %v497, 7
    %v499 = vsub.s32 0, %v498
    %v500 = vrot.slane %v401, %v499
    %v501 = vmul.f32 %v261, %v500
    %v502 = vmul.f32 %v266, %v500
    %v503 = vadd.f32 %v501, %v277
    %v504 = vadd.f32 %v502, %v282
    %v505 = vadd.f32 %v503, %v469
    %v506 = vadd.f32 %v504, %v474
    %v507 = vxor.u32 %v505, 2147483648
    %v508 = vxor.u32 %v506, 2147483648
    %v509 = vmul.f32 %v507, 1.442695
    %v510 = vpow.pop %v509
    %v511 = vmul.f32 %v508, 1.442695
    %v512 = vpow.pop %v511
    %v513 = vadd.f32 %v510, 1.0
    %v514 = vadd.f32 %v512, 1.0
    %v515 = vrcp.pop %v513
    %v516 = vmul.f32 1.0, %v515
    %v517 = vrcp.pop %v514
    %v518 = vmul.f32 1.0, %v517
    %v519 = vmul.f32 %v303, %v500
    %v520 = vmul.f32 %v308, %v500
    %v521 = vadd.f32 %v519, %v315
    %v522 = vadd.f32 %v520, %v320
    %v523 = vadd.f32 %v521, %v479
    %v524 = vadd.f32 %v522, %v484
    %v525 = vxor.u32 %v523, 2147483648
    %v526 = vxor.u32 %v524, 2147483648
    %v527 = vmul.f32 %v525, 1.442695
    %v528 = vpow.pop %v527
    %v529 = vmul.f32 %v526, 1.442695
    %v530 = vpow.pop %v529
    %v531 = vadd.f32 %v528, 1.0
    %v532 = vadd.f32 %v530, 1.0
    %v533 = vrcp.pop %v531
    %v534 = vmul.f32 1.0, %v533
    %v535 = vrcp.pop %v532
    %v536 = vmul.f32 1.0, %v535
    %v537 = vmul.f32 %v341, %v500
    %v538 = vmul.f32 %v346, %v500
    %v539 = vadd.f32 %v537, %v353
    %v540 = vadd.f32 %v538, %v358
    %v541 = vadd.f32 %v489, %v365
    %v542 = vadd.f32 %v494, %v370
    %v543 = vmul.f32 %v516, %v541
    %v544 = vmul.f32 %v518, %v542
    %v545 = vadd.f32 %v539, %v543
    %v546 = vadd.f32 %v540, %v544
    %v547 = vtanh.pop %v545
    %v548 = vtanh.pop %v546
    %v549 = vsub.f32 1.0, %v534
    %v550 = vsub.f32 1.0, %v536
    %v551 = vmul.f32 %v549, %v547
    %v552 = vmul.f32 %v550, %v548
    %v553 = vmul.f32 %v534, %v386
    %v554 = vmul.f32 %v536, %v387
    %v555 = vadd.f32 %v551, %v553
    %v556 = vadd.f32 %v552, %v554
    %v557 = vld [vmem:[%s0 + $0x2] sm:$0x1]
    %v558 = vrot.slane %v110, 2
    %v560 = vrcp.pop %v558
    %v561 = vmul.f32 %v557, %v560
    %v562 = vmul.f32 %v394, %v561
    %v563 = vmul.f32 %v397, %v399
    %v564 = vadd.f32 %v562, %v563
    %v565 = vrcp.pop %v564
    %v566 = vmul.f32 %v561, %v565
    %567 = vmatprep.subr.mxu0 0.0
    %568 = vmatpush1.msra.mxu0 %v555
    %569 = vmatprep.subr.mxu0 0.0
    %570 = vmatpush1.msra.mxu0 %v556
    %571 = vmatprep.subr.mxu0 0.0
    %572 = vmatpush1.msra.mxu0 0.0
    %573 = vmatprep.subr.mxu0 0.0
    %574 = vmatpush1.msra.mxu0 0.0
    %575 = vmatprep.subr.mxu0 0.0
    %576 = vmatpush1.msra.mxu0 0.0
    %577 = vmatprep.subr.mxu0 0.0
    %578 = vmatpush1.msra.mxu0 0.0
    %579 = vmatprep.subr.mxu0 0.0
    %580 = vmatpush1.msra.mxu0 0.0
    %581 = vmatprep.subr.mxu0 0.0
    %582 = vmatpush1.msra.mxu0 0.0
    %583 = vmatprep.subr.mxu0 0.0
    %584 = vmatpush1.msra.mxu0 0.0
    %585 = vmatprep.subr.mxu0 0.0
    %586 = vmatpush1.msra.mxu0 0.0
    %587 = vmatprep.subr.mxu0 0.0
    %588 = vmatpush1.msra.mxu0 0.0
    %589 = vmatprep.subr.mxu0 0.0
    %590 = vmatpush1.msra.mxu0 0.0
    %591 = vmatprep.subr.mxu0 0.0
    %592 = vmatpush1.msra.mxu0 0.0
    %593 = vmatprep.subr.mxu0 0.0
    %594 = vmatpush1.msra.mxu0 0.0
    %595 = vmatprep.subr.mxu0 0.0
    %596 = vmatpush1.msra.mxu0 0.0
    %597 = vmatprep.subr.mxu0 0.0
    %598 = vmatpush1.msra.mxu0 0.0
    %599 = vmatprep.subr.mxu0 0.0
    %600 = vmatpush1.msra.mxu0 0.0
    %601 = vmatprep.subr.mxu0 0.0
    %602 = vmatpush1.msra.mxu0 0.0
    %603 = vmatprep.subr.mxu0 0.0
    %604 = vmatpush1.msra.mxu0 0.0
    %605 = vmatprep.subr.mxu0 0.0
    %606 = vmatpush1.msra.mxu0 0.0
    %607 = vmatprep.subr.mxu0 0.0
    %608 = vmatpush1.msra.mxu0 0.0
    %609 = vmatprep.subr.mxu0 0.0
    %610 = vmatpush1.msra.mxu0 0.0
    %611 = vmatprep.subr.mxu0 0.0
    %612 = vmatpush1.msra.mxu0 0.0
    %613 = vmatprep.subr.mxu0 0.0
    %614 = vmatpush1.msra.mxu0 0.0
    %615 = vmatprep.subr.mxu0 0.0
    %616 = vmatpush1.msra.mxu0 0.0
    %617 = vmatprep.subr.mxu0 0.0
    %618 = vmatpush1.msra.mxu0 0.0
    %619 = vmatprep.subr.mxu0 0.0
    %620 = vmatpush1.msra.mxu0 0.0
    %621 = vmatprep.subr.mxu0 0.0
    %622 = vmatpush1.msra.mxu0 0.0
    %623 = vmatprep.subr.mxu0 0.0
    %624 = vmatpush1.msra.mxu0 0.0
    %625 = vmatprep.subr.mxu0 0.0
    %626 = vmatpush1.msra.mxu0 0.0
    %627 = vmatprep.subr.mxu0 0.0
    %628 = vmatpush1.msra.mxu0 0.0
    %629 = vmatprep.subr.mxu0 0.0
    %630 = vmatpush1.msra.mxu0 0.0
    %631 = vmatprep.mubr.f32.mxu0 0.0
    %632 = vmatmul.mubr.f32.gmra.mrb[0].mxu0 %v146
    %v633 = vpop.f32.mrb[0].mxu0
    %v634 = vadd.f32 0.0, %v633
    %v635 = vpop.f32.mrb[0].mxu0
    %636 = vmatprep.mubr.f32.mxu0 0.0
    %637 = vmatmul.mubr.f32.gmra.mrb[0].mxu0 %v149
    %v638 = vpop.f32.mrb[0].mxu0
    %v639 = vadd.f32 0.0, %v638
    %v640 = vpop.f32.mrb[0].mxu0
    %641 = vmatprep.mubr.f32.mxu0 0.0
    %642 = vmatmul.mubr.f32.gmra.mrb[0].mxu0 %v152
    %v643 = vpop.f32.mrb[0].mxu0
    %v644 = vadd.f32 0.0, %v643
    %v645 = vpop.f32.mrb[0].mxu0
    %646 = vmatprep.mubr.f32.mxu0 0.0
    %647 = vmatmul.mubr.f32.gmra.mrb[0].mxu0 %v155
    %v648 = vpop.f32.mrb[0].mxu0
    %v649 = vadd.f32 0.0, %v648
    %v650 = vpop.f32.mrb[0].mxu0
    %651 = vmatprep.mubr.f32.mxu0 0.0
    %652 = vmatmul.mubr.f32.gmra.mrb[0].mxu0 %v158
    %v653 = vpop.f32.mrb[0].mxu0
    %v654 = vadd.f32 0.0, %v653
    %v655 = vpop.f32.mrb[0].mxu0
    %656 = vmatprep.mubr.f32.mxu0 0.0
    %657 = vmatmul.mubr.f32.gmra.mrb[0].mxu0 %v161
    %v658 = vpop.f32.mrb[0].mxu0
    %v659 = vadd.f32 0.0, %v658
    %v660 = vpop.f32.mrb[0].mxu0
    %661 = vdwg.mxu0
    %v662 = vlaneseq
    %v663 = vshrl.u32 %v662, 7
    %v664 = vsub.s32 0, %v663
    %v665 = vrot.slane %v566, %v664
    %v666 = vmul.f32 %v261, %v665
    %v667 = vmul.f32 %v266, %v665
    %v668 = vadd.f32 %v666, %v277
    %v669 = vadd.f32 %v667, %v282
    %v670 = vadd.f32 %v668, %v634
    %v671 = vadd.f32 %v669, %v639
    %v672 = vxor.u32 %v670, 2147483648
    %v673 = vxor.u32 %v671, 2147483648
    %v674 = vmul.f32 %v672, 1.442695
    %v675 = vpow.pop %v674
    %v676 = vmul.f32 %v673, 1.442695
    %v677 = vpow.pop %v676
    %v678 = vadd.f32 %v675, 1.0
    %v679 = vadd.f32 %v677, 1.0
    %v680 = vrcp.pop %v678
    %v681 = vmul.f32 1.0, %v680
    %v682 = vrcp.pop %v679
    %v683 = vmul.f32 1.0, %v682
    %v684 = vmul.f32 %v303, %v665
    %v685 = vmul.f32 %v308, %v665
    %v686 = vadd.f32 %v684, %v315
    %v687 = vadd.f32 %v685, %v320
    %v688 = vadd.f32 %v686, %v644
    %v689 = vadd.f32 %v687, %v649
    %v690 = vxor.u32 %v688, 2147483648
    %v691 = vxor.u32 %v689, 2147483648
    %v692 = vmul.f32 %v690, 1.442695
    %v693 = vpow.pop %v692
    %v694 = vmul.f32 %v691, 1.442695
    %v695 = vpow.pop %v694
    %v696 = vadd.f32 %v693, 1.0
    %v697 = vadd.f32 %v695, 1.0
    %v698 = vrcp.pop %v696
    %v699 = vmul.f32 1.0, %v698
    %v700 = vrcp.pop %v697
    %v701 = vmul.f32 1.0, %v700
    %v702 = vmul.f32 %v341, %v665
    %v703 = vmul.f32 %v346, %v665
    %v704 = vadd.f32 %v702, %v353
    %v705 = vadd.f32 %v703, %v358
    %v706 = vadd.f32 %v654, %v365
    %v707 = vadd.f32 %v659, %v370
    %v708 = vmul.f32 %v681, %v706
    %v709 = vmul.f32 %v683, %v707
    %v710 = vadd.f32 %v704, %v708
    %v711 = vadd.f32 %v705, %v709
    %v712 = vtanh.pop %v710
    %v713 = vtanh.pop %v711
    %v714 = vsub.f32 1.0, %v699
    %v715 = vsub.f32 1.0, %v701
    %v716 = vmul.f32 %v714, %v712
    %v717 = vmul.f32 %v715, %v713
    %v718 = vmul.f32 %v699, %v555
    %v719 = vmul.f32 %v701, %v556
    %v720 = vadd.f32 %v716, %v718
    %v721 = vadd.f32 %v717, %v719
    %v722 = vld [vmem:[%s0 + $0x3] sm:$0x1]
    %v723 = vrot.slane %v110, 3
    %v725 = vrcp.pop %v723
    %v726 = vmul.f32 %v722, %v725
    %v727 = vmul.f32 %v394, %v726
    %v728 = vmul.f32 %v397, %v564
    %v729 = vadd.f32 %v727, %v728
    %v730 = vrcp.pop %v729
    %v731 = vmul.f32 %v726, %v730
    %732 = vmatprep.subr.mxu0 0.0
    %733 = vmatpush1.msra.mxu0 %v720
    %734 = vmatprep.subr.mxu0 0.0
    %735 = vmatpush1.msra.mxu0 %v721
    %736 = vmatprep.subr.mxu0 0.0
    %737 = vmatpush1.msra.mxu0 0.0
    %738 = vmatprep.subr.mxu0 0.0
    %739 = vmatpush1.msra.mxu0 0.0
    %740 = vmatprep.subr.mxu0 0.0
    %741 = vmatpush1.msra.mxu0 0.0
    %742 = vmatprep.subr.mxu0 0.0
    %743 = vmatpush1.msra.mxu0 0.0
    %744 = vmatprep.subr.mxu0 0.0
    %745 = vmatpush1.msra.mxu0 0.0
    %746 = vmatprep.subr.mxu0 0.0
    %747 = vmatpush1.msra.mxu0 0.0
    %748 = vmatprep.subr.mxu0 0.0
    %749 = vmatpush1.msra.mxu0 0.0
    %750 = vmatprep.subr.mxu0 0.0
    %751 = vmatpush1.msra.mxu0 0.0
    %752 = vmatprep.subr.mxu0 0.0
    %753 = vmatpush1.msra.mxu0 0.0
    %754 = vmatprep.subr.mxu0 0.0
    %755 = vmatpush1.msra.mxu0 0.0
    %756 = vmatprep.subr.mxu0 0.0
    %757 = vmatpush1.msra.mxu0 0.0
    %758 = vmatprep.subr.mxu0 0.0
    %759 = vmatpush1.msra.mxu0 0.0
    %760 = vmatprep.subr.mxu0 0.0
    %761 = vmatpush1.msra.mxu0 0.0
    %762 = vmatprep.subr.mxu0 0.0
    %763 = vmatpush1.msra.mxu0 0.0
    %764 = vmatprep.subr.mxu0 0.0
    %765 = vmatpush1.msra.mxu0 0.0
    %766 = vmatprep.subr.mxu0 0.0
    %767 = vmatpush1.msra.mxu0 0.0
    %768 = vmatprep.subr.mxu0 0.0
    %769 = vmatpush1.msra.mxu0 0.0
    %770 = vmatprep.subr.mxu0 0.0
    %771 = vmatpush1.msra.mxu0 0.0
    %772 = vmatprep.subr.mxu0 0.0
    %773 = vmatpush1.msra.mxu0 0.0
    %774 = vmatprep.subr.mxu0 0.0
    %775 = vmatpush1.msra.mxu0 0.0
    %776 = vmatprep.subr.mxu0 0.0
    %777 = vmatpush1.msra.mxu0 0.0
    %778 = vmatprep.subr.mxu0 0.0
    %779 = vmatpush1.msra.mxu0 0.0
    %780 = vmatprep.subr.mxu0 0.0
    %781 = vmatpush1.msra.mxu0 0.0
    %782 = vmatprep.subr.mxu0 0.0
    %783 = vmatpush1.msra.mxu0 0.0
    %784 = vmatprep.subr.mxu0 0.0
    %785 = vmatpush1.msra.mxu0 0.0
    %786 = vmatprep.subr.mxu0 0.0
    %787 = vmatpush1.msra.mxu0 0.0
    %788 = vmatprep.subr.mxu0 0.0
    %789 = vmatpush1.msra.mxu0 0.0
    %790 = vmatprep.subr.mxu0 0.0
    %791 = vmatpush1.msra.mxu0 0.0
    %792 = vmatprep.subr.mxu0 0.0
    %793 = vmatpush1.msra.mxu0 0.0
    %794 = vmatprep.subr.mxu0 0.0
    %795 = vmatpush1.msra.mxu0 0.0
    %796 = vmatprep.mubr.f32.mxu0 0.0
    %797 = vmatmul.mubr.f32.gmra.mrb[0].mxu0 %v146
    %v798 = vpop.f32.mrb[0].mxu0
    %v799 = vadd.f32 0.0, %v798
    %v800 = vpop.f32.mrb[0].mxu0
    %801 = vmatprep.mubr.f32.mxu0 0.0
    %802 = vmatmul.mubr.f32.gmra.mrb[0].mxu0 %v149
    %v803 = vpop.f32.mrb[0].mxu0
    %v804 = vadd.f32 0.0, %v803
    %v805 = vpop.f32.mrb[0].mxu0
    %806 = vmatprep.mubr.f32.mxu0 0.0
    %807 = vmatmul.mubr.f32.gmra.mrb[0].mxu0 %v152
    %v808 = vpop.f32.mrb[0].mxu0
    %v809 = vadd.f32 0.0, %v808
    %v810 = vpop.f32.mrb[0].mxu0
    %811 = vmatprep.mubr.f32.mxu0 0.0
    %812 = vmatmul.mubr.f32.gmra.mrb[0].mxu0 %v155
    %v813 = vpop.f32.mrb[0].mxu0
    %v814 = vadd.f32 0.0, %v813
    %v815 = vpop.f32.mrb[0].mxu0
    %816 = vmatprep.mubr.f32.mxu0 0.0
    %817 = vmatmul.mubr.f32.gmra.mrb[0].mxu0 %v158
    %v818 = vpop.f32.mrb[0].mxu0
    %v819 = vadd.f32 0.0, %v818
    %v820 = vpop.f32.mrb[0].mxu0
    %821 = vmatprep.mubr.f32.mxu0 0.0
    %822 = vmatmul.mubr.f32.gmra.mrb[0].mxu0 %v161
    %v823 = vpop.f32.mrb[0].mxu0
    %v824 = vadd.f32 0.0, %v823
    %v825 = vpop.f32.mrb[0].mxu0
    %826 = vdwg.mxu0
    %v827 = vlaneseq
    %v828 = vshrl.u32 %v827, 7
    %v829 = vsub.s32 0, %v828
    %v830 = vrot.slane %v731, %v829
    %v831 = vmul.f32 %v261, %v830
    %v832 = vmul.f32 %v266, %v830
    %v833 = vadd.f32 %v831, %v277
    %v834 = vadd.f32 %v832, %v282
    %v835 = vadd.f32 %v833, %v799
    %v836 = vadd.f32 %v834, %v804
    %v837 = vxor.u32 %v835, 2147483648
    %v838 = vxor.u32 %v836, 2147483648
    %v839 = vmul.f32 %v837, 1.442695
    %v840 = vpow.pop %v839
    %v841 = vmul.f32 %v838, 1.442695
    %v842 = vpow.pop %v841
    %v843 = vadd.f32 %v840, 1.0
    %v844 = vadd.f32 %v842, 1.0
    %v845 = vrcp.pop %v843
    %v846 = vmul.f32 1.0, %v845
    %v847 = vrcp.pop %v844
    %v848 = vmul.f32 1.0, %v847
    %v849 = vmul.f32 %v303, %v830
    %v850 = vmul.f32 %v308, %v830
    %v851 = vadd.f32 %v849, %v315
    %v852 = vadd.f32 %v850, %v320
    %v853 = vadd.f32 %v851, %v809
    %v854 = vadd.f32 %v852, %v814
    %v855 = vxor.u32 %v853, 2147483648
    %v856 = vxor.u32 %v854, 2147483648
    %v857 = vmul.f32 %v855, 1.442695
    %v858 = vpow.pop %v857
    %v859 = vmul.f32 %v856, 1.442695
    %v860 = vpow.pop %v859
    %v861 = vadd.f32 %v858, 1.0
    %v862 = vadd.f32 %v860, 1.0
    %v863 = vrcp.pop %v861
    %v864 = vmul.f32 1.0, %v863
    %v865 = vrcp.pop %v862
    %v866 = vmul.f32 1.0, %v865
    %v867 = vmul.f32 %v341, %v830
    %v868 = vmul.f32 %v346, %v830
    %v869 = vadd.f32 %v867, %v353
    %v870 = vadd.f32 %v868, %v358
    %v871 = vadd.f32 %v819, %v365
    %v872 = vadd.f32 %v824, %v370
    %v873 = vmul.f32 %v846, %v871
    %v874 = vmul.f32 %v848, %v872
    %v875 = vadd.f32 %v869, %v873
    %v876 = vadd.f32 %v870, %v874
    %v877 = vtanh.pop %v875
    %v878 = vtanh.pop %v876
    %v879 = vsub.f32 1.0, %v864
    %v880 = vsub.f32 1.0, %v866
    %v881 = vmul.f32 %v879, %v877
    %v882 = vmul.f32 %v880, %v878
    %v883 = vmul.f32 %v864, %v720
    %v884 = vmul.f32 %v866, %v721
    %v885 = vadd.f32 %v881, %v883
    %v886 = vadd.f32 %v882, %v884
    %v887 = vld [vmem:[%s0 + $0x4] sm:$0x1]
    %v888 = vrot.slane %v110, 4
    %v890 = vrcp.pop %v888
    %v891 = vmul.f32 %v887, %v890
    %v892 = vmul.f32 %v394, %v891
    %v893 = vmul.f32 %v397, %v729
    %v894 = vadd.f32 %v892, %v893
    %v895 = vrcp.pop %v894
    %v896 = vmul.f32 %v891, %v895
    %897 = vmatprep.subr.mxu0 0.0
    %898 = vmatpush1.msra.mxu0 %v885
    %899 = vmatprep.subr.mxu0 0.0
    %900 = vmatpush1.msra.mxu0 %v886
    %901 = vmatprep.subr.mxu0 0.0
    %902 = vmatpush1.msra.mxu0 0.0
    %903 = vmatprep.subr.mxu0 0.0
    %904 = vmatpush1.msra.mxu0 0.0
    %905 = vmatprep.subr.mxu0 0.0
    %906 = vmatpush1.msra.mxu0 0.0
    %907 = vmatprep.subr.mxu0 0.0
    %908 = vmatpush1.msra.mxu0 0.0
    %909 = vmatprep.subr.mxu0 0.0
    %910 = vmatpush1.msra.mxu0 0.0
    %911 = vmatprep.subr.mxu0 0.0
    %912 = vmatpush1.msra.mxu0 0.0
    %913 = vmatprep.subr.mxu0 0.0
    %914 = vmatpush1.msra.mxu0 0.0
    %915 = vmatprep.subr.mxu0 0.0
    %916 = vmatpush1.msra.mxu0 0.0
    %917 = vmatprep.subr.mxu0 0.0
    %918 = vmatpush1.msra.mxu0 0.0
    %919 = vmatprep.subr.mxu0 0.0
    %920 = vmatpush1.msra.mxu0 0.0
    %921 = vmatprep.subr.mxu0 0.0
    %922 = vmatpush1.msra.mxu0 0.0
    %923 = vmatprep.subr.mxu0 0.0
    %924 = vmatpush1.msra.mxu0 0.0
    %925 = vmatprep.subr.mxu0 0.0
    %926 = vmatpush1.msra.mxu0 0.0
    %927 = vmatprep.subr.mxu0 0.0
    %928 = vmatpush1.msra.mxu0 0.0
    %929 = vmatprep.subr.mxu0 0.0
    %930 = vmatpush1.msra.mxu0 0.0
    %931 = vmatprep.subr.mxu0 0.0
    %932 = vmatpush1.msra.mxu0 0.0
    %933 = vmatprep.subr.mxu0 0.0
    %934 = vmatpush1.msra.mxu0 0.0
    %935 = vmatprep.subr.mxu0 0.0
    %936 = vmatpush1.msra.mxu0 0.0
    %937 = vmatprep.subr.mxu0 0.0
    %938 = vmatpush1.msra.mxu0 0.0
    %939 = vmatprep.subr.mxu0 0.0
    %940 = vmatpush1.msra.mxu0 0.0
    %941 = vmatprep.subr.mxu0 0.0
    %942 = vmatpush1.msra.mxu0 0.0
    %943 = vmatprep.subr.mxu0 0.0
    %944 = vmatpush1.msra.mxu0 0.0
    %945 = vmatprep.subr.mxu0 0.0
    %946 = vmatpush1.msra.mxu0 0.0
    %947 = vmatprep.subr.mxu0 0.0
    %948 = vmatpush1.msra.mxu0 0.0
    %949 = vmatprep.subr.mxu0 0.0
    %950 = vmatpush1.msra.mxu0 0.0
    %951 = vmatprep.subr.mxu0 0.0
    %952 = vmatpush1.msra.mxu0 0.0
    %953 = vmatprep.subr.mxu0 0.0
    %954 = vmatpush1.msra.mxu0 0.0
    %955 = vmatprep.subr.mxu0 0.0
    %956 = vmatpush1.msra.mxu0 0.0
    %957 = vmatprep.subr.mxu0 0.0
    %958 = vmatpush1.msra.mxu0 0.0
    %959 = vmatprep.subr.mxu0 0.0
    %960 = vmatpush1.msra.mxu0 0.0
    %961 = vmatprep.mubr.f32.mxu0 0.0
    %962 = vmatmul.mubr.f32.gmra.mrb[0].mxu0 %v146
    %v963 = vpop.f32.mrb[0].mxu0
    %v964 = vadd.f32 0.0, %v963
    %v965 = vpop.f32.mrb[0].mxu0
    %966 = vmatprep.mubr.f32.mxu0 0.0
    %967 = vmatmul.mubr.f32.gmra.mrb[0].mxu0 %v149
    %v968 = vpop.f32.mrb[0].mxu0
    %v969 = vadd.f32 0.0, %v968
    %v970 = vpop.f32.mrb[0].mxu0
    %971 = vmatprep.mubr.f32.mxu0 0.0
    %972 = vmatmul.mubr.f32.gmra.mrb[0].mxu0 %v152
    %v973 = vpop.f32.mrb[0].mxu0
    %v974 = vadd.f32 0.0, %v973
    %v975 = vpop.f32.mrb[0].mxu0
    %976 = vmatprep.mubr.f32.mxu0 0.0
    %977 = vmatmul.mubr.f32.gmra.mrb[0].mxu0 %v155
    %v978 = vpop.f32.mrb[0].mxu0
    %v979 = vadd.f32 0.0, %v978
    %v980 = vpop.f32.mrb[0].mxu0
    %981 = vmatprep.mubr.f32.mxu0 0.0
    %982 = vmatmul.mubr.f32.gmra.mrb[0].mxu0 %v158
    %v983 = vpop.f32.mrb[0].mxu0
    %v984 = vadd.f32 0.0, %v983
    %v985 = vpop.f32.mrb[0].mxu0
    %986 = vmatprep.mubr.f32.mxu0 0.0
    %987 = vmatmul.mubr.f32.gmra.mrb[0].mxu0 %v161
    %v988 = vpop.f32.mrb[0].mxu0
    %v989 = vadd.f32 0.0, %v988
    %v990 = vpop.f32.mrb[0].mxu0
    %991 = vdwg.mxu0
    %v992 = vlaneseq
    %v993 = vshrl.u32 %v992, 7
    %v994 = vsub.s32 0, %v993
    %v995 = vrot.slane %v896, %v994
    %v996 = vmul.f32 %v261, %v995
    %v997 = vmul.f32 %v266, %v995
    %v998 = vadd.f32 %v996, %v277
    %v999 = vadd.f32 %v997, %v282
    %v1000 = vadd.f32 %v998, %v964
    %v1001 = vadd.f32 %v999, %v969
    %v1002 = vxor.u32 %v1000, 2147483648
    %v1003 = vxor.u32 %v1001, 2147483648
    %v1004 = vmul.f32 %v1002, 1.442695
    %v1005 = vpow.pop %v1004
    %v1006 = vmul.f32 %v1003, 1.442695
    %v1007 = vpow.pop %v1006
    %v1008 = vadd.f32 %v1005, 1.0
    %v1009 = vadd.f32 %v1007, 1.0
    %v1010 = vrcp.pop %v1008
    %v1011 = vmul.f32 1.0, %v1010
    %v1012 = vrcp.pop %v1009
    %v1013 = vmul.f32 1.0, %v1012
    %v1014 = vmul.f32 %v303, %v995
    %v1015 = vmul.f32 %v308, %v995
    %v1016 = vadd.f32 %v1014, %v315
    %v1017 = vadd.f32 %v1015, %v320
    %v1018 = vadd.f32 %v1016, %v974
    %v1019 = vadd.f32 %v1017, %v979
    %v1020 = vxor.u32 %v1018, 2147483648
    %v1021 = vxor.u32 %v1019, 2147483648
    %v1022 = vmul.f32 %v1020, 1.442695
    %v1023 = vpow.pop %v1022
    %v1024 = vmul.f32 %v1021, 1.442695
    %v1025 = vpow.pop %v1024
    %v1026 = vadd.f32 %v1023, 1.0
    %v1027 = vadd.f32 %v1025, 1.0
    %v1028 = vrcp.pop %v1026
    %v1029 = vmul.f32 1.0, %v1028
    %v1030 = vrcp.pop %v1027
    %v1031 = vmul.f32 1.0, %v1030
    %v1032 = vmul.f32 %v341, %v995
    %v1033 = vmul.f32 %v346, %v995
    %v1034 = vadd.f32 %v1032, %v353
    %v1035 = vadd.f32 %v1033, %v358
    %v1036 = vadd.f32 %v984, %v365
    %v1037 = vadd.f32 %v989, %v370
    %v1038 = vmul.f32 %v1011, %v1036
    %v1039 = vmul.f32 %v1013, %v1037
    %v1040 = vadd.f32 %v1034, %v1038
    %v1041 = vadd.f32 %v1035, %v1039
    %v1042 = vtanh.pop %v1040
    %v1043 = vtanh.pop %v1041
    %v1044 = vsub.f32 1.0, %v1029
    %v1045 = vsub.f32 1.0, %v1031
    %v1046 = vmul.f32 %v1044, %v1042
    %v1047 = vmul.f32 %v1045, %v1043
    %v1048 = vmul.f32 %v1029, %v885
    %v1049 = vmul.f32 %v1031, %v886
    %v1050 = vadd.f32 %v1046, %v1048
    %v1051 = vadd.f32 %v1047, %v1049
    %v1052 = vld [vmem:[%s0 + $0x5] sm:$0x1]
    %v1053 = vmul.f32 %v1052, %v140
    %v1054 = vmul.f32 %v394, %v1053
    %v1055 = vmul.f32 %v397, %v894
    %v1056 = vadd.f32 %v1054, %v1055
    %v1057 = vrcp.pop %v1056
    %v1058 = vmul.f32 %v1053, %v1057
    %1059 = vmatprep.subr.mxu0 0.0
    %1060 = vmatpush1.msra.mxu0 %v1050
    %1061 = vmatprep.subr.mxu0 0.0
    %1062 = vmatpush1.msra.mxu0 %v1051
    %1063 = vmatprep.subr.mxu0 0.0
    %1064 = vmatpush1.msra.mxu0 0.0
    %1065 = vmatprep.subr.mxu0 0.0
    %1066 = vmatpush1.msra.mxu0 0.0
    %1067 = vmatprep.subr.mxu0 0.0
    %1068 = vmatpush1.msra.mxu0 0.0
    %1069 = vmatprep.subr.mxu0 0.0
    %1070 = vmatpush1.msra.mxu0 0.0
    %1071 = vmatprep.subr.mxu0 0.0
    %1072 = vmatpush1.msra.mxu0 0.0
    %1073 = vmatprep.subr.mxu0 0.0
    %1074 = vmatpush1.msra.mxu0 0.0
    %1075 = vmatprep.subr.mxu0 0.0
    %1076 = vmatpush1.msra.mxu0 0.0
    %1077 = vmatprep.subr.mxu0 0.0
    %1078 = vmatpush1.msra.mxu0 0.0
    %1079 = vmatprep.subr.mxu0 0.0
    %1080 = vmatpush1.msra.mxu0 0.0
    %1081 = vmatprep.subr.mxu0 0.0
    %1082 = vmatpush1.msra.mxu0 0.0
    %1083 = vmatprep.subr.mxu0 0.0
    %1084 = vmatpush1.msra.mxu0 0.0
    %1085 = vmatprep.subr.mxu0 0.0
    %1086 = vmatpush1.msra.mxu0 0.0
    %1087 = vmatprep.subr.mxu0 0.0
    %1088 = vmatpush1.msra.mxu0 0.0
    %1089 = vmatprep.subr.mxu0 0.0
    %1090 = vmatpush1.msra.mxu0 0.0
    %1091 = vmatprep.subr.mxu0 0.0
    %1092 = vmatpush1.msra.mxu0 0.0
    %1093 = vmatprep.subr.mxu0 0.0
    %1094 = vmatpush1.msra.mxu0 0.0
    %1095 = vmatprep.subr.mxu0 0.0
    %1096 = vmatpush1.msra.mxu0 0.0
    %1097 = vmatprep.subr.mxu0 0.0
    %1098 = vmatpush1.msra.mxu0 0.0
    %1099 = vmatprep.subr.mxu0 0.0
    %1100 = vmatpush1.msra.mxu0 0.0
    %1101 = vmatprep.subr.mxu0 0.0
    %1102 = vmatpush1.msra.mxu0 0.0
    %1103 = vmatprep.subr.mxu0 0.0
    %1104 = vmatpush1.msra.mxu0 0.0
    %1105 = vmatprep.subr.mxu0 0.0
    %1106 = vmatpush1.msra.mxu0 0.0
    %1107 = vmatprep.subr.mxu0 0.0
    %1108 = vmatpush1.msra.mxu0 0.0
    %1109 = vmatprep.subr.mxu0 0.0
    %1110 = vmatpush1.msra.mxu0 0.0
    %1111 = vmatprep.subr.mxu0 0.0
    %1112 = vmatpush1.msra.mxu0 0.0
    %1113 = vmatprep.subr.mxu0 0.0
    %1114 = vmatpush1.msra.mxu0 0.0
    %1115 = vmatprep.subr.mxu0 0.0
    %1116 = vmatpush1.msra.mxu0 0.0
    %1117 = vmatprep.subr.mxu0 0.0
    %1118 = vmatpush1.msra.mxu0 0.0
    %1119 = vmatprep.subr.mxu0 0.0
    %1120 = vmatpush1.msra.mxu0 0.0
    %1121 = vmatprep.subr.mxu0 0.0
    %1122 = vmatpush1.msra.mxu0 0.0
    %1123 = vmatprep.mubr.f32.mxu0 0.0
    %1124 = vmatmul.mubr.f32.gmra.mrb[0].mxu0 %v146
    %v1125 = vpop.f32.mrb[0].mxu0
    %v1126 = vadd.f32 0.0, %v1125
    %v1127 = vpop.f32.mrb[0].mxu0
    %1128 = vmatprep.mubr.f32.mxu0 0.0
    %1129 = vmatmul.mubr.f32.gmra.mrb[0].mxu0 %v149
    %v1130 = vpop.f32.mrb[0].mxu0
    %v1131 = vadd.f32 0.0, %v1130
    %v1132 = vpop.f32.mrb[0].mxu0
    %1133 = vmatprep.mubr.f32.mxu0 0.0
    %1134 = vmatmul.mubr.f32.gmra.mrb[0].mxu0 %v152
    %v1135 = vpop.f32.mrb[0].mxu0
    %v1136 = vadd.f32 0.0, %v1135
    %v1137 = vpop.f32.mrb[0].mxu0
    %1138 = vmatprep.mubr.f32.mxu0 0.0
    %1139 = vmatmul.mubr.f32.gmra.mrb[0].mxu0 %v155
    %v1140 = vpop.f32.mrb[0].mxu0
    %v1141 = vadd.f32 0.0, %v1140
    %v1142 = vpop.f32.mrb[0].mxu0
    %1143 = vmatprep.mubr.f32.mxu0 0.0
    %1144 = vmatmul.mubr.f32.gmra.mrb[0].mxu0 %v158
    %v1145 = vpop.f32.mrb[0].mxu0
    %v1146 = vadd.f32 0.0, %v1145
    %v1147 = vpop.f32.mrb[0].mxu0
    %1148 = vmatprep.mubr.f32.mxu0 0.0
    %1149 = vmatmul.mubr.f32.gmra.mrb[0].mxu0 %v161
    %v1150 = vpop.f32.mrb[0].mxu0
    %v1151 = vadd.f32 0.0, %v1150
    %v1152 = vpop.f32.mrb[0].mxu0
    %1153 = vdwg.mxu0
    %v1154 = vlaneseq
    %v1155 = vshrl.u32 %v1154, 7
    %v1156 = vsub.s32 0, %v1155
    %v1157 = vrot.slane %v1058, %v1156
    %v1158 = vmul.f32 %v261, %v1157
    %v1159 = vmul.f32 %v266, %v1157
    %v1160 = vadd.f32 %v1158, %v277
    %v1161 = vadd.f32 %v1159, %v282
    %v1162 = vadd.f32 %v1160, %v1126
    %v1163 = vadd.f32 %v1161, %v1131
    %v1164 = vxor.u32 %v1162, 2147483648
    %v1165 = vxor.u32 %v1163, 2147483648
    %v1166 = vmul.f32 %v1164, 1.442695
    %v1167 = vpow.pop %v1166
    %v1168 = vmul.f32 %v1165, 1.442695
    %v1169 = vpow.pop %v1168
    %v1170 = vadd.f32 %v1167, 1.0
    %v1171 = vadd.f32 %v1169, 1.0
    %v1172 = vrcp.pop %v1170
    %v1173 = vmul.f32 1.0, %v1172
    %v1174 = vrcp.pop %v1171
    %v1175 = vmul.f32 1.0, %v1174
    %v1176 = vmul.f32 %v303, %v1157
    %v1177 = vmul.f32 %v308, %v1157
    %v1178 = vadd.f32 %v1176, %v315
    %v1179 = vadd.f32 %v1177, %v320
    %v1180 = vadd.f32 %v1178, %v1136
    %v1181 = vadd.f32 %v1179, %v1141
    %v1182 = vxor.u32 %v1180, 2147483648
    %v1183 = vxor.u32 %v1181, 2147483648
    %v1184 = vmul.f32 %v1182, 1.442695
    %v1185 = vpow.pop %v1184
    %v1186 = vmul.f32 %v1183, 1.442695
    %v1187 = vpow.pop %v1186
    %v1188 = vadd.f32 %v1185, 1.0
    %v1189 = vadd.f32 %v1187, 1.0
    %v1190 = vrcp.pop %v1188
    %v1191 = vmul.f32 1.0, %v1190
    %v1192 = vrcp.pop %v1189
    %v1193 = vmul.f32 1.0, %v1192
    %v1194 = vmul.f32 %v341, %v1157
    %v1195 = vmul.f32 %v346, %v1157
    %v1196 = vadd.f32 %v1194, %v353
    %v1197 = vadd.f32 %v1195, %v358
    %v1198 = vadd.f32 %v1146, %v365
    %v1199 = vadd.f32 %v1151, %v370
    %v1200 = vmul.f32 %v1173, %v1198
    %v1201 = vmul.f32 %v1175, %v1199
    %v1202 = vadd.f32 %v1196, %v1200
    %v1203 = vadd.f32 %v1197, %v1201
    %v1204 = vtanh.pop %v1202
    %v1205 = vtanh.pop %v1203
    %v1206 = vsub.f32 1.0, %v1191
    %v1207 = vsub.f32 1.0, %v1193
    %v1208 = vmul.f32 %v1206, %v1204
    %v1209 = vmul.f32 %v1207, %v1205
    %v1210 = vmul.f32 %v1191, %v1050
    %v1211 = vmul.f32 %v1193, %v1051
    %v1212 = vadd.f32 %v1208, %v1210
    %v1213 = vadd.f32 %v1209, %v1211
    %v1214 = vld [vmem:[%s0 + $0x6] sm:$0x1]
    %v1215 = vmul.f32 %v1214, %v392
    %v1216 = vmul.f32 %v394, %v1215
    %v1217 = vmul.f32 %v397, %v1056
    %v1218 = vadd.f32 %v1216, %v1217
    %v1219 = vrcp.pop %v1218
    %v1220 = vmul.f32 %v1215, %v1219
    %1221 = vmatprep.subr.mxu0 0.0
    %1222 = vmatpush1.msra.mxu0 %v1212
    %1223 = vmatprep.subr.mxu0 0.0
    %1224 = vmatpush1.msra.mxu0 %v1213
    %1225 = vmatprep.subr.mxu0 0.0
    %1226 = vmatpush1.msra.mxu0 0.0
    %1227 = vmatprep.subr.mxu0 0.0
    %1228 = vmatpush1.msra.mxu0 0.0
    %1229 = vmatprep.subr.mxu0 0.0
    %1230 = vmatpush1.msra.mxu0 0.0
    %1231 = vmatprep.subr.mxu0 0.0
    %1232 = vmatpush1.msra.mxu0 0.0
    %1233 = vmatprep.subr.mxu0 0.0
    %1234 = vmatpush1.msra.mxu0 0.0
    %1235 = vmatprep.subr.mxu0 0.0
    %1236 = vmatpush1.msra.mxu0 0.0
    %1237 = vmatprep.subr.mxu0 0.0
    %1238 = vmatpush1.msra.mxu0 0.0
    %1239 = vmatprep.subr.mxu0 0.0
    %1240 = vmatpush1.msra.mxu0 0.0
    %1241 = vmatprep.subr.mxu0 0.0
    %1242 = vmatpush1.msra.mxu0 0.0
    %1243 = vmatprep.subr.mxu0 0.0
    %1244 = vmatpush1.msra.mxu0 0.0
    %1245 = vmatprep.subr.mxu0 0.0
    %1246 = vmatpush1.msra.mxu0 0.0
    %1247 = vmatprep.subr.mxu0 0.0
    %1248 = vmatpush1.msra.mxu0 0.0
    %1249 = vmatprep.subr.mxu0 0.0
    %1250 = vmatpush1.msra.mxu0 0.0
    %1251 = vmatprep.subr.mxu0 0.0
    %1252 = vmatpush1.msra.mxu0 0.0
    %1253 = vmatprep.subr.mxu0 0.0
    %1254 = vmatpush1.msra.mxu0 0.0
    %1255 = vmatprep.subr.mxu0 0.0
    %1256 = vmatpush1.msra.mxu0 0.0
    %1257 = vmatprep.subr.mxu0 0.0
    %1258 = vmatpush1.msra.mxu0 0.0
    %1259 = vmatprep.subr.mxu0 0.0
    %1260 = vmatpush1.msra.mxu0 0.0
    %1261 = vmatprep.subr.mxu0 0.0
    %1262 = vmatpush1.msra.mxu0 0.0
    %1263 = vmatprep.subr.mxu0 0.0
    %1264 = vmatpush1.msra.mxu0 0.0
    %1265 = vmatprep.subr.mxu0 0.0
    %1266 = vmatpush1.msra.mxu0 0.0
    %1267 = vmatprep.subr.mxu0 0.0
    %1268 = vmatpush1.msra.mxu0 0.0
    %1269 = vmatprep.subr.mxu0 0.0
    %1270 = vmatpush1.msra.mxu0 0.0
    %1271 = vmatprep.subr.mxu0 0.0
    %1272 = vmatpush1.msra.mxu0 0.0
    %1273 = vmatprep.subr.mxu0 0.0
    %1274 = vmatpush1.msra.mxu0 0.0
    %1275 = vmatprep.subr.mxu0 0.0
    %1276 = vmatpush1.msra.mxu0 0.0
    %1277 = vmatprep.subr.mxu0 0.0
    %1278 = vmatpush1.msra.mxu0 0.0
    %1279 = vmatprep.subr.mxu0 0.0
    %1280 = vmatpush1.msra.mxu0 0.0
    %1281 = vmatprep.subr.mxu0 0.0
    %1282 = vmatpush1.msra.mxu0 0.0
    %1283 = vmatprep.subr.mxu0 0.0
    %1284 = vmatpush1.msra.mxu0 0.0
    %1285 = vmatprep.mubr.f32.mxu0 0.0
    %1286 = vmatmul.mubr.f32.gmra.mrb[0].mxu0 %v146
    %v1287 = vpop.f32.mrb[0].mxu0
    %v1288 = vadd.f32 0.0, %v1287
    %v1289 = vpop.f32.mrb[0].mxu0
    %1290 = vmatprep.mubr.f32.mxu0 0.0
    %1291 = vmatmul.mubr.f32.gmra.mrb[0].mxu0 %v149
    %v1292 = vpop.f32.mrb[0].mxu0
    %v1293 = vadd.f32 0.0, %v1292
    %v1294 = vpop.f32.mrb[0].mxu0
    %1295 = vmatprep.mubr.f32.mxu0 0.0
    %1296 = vmatmul.mubr.f32.gmra.mrb[0].mxu0 %v152
    %v1297 = vpop.f32.mrb[0].mxu0
    %v1298 = vadd.f32 0.0, %v1297
    %v1299 = vpop.f32.mrb[0].mxu0
    %1300 = vmatprep.mubr.f32.mxu0 0.0
    %1301 = vmatmul.mubr.f32.gmra.mrb[0].mxu0 %v155
    %v1302 = vpop.f32.mrb[0].mxu0
    %v1303 = vadd.f32 0.0, %v1302
    %v1304 = vpop.f32.mrb[0].mxu0
    %1305 = vmatprep.mubr.f32.mxu0 0.0
    %1306 = vmatmul.mubr.f32.gmra.mrb[0].mxu0 %v158
    %v1307 = vpop.f32.mrb[0].mxu0
    %v1308 = vadd.f32 0.0, %v1307
    %v1309 = vpop.f32.mrb[0].mxu0
    %1310 = vmatprep.mubr.f32.mxu0 0.0
    %1311 = vmatmul.mubr.f32.gmra.mrb[0].mxu0 %v161
    %v1312 = vpop.f32.mrb[0].mxu0
    %v1313 = vadd.f32 0.0, %v1312
    %v1314 = vpop.f32.mrb[0].mxu0
    %1315 = vdwg.mxu0
    %v1316 = vlaneseq
    %v1317 = vshrl.u32 %v1316, 7
    %v1318 = vsub.s32 0, %v1317
    %v1319 = vrot.slane %v1220, %v1318
    %v1320 = vmul.f32 %v261, %v1319
    %v1321 = vmul.f32 %v266, %v1319
    %v1322 = vadd.f32 %v1320, %v277
    %v1323 = vadd.f32 %v1321, %v282
    %v1324 = vadd.f32 %v1322, %v1288
    %v1325 = vadd.f32 %v1323, %v1293
    %v1326 = vxor.u32 %v1324, 2147483648
    %v1327 = vxor.u32 %v1325, 2147483648
    %v1328 = vmul.f32 %v1326, 1.442695
    %v1329 = vpow.pop %v1328
    %v1330 = vmul.f32 %v1327, 1.442695
    %v1331 = vpow.pop %v1330
    %v1332 = vadd.f32 %v1329, 1.0
    %v1333 = vadd.f32 %v1331, 1.0
    %v1334 = vrcp.pop %v1332
    %v1335 = vmul.f32 1.0, %v1334
    %v1336 = vrcp.pop %v1333
    %v1337 = vmul.f32 1.0, %v1336
    %v1338 = vmul.f32 %v303, %v1319
    %v1339 = vmul.f32 %v308, %v1319
    %v1340 = vadd.f32 %v1338, %v315
    %v1341 = vadd.f32 %v1339, %v320
    %v1342 = vadd.f32 %v1340, %v1298
    %v1343 = vadd.f32 %v1341, %v1303
    %v1344 = vxor.u32 %v1342, 2147483648
    %v1345 = vxor.u32 %v1343, 2147483648
    %v1346 = vmul.f32 %v1344, 1.442695
    %v1347 = vpow.pop %v1346
    %v1348 = vmul.f32 %v1345, 1.442695
    %v1349 = vpow.pop %v1348
    %v1350 = vadd.f32 %v1347, 1.0
    %v1351 = vadd.f32 %v1349, 1.0
    %v1352 = vrcp.pop %v1350
    %v1353 = vmul.f32 1.0, %v1352
    %v1354 = vrcp.pop %v1351
    %v1355 = vmul.f32 1.0, %v1354
    %v1356 = vmul.f32 %v341, %v1319
    %v1357 = vmul.f32 %v346, %v1319
    %v1358 = vadd.f32 %v1356, %v353
    %v1359 = vadd.f32 %v1357, %v358
    %v1360 = vadd.f32 %v1308, %v365
    %v1361 = vadd.f32 %v1313, %v370
    %v1362 = vmul.f32 %v1335, %v1360
    %v1363 = vmul.f32 %v1337, %v1361
    %v1364 = vadd.f32 %v1358, %v1362
    %v1365 = vadd.f32 %v1359, %v1363
    %v1366 = vtanh.pop %v1364
    %v1367 = vtanh.pop %v1365
    %v1368 = vsub.f32 1.0, %v1353
    %v1369 = vsub.f32 1.0, %v1355
    %v1370 = vmul.f32 %v1368, %v1366
    %v1371 = vmul.f32 %v1369, %v1367
    %v1372 = vmul.f32 %v1353, %v1212
    %v1373 = vmul.f32 %v1355, %v1213
    %v1374 = vadd.f32 %v1370, %v1372
    %v1375 = vadd.f32 %v1371, %v1373
    %v1376 = vld [vmem:[%s0 + $0x7] sm:$0x1]
    %v1377 = vmul.f32 %v1376, %v560
    %v1378 = vmul.f32 %v394, %v1377
    %v1379 = vmul.f32 %v397, %v1218
    %v1380 = vadd.f32 %v1378, %v1379
    %v1381 = vrcp.pop %v1380
    %v1382 = vmul.f32 %v1377, %v1381
    %1383 = vmatprep.subr.mxu0 0.0
    %1384 = vmatpush1.msra.mxu0 %v1374
    %1385 = vmatprep.subr.mxu0 0.0
    %1386 = vmatpush1.msra.mxu0 %v1375
    %1387 = vmatprep.subr.mxu0 0.0
    %1388 = vmatpush1.msra.mxu0 0.0
    %1389 = vmatprep.subr.mxu0 0.0
    %1390 = vmatpush1.msra.mxu0 0.0
    %1391 = vmatprep.subr.mxu0 0.0
    %1392 = vmatpush1.msra.mxu0 0.0
    %1393 = vmatprep.subr.mxu0 0.0
    %1394 = vmatpush1.msra.mxu0 0.0
    %1395 = vmatprep.subr.mxu0 0.0
    %1396 = vmatpush1.msra.mxu0 0.0
    %1397 = vmatprep.subr.mxu0 0.0
    %1398 = vmatpush1.msra.mxu0 0.0
    %1399 = vmatprep.subr.mxu0 0.0
    %1400 = vmatpush1.msra.mxu0 0.0
    %1401 = vmatprep.subr.mxu0 0.0
    %1402 = vmatpush1.msra.mxu0 0.0
    %1403 = vmatprep.subr.mxu0 0.0
    %1404 = vmatpush1.msra.mxu0 0.0
    %1405 = vmatprep.subr.mxu0 0.0
    %1406 = vmatpush1.msra.mxu0 0.0
    %1407 = vmatprep.subr.mxu0 0.0
    %1408 = vmatpush1.msra.mxu0 0.0
    %1409 = vmatprep.subr.mxu0 0.0
    %1410 = vmatpush1.msra.mxu0 0.0
    %1411 = vmatprep.subr.mxu0 0.0
    %1412 = vmatpush1.msra.mxu0 0.0
    %1413 = vmatprep.subr.mxu0 0.0
    %1414 = vmatpush1.msra.mxu0 0.0
    %1415 = vmatprep.subr.mxu0 0.0
    %1416 = vmatpush1.msra.mxu0 0.0
    %1417 = vmatprep.subr.mxu0 0.0
    %1418 = vmatpush1.msra.mxu0 0.0
    %1419 = vmatprep.subr.mxu0 0.0
    %1420 = vmatpush1.msra.mxu0 0.0
    %1421 = vmatprep.subr.mxu0 0.0
    %1422 = vmatpush1.msra.mxu0 0.0
    %1423 = vmatprep.subr.mxu0 0.0
    %1424 = vmatpush1.msra.mxu0 0.0
    %1425 = vmatprep.subr.mxu0 0.0
    %1426 = vmatpush1.msra.mxu0 0.0
    %1427 = vmatprep.subr.mxu0 0.0
    %1428 = vmatpush1.msra.mxu0 0.0
    %1429 = vmatprep.subr.mxu0 0.0
    %1430 = vmatpush1.msra.mxu0 0.0
    %1431 = vmatprep.subr.mxu0 0.0
    %1432 = vmatpush1.msra.mxu0 0.0
    %1433 = vmatprep.subr.mxu0 0.0
    %1434 = vmatpush1.msra.mxu0 0.0
    %1435 = vmatprep.subr.mxu0 0.0
    %1436 = vmatpush1.msra.mxu0 0.0
    %1437 = vmatprep.subr.mxu0 0.0
    %1438 = vmatpush1.msra.mxu0 0.0
    %1439 = vmatprep.subr.mxu0 0.0
    %1440 = vmatpush1.msra.mxu0 0.0
    %1441 = vmatprep.subr.mxu0 0.0
    %1442 = vmatpush1.msra.mxu0 0.0
    %1443 = vmatprep.subr.mxu0 0.0
    %1444 = vmatpush1.msra.mxu0 0.0
    %1445 = vmatprep.subr.mxu0 0.0
    %1446 = vmatpush1.msra.mxu0 0.0
    %1447 = vmatprep.mubr.f32.mxu0 0.0
    %1448 = vmatmul.mubr.f32.gmra.mrb[0].mxu0 %v146
    %v1449 = vpop.f32.mrb[0].mxu0
    %v1450 = vadd.f32 0.0, %v1449
    %v1451 = vpop.f32.mrb[0].mxu0
    %1452 = vmatprep.mubr.f32.mxu0 0.0
    %1453 = vmatmul.mubr.f32.gmra.mrb[0].mxu0 %v149
    %v1454 = vpop.f32.mrb[0].mxu0
    %v1455 = vadd.f32 0.0, %v1454
    %v1456 = vpop.f32.mrb[0].mxu0
    %1457 = vmatprep.mubr.f32.mxu0 0.0
    %1458 = vmatmul.mubr.f32.gmra.mrb[0].mxu0 %v152
    %v1459 = vpop.f32.mrb[0].mxu0
    %v1460 = vadd.f32 0.0, %v1459
    %v1461 = vpop.f32.mrb[0].mxu0
    %1462 = vmatprep.mubr.f32.mxu0 0.0
    %1463 = vmatmul.mubr.f32.gmra.mrb[0].mxu0 %v155
    %v1464 = vpop.f32.mrb[0].mxu0
    %v1465 = vadd.f32 0.0, %v1464
    %v1466 = vpop.f32.mrb[0].mxu0
    %1467 = vmatprep.mubr.f32.mxu0 0.0
    %1468 = vmatmul.mubr.f32.gmra.mrb[0].mxu0 %v158
    %v1469 = vpop.f32.mrb[0].mxu0
    %v1470 = vadd.f32 0.0, %v1469
    %v1471 = vpop.f32.mrb[0].mxu0
    %1472 = vmatprep.mubr.f32.mxu0 0.0
    %1473 = vmatmul.mubr.f32.gmra.mrb[0].mxu0 %v161
    %v1474 = vpop.f32.mrb[0].mxu0
    %v1475 = vadd.f32 0.0, %v1474
    %v1476 = vpop.f32.mrb[0].mxu0
    %1477 = vdwg.mxu0
    %v1478 = vlaneseq
    %v1479 = vshrl.u32 %v1478, 7
    %v1480 = vsub.s32 0, %v1479
    %v1481 = vrot.slane %v1382, %v1480
    %v1482 = vmul.f32 %v261, %v1481
    %v1483 = vmul.f32 %v266, %v1481
    %v1484 = vadd.f32 %v1482, %v277
    %v1485 = vadd.f32 %v1483, %v282
    %v1486 = vadd.f32 %v1484, %v1450
    %v1487 = vadd.f32 %v1485, %v1455
    %v1488 = vxor.u32 %v1486, 2147483648
    %v1489 = vxor.u32 %v1487, 2147483648
    %v1490 = vmul.f32 %v1488, 1.442695
    %v1491 = vpow.pop %v1490
    %v1492 = vmul.f32 %v1489, 1.442695
    %v1493 = vpow.pop %v1492
    %v1494 = vadd.f32 %v1491, 1.0
    %v1495 = vadd.f32 %v1493, 1.0
    %v1496 = vrcp.pop %v1494
    %v1497 = vmul.f32 1.0, %v1496
    %v1498 = vrcp.pop %v1495
    %v1499 = vmul.f32 1.0, %v1498
    %v1500 = vmul.f32 %v303, %v1481
    %v1501 = vmul.f32 %v308, %v1481
    %v1502 = vadd.f32 %v1500, %v315
    %v1503 = vadd.f32 %v1501, %v320
    %v1504 = vadd.f32 %v1502, %v1460
    %v1505 = vadd.f32 %v1503, %v1465
    %v1506 = vxor.u32 %v1504, 2147483648
    %v1507 = vxor.u32 %v1505, 2147483648
    %v1508 = vmul.f32 %v1506, 1.442695
    %v1509 = vpow.pop %v1508
    %v1510 = vmul.f32 %v1507, 1.442695
    %v1511 = vpow.pop %v1510
    %v1512 = vadd.f32 %v1509, 1.0
    %v1513 = vadd.f32 %v1511, 1.0
    %v1514 = vrcp.pop %v1512
    %v1515 = vmul.f32 1.0, %v1514
    %v1516 = vrcp.pop %v1513
    %v1517 = vmul.f32 1.0, %v1516
    %v1518 = vmul.f32 %v341, %v1481
    %v1519 = vmul.f32 %v346, %v1481
    %v1520 = vadd.f32 %v1518, %v353
    %v1521 = vadd.f32 %v1519, %v358
    %v1522 = vadd.f32 %v1470, %v365
    %v1523 = vadd.f32 %v1475, %v370
    %v1524 = vmul.f32 %v1497, %v1522
    %v1525 = vmul.f32 %v1499, %v1523
    %v1526 = vadd.f32 %v1520, %v1524
    %v1527 = vadd.f32 %v1521, %v1525
    %v1528 = vtanh.pop %v1526
    %v1529 = vtanh.pop %v1527
    %v1530 = vsub.f32 1.0, %v1515
    %v1531 = vsub.f32 1.0, %v1517
    %v1532 = vmul.f32 %v1530, %v1528
    %v1533 = vmul.f32 %v1531, %v1529
    %v1534 = vmul.f32 %v1515, %v1374
    %v1535 = vmul.f32 %v1517, %v1375
    %v1536 = vadd.f32 %v1532, %v1534
    %v1537 = vadd.f32 %v1533, %v1535
    %v1538 = vld [vmem:[%s0 + $0x8] sm:$0x1]
    %v1539 = vmul.f32 %v1538, %v725
    %v1540 = vmul.f32 %v394, %v1539
    %v1541 = vmul.f32 %v397, %v1380
    %v1542 = vadd.f32 %v1540, %v1541
    %v1543 = vrcp.pop %v1542
    %v1544 = vmul.f32 %v1539, %v1543
    %1545 = vmatprep.subr.mxu0 0.0
    %1546 = vmatpush1.msra.mxu0 %v1536
    %1547 = vmatprep.subr.mxu0 0.0
    %1548 = vmatpush1.msra.mxu0 %v1537
    %1549 = vmatprep.subr.mxu0 0.0
    %1550 = vmatpush1.msra.mxu0 0.0
    %1551 = vmatprep.subr.mxu0 0.0
    %1552 = vmatpush1.msra.mxu0 0.0
    %1553 = vmatprep.subr.mxu0 0.0
    %1554 = vmatpush1.msra.mxu0 0.0
    %1555 = vmatprep.subr.mxu0 0.0
    %1556 = vmatpush1.msra.mxu0 0.0
    %1557 = vmatprep.subr.mxu0 0.0
    %1558 = vmatpush1.msra.mxu0 0.0
    %1559 = vmatprep.subr.mxu0 0.0
    %1560 = vmatpush1.msra.mxu0 0.0
    %1561 = vmatprep.subr.mxu0 0.0
    %1562 = vmatpush1.msra.mxu0 0.0
    %1563 = vmatprep.subr.mxu0 0.0
    %1564 = vmatpush1.msra.mxu0 0.0
    %1565 = vmatprep.subr.mxu0 0.0
    %1566 = vmatpush1.msra.mxu0 0.0
    %1567 = vmatprep.subr.mxu0 0.0
    %1568 = vmatpush1.msra.mxu0 0.0
    %1569 = vmatprep.subr.mxu0 0.0
    %1570 = vmatpush1.msra.mxu0 0.0
    %1571 = vmatprep.subr.mxu0 0.0
    %1572 = vmatpush1.msra.mxu0 0.0
    %1573 = vmatprep.subr.mxu0 0.0
    %1574 = vmatpush1.msra.mxu0 0.0
    %1575 = vmatprep.subr.mxu0 0.0
    %1576 = vmatpush1.msra.mxu0 0.0
    %1577 = vmatprep.subr.mxu0 0.0
    %1578 = vmatpush1.msra.mxu0 0.0
    %1579 = vmatprep.subr.mxu0 0.0
    %1580 = vmatpush1.msra.mxu0 0.0
    %1581 = vmatprep.subr.mxu0 0.0
    %1582 = vmatpush1.msra.mxu0 0.0
    %1583 = vmatprep.subr.mxu0 0.0
    %1584 = vmatpush1.msra.mxu0 0.0
    %1585 = vmatprep.subr.mxu0 0.0
    %1586 = vmatpush1.msra.mxu0 0.0
    %1587 = vmatprep.subr.mxu0 0.0
    %1588 = vmatpush1.msra.mxu0 0.0
    %1589 = vmatprep.subr.mxu0 0.0
    %1590 = vmatpush1.msra.mxu0 0.0
    %1591 = vmatprep.subr.mxu0 0.0
    %1592 = vmatpush1.msra.mxu0 0.0
    %1593 = vmatprep.subr.mxu0 0.0
    %1594 = vmatpush1.msra.mxu0 0.0
    %1595 = vmatprep.subr.mxu0 0.0
    %1596 = vmatpush1.msra.mxu0 0.0
    %1597 = vmatprep.subr.mxu0 0.0
    %1598 = vmatpush1.msra.mxu0 0.0
    %1599 = vmatprep.subr.mxu0 0.0
    %1600 = vmatpush1.msra.mxu0 0.0
    %1601 = vmatprep.subr.mxu0 0.0
    %1602 = vmatpush1.msra.mxu0 0.0
    %1603 = vmatprep.subr.mxu0 0.0
    %1604 = vmatpush1.msra.mxu0 0.0
    %1605 = vmatprep.subr.mxu0 0.0
    %1606 = vmatpush1.msra.mxu0 0.0
    %1607 = vmatprep.subr.mxu0 0.0
    %1608 = vmatpush1.msra.mxu0 0.0
    %1609 = vmatprep.mubr.f32.mxu0 0.0
    %1610 = vmatmul.mubr.f32.gmra.mrb[0].mxu0 %v146
    %v1611 = vpop.f32.mrb[0].mxu0
    %v1612 = vadd.f32 0.0, %v1611
    %v1613 = vpop.f32.mrb[0].mxu0
    %1614 = vmatprep.mubr.f32.mxu0 0.0
    %1615 = vmatmul.mubr.f32.gmra.mrb[0].mxu0 %v149
    %v1616 = vpop.f32.mrb[0].mxu0
    %v1617 = vadd.f32 0.0, %v1616
    %v1618 = vpop.f32.mrb[0].mxu0
    %1619 = vmatprep.mubr.f32.mxu0 0.0
    %1620 = vmatmul.mubr.f32.gmra.mrb[0].mxu0 %v152
    %v1621 = vpop.f32.mrb[0].mxu0
    %v1622 = vadd.f32 0.0, %v1621
    %v1623 = vpop.f32.mrb[0].mxu0
    %1624 = vmatprep.mubr.f32.mxu0 0.0
    %1625 = vmatmul.mubr.f32.gmra.mrb[0].mxu0 %v155
    %v1626 = vpop.f32.mrb[0].mxu0
    %v1627 = vadd.f32 0.0, %v1626
    %v1628 = vpop.f32.mrb[0].mxu0
    %1629 = vmatprep.mubr.f32.mxu0 0.0
    %1630 = vmatmul.mubr.f32.gmra.mrb[0].mxu0 %v158
    %v1631 = vpop.f32.mrb[0].mxu0
    %v1632 = vadd.f32 0.0, %v1631
    %v1633 = vpop.f32.mrb[0].mxu0
    %1634 = vmatprep.mubr.f32.mxu0 0.0
    %1635 = vmatmul.mubr.f32.gmra.mrb[0].mxu0 %v161
    %v1636 = vpop.f32.mrb[0].mxu0
    %v1637 = vadd.f32 0.0, %v1636
    %v1638 = vpop.f32.mrb[0].mxu0
    %1639 = vdwg.mxu0
    %v1640 = vlaneseq
    %v1641 = vshrl.u32 %v1640, 7
    %v1642 = vsub.s32 0, %v1641
    %v1643 = vrot.slane %v1544, %v1642
    %v1644 = vmul.f32 %v261, %v1643
    %v1645 = vmul.f32 %v266, %v1643
    %v1646 = vadd.f32 %v1644, %v277
    %v1647 = vadd.f32 %v1645, %v282
    %v1648 = vadd.f32 %v1646, %v1612
    %v1649 = vadd.f32 %v1647, %v1617
    %v1650 = vxor.u32 %v1648, 2147483648
    %v1651 = vxor.u32 %v1649, 2147483648
    %v1652 = vmul.f32 %v1650, 1.442695
    %v1653 = vpow.pop %v1652
    %v1654 = vmul.f32 %v1651, 1.442695
    %v1655 = vpow.pop %v1654
    %v1656 = vadd.f32 %v1653, 1.0
    %v1657 = vadd.f32 %v1655, 1.0
    %v1658 = vrcp.pop %v1656
    %v1659 = vmul.f32 1.0, %v1658
    %v1660 = vrcp.pop %v1657
    %v1661 = vmul.f32 1.0, %v1660
    %v1662 = vmul.f32 %v303, %v1643
    %v1663 = vmul.f32 %v308, %v1643
    %v1664 = vadd.f32 %v1662, %v315
    %v1665 = vadd.f32 %v1663, %v320
    %v1666 = vadd.f32 %v1664, %v1622
    %v1667 = vadd.f32 %v1665, %v1627
    %v1668 = vxor.u32 %v1666, 2147483648
    %v1669 = vxor.u32 %v1667, 2147483648
    %v1670 = vmul.f32 %v1668, 1.442695
    %v1671 = vpow.pop %v1670
    %v1672 = vmul.f32 %v1669, 1.442695
    %v1673 = vpow.pop %v1672
    %v1674 = vadd.f32 %v1671, 1.0
    %v1675 = vadd.f32 %v1673, 1.0
    %v1676 = vrcp.pop %v1674
    %v1677 = vmul.f32 1.0, %v1676
    %v1678 = vrcp.pop %v1675
    %v1679 = vmul.f32 1.0, %v1678
    %v1680 = vmul.f32 %v341, %v1643
    %v1681 = vmul.f32 %v346, %v1643
    %v1682 = vadd.f32 %v1680, %v353
    %v1683 = vadd.f32 %v1681, %v358
    %v1684 = vadd.f32 %v1632, %v365
    %v1685 = vadd.f32 %v1637, %v370
    %v1686 = vmul.f32 %v1659, %v1684
    %v1687 = vmul.f32 %v1661, %v1685
    %v1688 = vadd.f32 %v1682, %v1686
    %v1689 = vadd.f32 %v1683, %v1687
    %v1690 = vtanh.pop %v1688
    %v1691 = vtanh.pop %v1689
    %v1692 = vsub.f32 1.0, %v1677
    %v1693 = vsub.f32 1.0, %v1679
    %v1694 = vmul.f32 %v1692, %v1690
    %v1695 = vmul.f32 %v1693, %v1691
    %v1696 = vmul.f32 %v1677, %v1536
    %v1697 = vmul.f32 %v1679, %v1537
    %v1698 = vadd.f32 %v1694, %v1696
    %v1699 = vadd.f32 %v1695, %v1697
    %v1700 = vld [vmem:[%s0 + $0x9] sm:$0x1]
    %v1701 = vmul.f32 %v1700, %v890
    %v1702 = vmul.f32 %v394, %v1701
    %v1703 = vmul.f32 %v397, %v1542
    %v1704 = vadd.f32 %v1702, %v1703
    %v1705 = vrcp.pop %v1704
    %v1706 = vmul.f32 %v1701, %v1705
    %1707 = vmatprep.subr.mxu0 0.0
    %1708 = vmatpush1.msra.mxu0 %v1698
    %1709 = vmatprep.subr.mxu0 0.0
    %1710 = vmatpush1.msra.mxu0 %v1699
    %1711 = vmatprep.subr.mxu0 0.0
    %1712 = vmatpush1.msra.mxu0 0.0
    %1713 = vmatprep.subr.mxu0 0.0
    %1714 = vmatpush1.msra.mxu0 0.0
    %1715 = vmatprep.subr.mxu0 0.0
    %1716 = vmatpush1.msra.mxu0 0.0
    %1717 = vmatprep.subr.mxu0 0.0
    %1718 = vmatpush1.msra.mxu0 0.0
    %1719 = vmatprep.subr.mxu0 0.0
    %1720 = vmatpush1.msra.mxu0 0.0
    %1721 = vmatprep.subr.mxu0 0.0
    %1722 = vmatpush1.msra.mxu0 0.0
    %1723 = vmatprep.subr.mxu0 0.0
    %1724 = vmatpush1.msra.mxu0 0.0
    %1725 = vmatprep.subr.mxu0 0.0
    %1726 = vmatpush1.msra.mxu0 0.0
    %1727 = vmatprep.subr.mxu0 0.0
    %1728 = vmatpush1.msra.mxu0 0.0
    %1729 = vmatprep.subr.mxu0 0.0
    %1730 = vmatpush1.msra.mxu0 0.0
    %1731 = vmatprep.subr.mxu0 0.0
    %1732 = vmatpush1.msra.mxu0 0.0
    %1733 = vmatprep.subr.mxu0 0.0
    %1734 = vmatpush1.msra.mxu0 0.0
    %1735 = vmatprep.subr.mxu0 0.0
    %1736 = vmatpush1.msra.mxu0 0.0
    %1737 = vmatprep.subr.mxu0 0.0
    %1738 = vmatpush1.msra.mxu0 0.0
    %1739 = vmatprep.subr.mxu0 0.0
    %1740 = vmatpush1.msra.mxu0 0.0
    %1741 = vmatprep.subr.mxu0 0.0
    %1742 = vmatpush1.msra.mxu0 0.0
    %1743 = vmatprep.subr.mxu0 0.0
    %1744 = vmatpush1.msra.mxu0 0.0
    %1745 = vmatprep.subr.mxu0 0.0
    %1746 = vmatpush1.msra.mxu0 0.0
    %1747 = vmatprep.subr.mxu0 0.0
    %1748 = vmatpush1.msra.mxu0 0.0
    %1749 = vmatprep.subr.mxu0 0.0
    %1750 = vmatpush1.msra.mxu0 0.0
    %1751 = vmatprep.subr.mxu0 0.0
    %1752 = vmatpush1.msra.mxu0 0.0
    %1753 = vmatprep.subr.mxu0 0.0
    %1754 = vmatpush1.msra.mxu0 0.0
    %1755 = vmatprep.subr.mxu0 0.0
    %1756 = vmatpush1.msra.mxu0 0.0
    %1757 = vmatprep.subr.mxu0 0.0
    %1758 = vmatpush1.msra.mxu0 0.0
    %1759 = vmatprep.subr.mxu0 0.0
    %1760 = vmatpush1.msra.mxu0 0.0
    %1761 = vmatprep.subr.mxu0 0.0
    %1762 = vmatpush1.msra.mxu0 0.0
    %1763 = vmatprep.subr.mxu0 0.0
    %1764 = vmatpush1.msra.mxu0 0.0
    %1765 = vmatprep.subr.mxu0 0.0
    %1766 = vmatpush1.msra.mxu0 0.0
    %1767 = vmatprep.subr.mxu0 0.0
    %1768 = vmatpush1.msra.mxu0 0.0
    %1769 = vmatprep.subr.mxu0 0.0
    %1770 = vmatpush1.msra.mxu0 0.0
    %1771 = vmatprep.mubr.f32.mxu0 0.0
    %1772 = vmatmul.mubr.f32.gmra.mrb[0].mxu0 %v146
    %v1773 = vpop.f32.mrb[0].mxu0
    %v1774 = vadd.f32 0.0, %v1773
    %v1775 = vpop.f32.mrb[0].mxu0
    %1776 = vmatprep.mubr.f32.mxu0 0.0
    %1777 = vmatmul.mubr.f32.gmra.mrb[0].mxu0 %v149
    %v1778 = vpop.f32.mrb[0].mxu0
    %v1779 = vadd.f32 0.0, %v1778
    %v1780 = vpop.f32.mrb[0].mxu0
    %1781 = vmatprep.mubr.f32.mxu0 0.0
    %1782 = vmatmul.mubr.f32.gmra.mrb[0].mxu0 %v152
    %v1783 = vpop.f32.mrb[0].mxu0
    %v1784 = vadd.f32 0.0, %v1783
    %v1785 = vpop.f32.mrb[0].mxu0
    %1786 = vmatprep.mubr.f32.mxu0 0.0
    %1787 = vmatmul.mubr.f32.gmra.mrb[0].mxu0 %v155
    %v1788 = vpop.f32.mrb[0].mxu0
    %v1789 = vadd.f32 0.0, %v1788
    %v1790 = vpop.f32.mrb[0].mxu0
    %1791 = vmatprep.mubr.f32.mxu0 0.0
    %1792 = vmatmul.mubr.f32.gmra.mrb[0].mxu0 %v158
    %v1793 = vpop.f32.mrb[0].mxu0
    %v1794 = vadd.f32 0.0, %v1793
    %v1795 = vpop.f32.mrb[0].mxu0
    %1796 = vmatprep.mubr.f32.mxu0 0.0
    %1797 = vmatmul.mubr.f32.gmra.mrb[0].mxu0 %v161
    %v1798 = vpop.f32.mrb[0].mxu0
    %v1799 = vadd.f32 0.0, %v1798
    %v1800 = vpop.f32.mrb[0].mxu0
    %1801 = vdwg.mxu0
    %v1802 = vlaneseq
    %v1803 = vshrl.u32 %v1802, 7
    %v1804 = vsub.s32 0, %v1803
    %v1805 = vrot.slane %v1706, %v1804
    %v1806 = vmul.f32 %v261, %v1805
    %v1807 = vmul.f32 %v266, %v1805
    %v1808 = vadd.f32 %v1806, %v277
    %v1809 = vadd.f32 %v1807, %v282
    %v1810 = vadd.f32 %v1808, %v1774
    %v1811 = vadd.f32 %v1809, %v1779
    %v1812 = vxor.u32 %v1810, 2147483648
    %v1813 = vxor.u32 %v1811, 2147483648
    %v1814 = vmul.f32 %v1812, 1.442695
    %v1815 = vpow.pop %v1814
    %v1816 = vmul.f32 %v1813, 1.442695
    %v1817 = vpow.pop %v1816
    %v1818 = vadd.f32 %v1815, 1.0
    %v1819 = vadd.f32 %v1817, 1.0
    %v1820 = vrcp.pop %v1818
    %v1821 = vmul.f32 1.0, %v1820
    %v1822 = vrcp.pop %v1819
    %v1823 = vmul.f32 1.0, %v1822
    %v1824 = vmul.f32 %v303, %v1805
    %v1825 = vmul.f32 %v308, %v1805
    %v1826 = vadd.f32 %v1824, %v315
    %v1827 = vadd.f32 %v1825, %v320
    %v1828 = vadd.f32 %v1826, %v1784
    %v1829 = vadd.f32 %v1827, %v1789
    %v1830 = vxor.u32 %v1828, 2147483648
    %v1831 = vxor.u32 %v1829, 2147483648
    %v1832 = vmul.f32 %v1830, 1.442695
    %v1833 = vpow.pop %v1832
    %v1834 = vmul.f32 %v1831, 1.442695
    %v1835 = vpow.pop %v1834
    %v1836 = vadd.f32 %v1833, 1.0
    %v1837 = vadd.f32 %v1835, 1.0
    %v1838 = vrcp.pop %v1836
    %v1839 = vmul.f32 1.0, %v1838
    %v1840 = vrcp.pop %v1837
    %v1841 = vmul.f32 1.0, %v1840
    %v1842 = vmul.f32 %v341, %v1805
    %v1843 = vmul.f32 %v346, %v1805
    %v1844 = vadd.f32 %v1842, %v353
    %v1845 = vadd.f32 %v1843, %v358
    %v1846 = vadd.f32 %v1794, %v365
    %v1847 = vadd.f32 %v1799, %v370
    %v1848 = vmul.f32 %v1821, %v1846
    %v1849 = vmul.f32 %v1823, %v1847
    %v1850 = vadd.f32 %v1844, %v1848
    %v1851 = vadd.f32 %v1845, %v1849
    %v1852 = vtanh.pop %v1850
    %v1853 = vtanh.pop %v1851
    %v1854 = vsub.f32 1.0, %v1839
    %v1855 = vsub.f32 1.0, %v1841
    %v1856 = vmul.f32 %v1854, %v1852
    %v1857 = vmul.f32 %v1855, %v1853
    %v1858 = vmul.f32 %v1839, %v1698
    %v1859 = vmul.f32 %v1841, %v1699
    %v1860 = vadd.f32 %v1856, %v1858
    %v1861 = vadd.f32 %v1857, %v1859
    %v1862 = vld [vmem:[%s0 + $0xa] sm:$0x1]
    %v1863 = vmul.f32 %v1862, %v140
    %v1864 = vmul.f32 %v394, %v1863
    %v1865 = vmul.f32 %v397, %v1704
    %v1866 = vadd.f32 %v1864, %v1865
    %v1867 = vrcp.pop %v1866
    %v1868 = vmul.f32 %v1863, %v1867
    %1869 = vmatprep.subr.mxu0 0.0
    %1870 = vmatpush1.msra.mxu0 %v1860
    %1871 = vmatprep.subr.mxu0 0.0
    %1872 = vmatpush1.msra.mxu0 %v1861
    %1873 = vmatprep.subr.mxu0 0.0
    %1874 = vmatpush1.msra.mxu0 0.0
    %1875 = vmatprep.subr.mxu0 0.0
    %1876 = vmatpush1.msra.mxu0 0.0
    %1877 = vmatprep.subr.mxu0 0.0
    %1878 = vmatpush1.msra.mxu0 0.0
    %1879 = vmatprep.subr.mxu0 0.0
    %1880 = vmatpush1.msra.mxu0 0.0
    %1881 = vmatprep.subr.mxu0 0.0
    %1882 = vmatpush1.msra.mxu0 0.0
    %1883 = vmatprep.subr.mxu0 0.0
    %1884 = vmatpush1.msra.mxu0 0.0
    %1885 = vmatprep.subr.mxu0 0.0
    %1886 = vmatpush1.msra.mxu0 0.0
    %1887 = vmatprep.subr.mxu0 0.0
    %1888 = vmatpush1.msra.mxu0 0.0
    %1889 = vmatprep.subr.mxu0 0.0
    %1890 = vmatpush1.msra.mxu0 0.0
    %1891 = vmatprep.subr.mxu0 0.0
    %1892 = vmatpush1.msra.mxu0 0.0
    %1893 = vmatprep.subr.mxu0 0.0
    %1894 = vmatpush1.msra.mxu0 0.0
    %1895 = vmatprep.subr.mxu0 0.0
    %1896 = vmatpush1.msra.mxu0 0.0
    %1897 = vmatprep.subr.mxu0 0.0
    %1898 = vmatpush1.msra.mxu0 0.0
    %1899 = vmatprep.subr.mxu0 0.0
    %1900 = vmatpush1.msra.mxu0 0.0
    %1901 = vmatprep.subr.mxu0 0.0
    %1902 = vmatpush1.msra.mxu0 0.0
    %1903 = vmatprep.subr.mxu0 0.0
    %1904 = vmatpush1.msra.mxu0 0.0
    %1905 = vmatprep.subr.mxu0 0.0
    %1906 = vmatpush1.msra.mxu0 0.0
    %1907 = vmatprep.subr.mxu0 0.0
    %1908 = vmatpush1.msra.mxu0 0.0
    %1909 = vmatprep.subr.mxu0 0.0
    %1910 = vmatpush1.msra.mxu0 0.0
    %1911 = vmatprep.subr.mxu0 0.0
    %1912 = vmatpush1.msra.mxu0 0.0
    %1913 = vmatprep.subr.mxu0 0.0
    %1914 = vmatpush1.msra.mxu0 0.0
    %1915 = vmatprep.subr.mxu0 0.0
    %1916 = vmatpush1.msra.mxu0 0.0
    %1917 = vmatprep.subr.mxu0 0.0
    %1918 = vmatpush1.msra.mxu0 0.0
    %1919 = vmatprep.subr.mxu0 0.0
    %1920 = vmatpush1.msra.mxu0 0.0
    %1921 = vmatprep.subr.mxu0 0.0
    %1922 = vmatpush1.msra.mxu0 0.0
    %1923 = vmatprep.subr.mxu0 0.0
    %1924 = vmatpush1.msra.mxu0 0.0
    %1925 = vmatprep.subr.mxu0 0.0
    %1926 = vmatpush1.msra.mxu0 0.0
    %1927 = vmatprep.subr.mxu0 0.0
    %1928 = vmatpush1.msra.mxu0 0.0
    %1929 = vmatprep.subr.mxu0 0.0
    %1930 = vmatpush1.msra.mxu0 0.0
    %1931 = vmatprep.subr.mxu0 0.0
    %1932 = vmatpush1.msra.mxu0 0.0
    %1933 = vmatprep.mubr.f32.mxu0 0.0
    %1934 = vmatmul.mubr.f32.gmra.mrb[0].mxu0 %v146
    %v1935 = vpop.f32.mrb[0].mxu0
    %v1936 = vadd.f32 0.0, %v1935
    %v1937 = vpop.f32.mrb[0].mxu0
    %1938 = vmatprep.mubr.f32.mxu0 0.0
    %1939 = vmatmul.mubr.f32.gmra.mrb[0].mxu0 %v149
    %v1940 = vpop.f32.mrb[0].mxu0
    %v1941 = vadd.f32 0.0, %v1940
    %v1942 = vpop.f32.mrb[0].mxu0
    %1943 = vmatprep.mubr.f32.mxu0 0.0
    %1944 = vmatmul.mubr.f32.gmra.mrb[0].mxu0 %v152
    %v1945 = vpop.f32.mrb[0].mxu0
    %v1946 = vadd.f32 0.0, %v1945
    %v1947 = vpop.f32.mrb[0].mxu0
    %1948 = vmatprep.mubr.f32.mxu0 0.0
    %1949 = vmatmul.mubr.f32.gmra.mrb[0].mxu0 %v155
    %v1950 = vpop.f32.mrb[0].mxu0
    %v1951 = vadd.f32 0.0, %v1950
    %v1952 = vpop.f32.mrb[0].mxu0
    %1953 = vmatprep.mubr.f32.mxu0 0.0
    %1954 = vmatmul.mubr.f32.gmra.mrb[0].mxu0 %v158
    %v1955 = vpop.f32.mrb[0].mxu0
    %v1956 = vadd.f32 0.0, %v1955
    %v1957 = vpop.f32.mrb[0].mxu0
    %1958 = vmatprep.mubr.f32.mxu0 0.0
    %1959 = vmatmul.mubr.f32.gmra.mrb[0].mxu0 %v161
    %v1960 = vpop.f32.mrb[0].mxu0
    %v1961 = vadd.f32 0.0, %v1960
    %v1962 = vpop.f32.mrb[0].mxu0
    %1963 = vdwg.mxu0
    %v1964 = vlaneseq
    %v1965 = vshrl.u32 %v1964, 7
    %v1966 = vsub.s32 0, %v1965
    %v1967 = vrot.slane %v1868, %v1966
    %v1968 = vmul.f32 %v261, %v1967
    %v1969 = vmul.f32 %v266, %v1967
    %v1970 = vadd.f32 %v1968, %v277
    %v1971 = vadd.f32 %v1969, %v282
    %v1972 = vadd.f32 %v1970, %v1936
    %v1973 = vadd.f32 %v1971, %v1941
    %v1974 = vxor.u32 %v1972, 2147483648
    %v1975 = vxor.u32 %v1973, 2147483648
    %v1976 = vmul.f32 %v1974, 1.442695
    %v1977 = vpow.pop %v1976
    %v1978 = vmul.f32 %v1975, 1.442695
    %v1979 = vpow.pop %v1978
    %v1980 = vadd.f32 %v1977, 1.0
    %v1981 = vadd.f32 %v1979, 1.0
    %v1982 = vrcp.pop %v1980
    %v1983 = vmul.f32 1.0, %v1982
    %v1984 = vrcp.pop %v1981
    %v1985 = vmul.f32 1.0, %v1984
    %v1986 = vmul.f32 %v303, %v1967
    %v1987 = vmul.f32 %v308, %v1967
    %v1988 = vadd.f32 %v1986, %v315
    %v1989 = vadd.f32 %v1987, %v320
    %v1990 = vadd.f32 %v1988, %v1946
    %v1991 = vadd.f32 %v1989, %v1951
    %v1992 = vxor.u32 %v1990, 2147483648
    %v1993 = vxor.u32 %v1991, 2147483648
    %v1994 = vmul.f32 %v1992, 1.442695
    %v1995 = vpow.pop %v1994
    %v1996 = vmul.f32 %v1993, 1.442695
    %v1997 = vpow.pop %v1996
    %v1998 = vadd.f32 %v1995, 1.0
    %v1999 = vadd.f32 %v1997, 1.0
    %v2000 = vrcp.pop %v1998
    %v2001 = vmul.f32 1.0, %v2000
    %v2002 = vrcp.pop %v1999
    %v2003 = vmul.f32 1.0, %v2002
    %v2004 = vmul.f32 %v341, %v1967
    %v2005 = vmul.f32 %v346, %v1967
    %v2006 = vadd.f32 %v2004, %v353
    %v2007 = vadd.f32 %v2005, %v358
    %v2008 = vadd.f32 %v1956, %v365
    %v2009 = vadd.f32 %v1961, %v370
    %v2010 = vmul.f32 %v1983, %v2008
    %v2011 = vmul.f32 %v1985, %v2009
    %v2012 = vadd.f32 %v2006, %v2010
    %v2013 = vadd.f32 %v2007, %v2011
    %v2014 = vtanh.pop %v2012
    %v2015 = vtanh.pop %v2013
    %v2016 = vsub.f32 1.0, %v2001
    %v2017 = vsub.f32 1.0, %v2003
    %v2018 = vmul.f32 %v2016, %v2014
    %v2019 = vmul.f32 %v2017, %v2015
    %v2020 = vmul.f32 %v2001, %v1860
    %v2021 = vmul.f32 %v2003, %v1861
    %v2022 = vadd.f32 %v2018, %v2020
    %v2023 = vadd.f32 %v2019, %v2021
    %v2024 = vld [vmem:[%s0 + $0xb] sm:$0x1]
    %v2025 = vmul.f32 %v2024, %v392
    %v2026 = vmul.f32 %v394, %v2025
    %v2027 = vmul.f32 %v397, %v1866
    %v2028 = vadd.f32 %v2026, %v2027
    %v2029 = vrcp.pop %v2028
    %v2030 = vmul.f32 %v2025, %v2029
    %2031 = vmatprep.subr.mxu0 0.0
    %2032 = vmatpush1.msra.mxu0 %v2022
    %2033 = vmatprep.subr.mxu0 0.0
    %2034 = vmatpush1.msra.mxu0 %v2023
    %2035 = vmatprep.subr.mxu0 0.0
    %2036 = vmatpush1.msra.mxu0 0.0
    %2037 = vmatprep.subr.mxu0 0.0
    %2038 = vmatpush1.msra.mxu0 0.0
    %2039 = vmatprep.subr.mxu0 0.0
    %2040 = vmatpush1.msra.mxu0 0.0
    %2041 = vmatprep.subr.mxu0 0.0
    %2042 = vmatpush1.msra.mxu0 0.0
    %2043 = vmatprep.subr.mxu0 0.0
    %2044 = vmatpush1.msra.mxu0 0.0
    %2045 = vmatprep.subr.mxu0 0.0
    %2046 = vmatpush1.msra.mxu0 0.0
    %2047 = vmatprep.subr.mxu0 0.0
    %2048 = vmatpush1.msra.mxu0 0.0
    %2049 = vmatprep.subr.mxu0 0.0
    %2050 = vmatpush1.msra.mxu0 0.0
    %2051 = vmatprep.subr.mxu0 0.0
    %2052 = vmatpush1.msra.mxu0 0.0
    %2053 = vmatprep.subr.mxu0 0.0
    %2054 = vmatpush1.msra.mxu0 0.0
    %2055 = vmatprep.subr.mxu0 0.0
    %2056 = vmatpush1.msra.mxu0 0.0
    %2057 = vmatprep.subr.mxu0 0.0
    %2058 = vmatpush1.msra.mxu0 0.0
    %2059 = vmatprep.subr.mxu0 0.0
    %2060 = vmatpush1.msra.mxu0 0.0
    %2061 = vmatprep.subr.mxu0 0.0
    %2062 = vmatpush1.msra.mxu0 0.0
    %2063 = vmatprep.subr.mxu0 0.0
    %2064 = vmatpush1.msra.mxu0 0.0
    %2065 = vmatprep.subr.mxu0 0.0
    %2066 = vmatpush1.msra.mxu0 0.0
    %2067 = vmatprep.subr.mxu0 0.0
    %2068 = vmatpush1.msra.mxu0 0.0
    %2069 = vmatprep.subr.mxu0 0.0
    %2070 = vmatpush1.msra.mxu0 0.0
    %2071 = vmatprep.subr.mxu0 0.0
    %2072 = vmatpush1.msra.mxu0 0.0
    %2073 = vmatprep.subr.mxu0 0.0
    %2074 = vmatpush1.msra.mxu0 0.0
    %2075 = vmatprep.subr.mxu0 0.0
    %2076 = vmatpush1.msra.mxu0 0.0
    %2077 = vmatprep.subr.mxu0 0.0
    %2078 = vmatpush1.msra.mxu0 0.0
    %2079 = vmatprep.subr.mxu0 0.0
    %2080 = vmatpush1.msra.mxu0 0.0
    %2081 = vmatprep.subr.mxu0 0.0
    %2082 = vmatpush1.msra.mxu0 0.0
    %2083 = vmatprep.subr.mxu0 0.0
    %2084 = vmatpush1.msra.mxu0 0.0
    %2085 = vmatprep.subr.mxu0 0.0
    %2086 = vmatpush1.msra.mxu0 0.0
    %2087 = vmatprep.subr.mxu0 0.0
    %2088 = vmatpush1.msra.mxu0 0.0
    %2089 = vmatprep.subr.mxu0 0.0
    %2090 = vmatpush1.msra.mxu0 0.0
    %2091 = vmatprep.subr.mxu0 0.0
    %2092 = vmatpush1.msra.mxu0 0.0
    %2093 = vmatprep.subr.mxu0 0.0
    %2094 = vmatpush1.msra.mxu0 0.0
    %2095 = vmatprep.mubr.f32.mxu0 0.0
    %2096 = vmatmul.mubr.f32.gmra.mrb[0].mxu0 %v146
    %v2097 = vpop.f32.mrb[0].mxu0
    %v2098 = vadd.f32 0.0, %v2097
    %v2099 = vpop.f32.mrb[0].mxu0
    %2100 = vmatprep.mubr.f32.mxu0 0.0
    %2101 = vmatmul.mubr.f32.gmra.mrb[0].mxu0 %v149
    %v2102 = vpop.f32.mrb[0].mxu0
    %v2103 = vadd.f32 0.0, %v2102
    %v2104 = vpop.f32.mrb[0].mxu0
    %2105 = vmatprep.mubr.f32.mxu0 0.0
    %2106 = vmatmul.mubr.f32.gmra.mrb[0].mxu0 %v152
    %v2107 = vpop.f32.mrb[0].mxu0
    %v2108 = vadd.f32 0.0, %v2107
    %v2109 = vpop.f32.mrb[0].mxu0
    %2110 = vmatprep.mubr.f32.mxu0 0.0
    %2111 = vmatmul.mubr.f32.gmra.mrb[0].mxu0 %v155
    %v2112 = vpop.f32.mrb[0].mxu0
    %v2113 = vadd.f32 0.0, %v2112
    %v2114 = vpop.f32.mrb[0].mxu0
    %2115 = vmatprep.mubr.f32.mxu0 0.0
    %2116 = vmatmul.mubr.f32.gmra.mrb[0].mxu0 %v158
    %v2117 = vpop.f32.mrb[0].mxu0
    %v2118 = vadd.f32 0.0, %v2117
    %v2119 = vpop.f32.mrb[0].mxu0
    %2120 = vmatprep.mubr.f32.mxu0 0.0
    %2121 = vmatmul.mubr.f32.gmra.mrb[0].mxu0 %v161
    %v2122 = vpop.f32.mrb[0].mxu0
    %v2123 = vadd.f32 0.0, %v2122
    %v2124 = vpop.f32.mrb[0].mxu0
    %2125 = vdwg.mxu0
    %v2126 = vlaneseq
    %v2127 = vshrl.u32 %v2126, 7
    %v2128 = vsub.s32 0, %v2127
    %v2129 = vrot.slane %v2030, %v2128
    %v2130 = vmul.f32 %v261, %v2129
    %v2131 = vmul.f32 %v266, %v2129
    %v2132 = vadd.f32 %v2130, %v277
    %v2133 = vadd.f32 %v2131, %v282
    %v2134 = vadd.f32 %v2132, %v2098
    %v2135 = vadd.f32 %v2133, %v2103
    %v2136 = vxor.u32 %v2134, 2147483648
    %v2137 = vxor.u32 %v2135, 2147483648
    %v2138 = vmul.f32 %v2136, 1.442695
    %v2139 = vpow.pop %v2138
    %v2140 = vmul.f32 %v2137, 1.442695
    %v2141 = vpow.pop %v2140
    %v2142 = vadd.f32 %v2139, 1.0
    %v2143 = vadd.f32 %v2141, 1.0
    %v2144 = vrcp.pop %v2142
    %v2145 = vmul.f32 1.0, %v2144
    %v2146 = vrcp.pop %v2143
    %v2147 = vmul.f32 1.0, %v2146
    %v2148 = vmul.f32 %v303, %v2129
    %v2149 = vmul.f32 %v308, %v2129
    %v2150 = vadd.f32 %v2148, %v315
    %v2151 = vadd.f32 %v2149, %v320
    %v2152 = vadd.f32 %v2150, %v2108
    %v2153 = vadd.f32 %v2151, %v2113
    %v2154 = vxor.u32 %v2152, 2147483648
    %v2155 = vxor.u32 %v2153, 2147483648
    %v2156 = vmul.f32 %v2154, 1.442695
    %v2157 = vpow.pop %v2156
    %v2158 = vmul.f32 %v2155, 1.442695
    %v2159 = vpow.pop %v2158
    %v2160 = vadd.f32 %v2157, 1.0
    %v2161 = vadd.f32 %v2159, 1.0
    %v2162 = vrcp.pop %v2160
    %v2163 = vmul.f32 1.0, %v2162
    %v2164 = vrcp.pop %v2161
    %v2165 = vmul.f32 1.0, %v2164
    %v2166 = vmul.f32 %v341, %v2129
    %v2167 = vmul.f32 %v346, %v2129
    %v2168 = vadd.f32 %v2166, %v353
    %v2169 = vadd.f32 %v2167, %v358
    %v2170 = vadd.f32 %v2118, %v365
    %v2171 = vadd.f32 %v2123, %v370
    %v2172 = vmul.f32 %v2145, %v2170
    %v2173 = vmul.f32 %v2147, %v2171
    %v2174 = vadd.f32 %v2168, %v2172
    %v2175 = vadd.f32 %v2169, %v2173
    %v2176 = vtanh.pop %v2174
    %v2177 = vtanh.pop %v2175
    %v2178 = vsub.f32 1.0, %v2163
    %v2179 = vsub.f32 1.0, %v2165
    %v2180 = vmul.f32 %v2178, %v2176
    %v2181 = vmul.f32 %v2179, %v2177
    %v2182 = vmul.f32 %v2163, %v2022
    %v2183 = vmul.f32 %v2165, %v2023
    %v2184 = vadd.f32 %v2180, %v2182
    %v2185 = vadd.f32 %v2181, %v2183
    %v2186 = vld [vmem:[%s0 + $0xc] sm:$0x1]
    %v2187 = vmul.f32 %v2186, %v560
    %v2188 = vmul.f32 %v394, %v2187
    %v2189 = vmul.f32 %v397, %v2028
    %v2190 = vadd.f32 %v2188, %v2189
    %v2191 = vrcp.pop %v2190
    %v2192 = vmul.f32 %v2187, %v2191
    %2193 = vmatprep.subr.mxu0 0.0
    %2194 = vmatpush1.msra.mxu0 %v2184
    %2195 = vmatprep.subr.mxu0 0.0
    %2196 = vmatpush1.msra.mxu0 %v2185
    %2197 = vmatprep.subr.mxu0 0.0
    %2198 = vmatpush1.msra.mxu0 0.0
    %2199 = vmatprep.subr.mxu0 0.0
    %2200 = vmatpush1.msra.mxu0 0.0
    %2201 = vmatprep.subr.mxu0 0.0
    %2202 = vmatpush1.msra.mxu0 0.0
    %2203 = vmatprep.subr.mxu0 0.0
    %2204 = vmatpush1.msra.mxu0 0.0
    %2205 = vmatprep.subr.mxu0 0.0
    %2206 = vmatpush1.msra.mxu0 0.0
    %2207 = vmatprep.subr.mxu0 0.0
    %2208 = vmatpush1.msra.mxu0 0.0
    %2209 = vmatprep.subr.mxu0 0.0
    %2210 = vmatpush1.msra.mxu0 0.0
    %2211 = vmatprep.subr.mxu0 0.0
    %2212 = vmatpush1.msra.mxu0 0.0
    %2213 = vmatprep.subr.mxu0 0.0
    %2214 = vmatpush1.msra.mxu0 0.0
    %2215 = vmatprep.subr.mxu0 0.0
    %2216 = vmatpush1.msra.mxu0 0.0
    %2217 = vmatprep.subr.mxu0 0.0
    %2218 = vmatpush1.msra.mxu0 0.0
    %2219 = vmatprep.subr.mxu0 0.0
    %2220 = vmatpush1.msra.mxu0 0.0
    %2221 = vmatprep.subr.mxu0 0.0
    %2222 = vmatpush1.msra.mxu0 0.0
    %2223 = vmatprep.subr.mxu0 0.0
    %2224 = vmatpush1.msra.mxu0 0.0
    %2225 = vmatprep.subr.mxu0 0.0
    %2226 = vmatpush1.msra.mxu0 0.0
    %2227 = vmatprep.subr.mxu0 0.0
    %2228 = vmatpush1.msra.mxu0 0.0
    %2229 = vmatprep.subr.mxu0 0.0
    %2230 = vmatpush1.msra.mxu0 0.0
    %2231 = vmatprep.subr.mxu0 0.0
    %2232 = vmatpush1.msra.mxu0 0.0
    %2233 = vmatprep.subr.mxu0 0.0
    %2234 = vmatpush1.msra.mxu0 0.0
    %2235 = vmatprep.subr.mxu0 0.0
    %2236 = vmatpush1.msra.mxu0 0.0
    %2237 = vmatprep.subr.mxu0 0.0
    %2238 = vmatpush1.msra.mxu0 0.0
    %2239 = vmatprep.subr.mxu0 0.0
    %2240 = vmatpush1.msra.mxu0 0.0
    %2241 = vmatprep.subr.mxu0 0.0
    %2242 = vmatpush1.msra.mxu0 0.0
    %2243 = vmatprep.subr.mxu0 0.0
    %2244 = vmatpush1.msra.mxu0 0.0
    %2245 = vmatprep.subr.mxu0 0.0
    %2246 = vmatpush1.msra.mxu0 0.0
    %2247 = vmatprep.subr.mxu0 0.0
    %2248 = vmatpush1.msra.mxu0 0.0
    %2249 = vmatprep.subr.mxu0 0.0
    %2250 = vmatpush1.msra.mxu0 0.0
    %2251 = vmatprep.subr.mxu0 0.0
    %2252 = vmatpush1.msra.mxu0 0.0
    %2253 = vmatprep.subr.mxu0 0.0
    %2254 = vmatpush1.msra.mxu0 0.0
    %2255 = vmatprep.subr.mxu0 0.0
    %2256 = vmatpush1.msra.mxu0 0.0
    %2257 = vmatprep.mubr.f32.mxu0 0.0
    %2258 = vmatmul.mubr.f32.gmra.mrb[0].mxu0 %v146
    %v2259 = vpop.f32.mrb[0].mxu0
    %v2260 = vadd.f32 0.0, %v2259
    %v2261 = vpop.f32.mrb[0].mxu0
    %2262 = vmatprep.mubr.f32.mxu0 0.0
    %2263 = vmatmul.mubr.f32.gmra.mrb[0].mxu0 %v149
    %v2264 = vpop.f32.mrb[0].mxu0
    %v2265 = vadd.f32 0.0, %v2264
    %v2266 = vpop.f32.mrb[0].mxu0
    %2267 = vmatprep.mubr.f32.mxu0 0.0
    %2268 = vmatmul.mubr.f32.gmra.mrb[0].mxu0 %v152
    %v2269 = vpop.f32.mrb[0].mxu0
    %v2270 = vadd.f32 0.0, %v2269
    %v2271 = vpop.f32.mrb[0].mxu0
    %2272 = vmatprep.mubr.f32.mxu0 0.0
    %2273 = vmatmul.mubr.f32.gmra.mrb[0].mxu0 %v155
    %v2274 = vpop.f32.mrb[0].mxu0
    %v2275 = vadd.f32 0.0, %v2274
    %v2276 = vpop.f32.mrb[0].mxu0
    %2277 = vmatprep.mubr.f32.mxu0 0.0
    %2278 = vmatmul.mubr.f32.gmra.mrb[0].mxu0 %v158
    %v2279 = vpop.f32.mrb[0].mxu0
    %v2280 = vadd.f32 0.0, %v2279
    %v2281 = vpop.f32.mrb[0].mxu0
    %2282 = vmatprep.mubr.f32.mxu0 0.0
    %2283 = vmatmul.mubr.f32.gmra.mrb[0].mxu0 %v161
    %v2284 = vpop.f32.mrb[0].mxu0
    %v2285 = vadd.f32 0.0, %v2284
    %v2286 = vpop.f32.mrb[0].mxu0
    %2287 = vdwg.mxu0
    %v2288 = vlaneseq
    %v2289 = vshrl.u32 %v2288, 7
    %v2290 = vsub.s32 0, %v2289
    %v2291 = vrot.slane %v2192, %v2290
    %v2292 = vmul.f32 %v261, %v2291
    %v2293 = vmul.f32 %v266, %v2291
    %v2294 = vadd.f32 %v2292, %v277
    %v2295 = vadd.f32 %v2293, %v282
    %v2296 = vadd.f32 %v2294, %v2260
    %v2297 = vadd.f32 %v2295, %v2265
    %v2298 = vxor.u32 %v2296, 2147483648
    %v2299 = vxor.u32 %v2297, 2147483648
    %v2300 = vmul.f32 %v2298, 1.442695
    %v2301 = vpow.pop %v2300
    %v2302 = vmul.f32 %v2299, 1.442695
    %v2303 = vpow.pop %v2302
    %v2304 = vadd.f32 %v2301, 1.0
    %v2305 = vadd.f32 %v2303, 1.0
    %v2306 = vrcp.pop %v2304
    %v2307 = vmul.f32 1.0, %v2306
    %v2308 = vrcp.pop %v2305
    %v2309 = vmul.f32 1.0, %v2308
    %v2310 = vmul.f32 %v303, %v2291
    %v2311 = vmul.f32 %v308, %v2291
    %v2312 = vadd.f32 %v2310, %v315
    %v2313 = vadd.f32 %v2311, %v320
    %v2314 = vadd.f32 %v2312, %v2270
    %v2315 = vadd.f32 %v2313, %v2275
    %v2316 = vxor.u32 %v2314, 2147483648
    %v2317 = vxor.u32 %v2315, 2147483648
    %v2318 = vmul.f32 %v2316, 1.442695
    %v2319 = vpow.pop %v2318
    %v2320 = vmul.f32 %v2317, 1.442695
    %v2321 = vpow.pop %v2320
    %v2322 = vadd.f32 %v2319, 1.0
    %v2323 = vadd.f32 %v2321, 1.0
    %v2324 = vrcp.pop %v2322
    %v2325 = vmul.f32 1.0, %v2324
    %v2326 = vrcp.pop %v2323
    %v2327 = vmul.f32 1.0, %v2326
    %v2328 = vmul.f32 %v341, %v2291
    %v2329 = vmul.f32 %v346, %v2291
    %v2330 = vadd.f32 %v2328, %v353
    %v2331 = vadd.f32 %v2329, %v358
    %v2332 = vadd.f32 %v2280, %v365
    %v2333 = vadd.f32 %v2285, %v370
    %v2334 = vmul.f32 %v2307, %v2332
    %v2335 = vmul.f32 %v2309, %v2333
    %v2336 = vadd.f32 %v2330, %v2334
    %v2337 = vadd.f32 %v2331, %v2335
    %v2338 = vtanh.pop %v2336
    %v2339 = vtanh.pop %v2337
    %v2340 = vsub.f32 1.0, %v2325
    %v2341 = vsub.f32 1.0, %v2327
    %v2342 = vmul.f32 %v2340, %v2338
    %v2343 = vmul.f32 %v2341, %v2339
    %v2344 = vmul.f32 %v2325, %v2184
    %v2345 = vmul.f32 %v2327, %v2185
    %v2346 = vadd.f32 %v2342, %v2344
    %v2347 = vadd.f32 %v2343, %v2345
    %v2348 = vld [vmem:[%s0 + $0xd] sm:$0x1]
    %v2349 = vmul.f32 %v2348, %v725
    %v2350 = vmul.f32 %v394, %v2349
    %v2351 = vmul.f32 %v397, %v2190
    %v2352 = vadd.f32 %v2350, %v2351
    %v2353 = vrcp.pop %v2352
    %v2354 = vmul.f32 %v2349, %v2353
    %2355 = vmatprep.subr.mxu0 0.0
    %2356 = vmatpush1.msra.mxu0 %v2346
    %2357 = vmatprep.subr.mxu0 0.0
    %2358 = vmatpush1.msra.mxu0 %v2347
    %2359 = vmatprep.subr.mxu0 0.0
    %2360 = vmatpush1.msra.mxu0 0.0
    %2361 = vmatprep.subr.mxu0 0.0
    %2362 = vmatpush1.msra.mxu0 0.0
    %2363 = vmatprep.subr.mxu0 0.0
    %2364 = vmatpush1.msra.mxu0 0.0
    %2365 = vmatprep.subr.mxu0 0.0
    %2366 = vmatpush1.msra.mxu0 0.0
    %2367 = vmatprep.subr.mxu0 0.0
    %2368 = vmatpush1.msra.mxu0 0.0
    %2369 = vmatprep.subr.mxu0 0.0
    %2370 = vmatpush1.msra.mxu0 0.0
    %2371 = vmatprep.subr.mxu0 0.0
    %2372 = vmatpush1.msra.mxu0 0.0
    %2373 = vmatprep.subr.mxu0 0.0
    %2374 = vmatpush1.msra.mxu0 0.0
    %2375 = vmatprep.subr.mxu0 0.0
    %2376 = vmatpush1.msra.mxu0 0.0
    %2377 = vmatprep.subr.mxu0 0.0
    %2378 = vmatpush1.msra.mxu0 0.0
    %2379 = vmatprep.subr.mxu0 0.0
    %2380 = vmatpush1.msra.mxu0 0.0
    %2381 = vmatprep.subr.mxu0 0.0
    %2382 = vmatpush1.msra.mxu0 0.0
    %2383 = vmatprep.subr.mxu0 0.0
    %2384 = vmatpush1.msra.mxu0 0.0
    %2385 = vmatprep.subr.mxu0 0.0
    %2386 = vmatpush1.msra.mxu0 0.0
    %2387 = vmatprep.subr.mxu0 0.0
    %2388 = vmatpush1.msra.mxu0 0.0
    %2389 = vmatprep.subr.mxu0 0.0
    %2390 = vmatpush1.msra.mxu0 0.0
    %2391 = vmatprep.subr.mxu0 0.0
    %2392 = vmatpush1.msra.mxu0 0.0
    %2393 = vmatprep.subr.mxu0 0.0
    %2394 = vmatpush1.msra.mxu0 0.0
    %2395 = vmatprep.subr.mxu0 0.0
    %2396 = vmatpush1.msra.mxu0 0.0
    %2397 = vmatprep.subr.mxu0 0.0
    %2398 = vmatpush1.msra.mxu0 0.0
    %2399 = vmatprep.subr.mxu0 0.0
    %2400 = vmatpush1.msra.mxu0 0.0
    %2401 = vmatprep.subr.mxu0 0.0
    %2402 = vmatpush1.msra.mxu0 0.0
    %2403 = vmatprep.subr.mxu0 0.0
    %2404 = vmatpush1.msra.mxu0 0.0
    %2405 = vmatprep.subr.mxu0 0.0
    %2406 = vmatpush1.msra.mxu0 0.0
    %2407 = vmatprep.subr.mxu0 0.0
    %2408 = vmatpush1.msra.mxu0 0.0
    %2409 = vmatprep.subr.mxu0 0.0
    %2410 = vmatpush1.msra.mxu0 0.0
    %2411 = vmatprep.subr.mxu0 0.0
    %2412 = vmatpush1.msra.mxu0 0.0
    %2413 = vmatprep.subr.mxu0 0.0
    %2414 = vmatpush1.msra.mxu0 0.0
    %2415 = vmatprep.subr.mxu0 0.0
    %2416 = vmatpush1.msra.mxu0 0.0
    %2417 = vmatprep.subr.mxu0 0.0
    %2418 = vmatpush1.msra.mxu0 0.0
    %2419 = vmatprep.mubr.f32.mxu0 0.0
    %2420 = vmatmul.mubr.f32.gmra.mrb[0].mxu0 %v146
    %v2421 = vpop.f32.mrb[0].mxu0
    %v2422 = vadd.f32 0.0, %v2421
    %v2423 = vpop.f32.mrb[0].mxu0
    %2424 = vmatprep.mubr.f32.mxu0 0.0
    %2425 = vmatmul.mubr.f32.gmra.mrb[0].mxu0 %v149
    %v2426 = vpop.f32.mrb[0].mxu0
    %v2427 = vadd.f32 0.0, %v2426
    %v2428 = vpop.f32.mrb[0].mxu0
    %2429 = vmatprep.mubr.f32.mxu0 0.0
    %2430 = vmatmul.mubr.f32.gmra.mrb[0].mxu0 %v152
    %v2431 = vpop.f32.mrb[0].mxu0
    %v2432 = vadd.f32 0.0, %v2431
    %v2433 = vpop.f32.mrb[0].mxu0
    %2434 = vmatprep.mubr.f32.mxu0 0.0
    %2435 = vmatmul.mubr.f32.gmra.mrb[0].mxu0 %v155
    %v2436 = vpop.f32.mrb[0].mxu0
    %v2437 = vadd.f32 0.0, %v2436
    %v2438 = vpop.f32.mrb[0].mxu0
    %2439 = vmatprep.mubr.f32.mxu0 0.0
    %2440 = vmatmul.mubr.f32.gmra.mrb[0].mxu0 %v158
    %v2441 = vpop.f32.mrb[0].mxu0
    %v2442 = vadd.f32 0.0, %v2441
    %v2443 = vpop.f32.mrb[0].mxu0
    %2444 = vmatprep.mubr.f32.mxu0 0.0
    %2445 = vmatmul.mubr.f32.gmra.mrb[0].mxu0 %v161
    %v2446 = vpop.f32.mrb[0].mxu0
    %v2447 = vadd.f32 0.0, %v2446
    %v2448 = vpop.f32.mrb[0].mxu0
    %2449 = vdwg.mxu0
    %v2450 = vlaneseq
    %v2451 = vshrl.u32 %v2450, 7
    %v2452 = vsub.s32 0, %v2451
    %v2453 = vrot.slane %v2354, %v2452
    %v2454 = vmul.f32 %v261, %v2453
    %v2455 = vmul.f32 %v266, %v2453
    %v2456 = vadd.f32 %v2454, %v277
    %v2457 = vadd.f32 %v2455, %v282
    %v2458 = vadd.f32 %v2456, %v2422
    %v2459 = vadd.f32 %v2457, %v2427
    %v2460 = vxor.u32 %v2458, 2147483648
    %v2461 = vxor.u32 %v2459, 2147483648
    %v2462 = vmul.f32 %v2460, 1.442695
    %v2463 = vpow.pop %v2462
    %v2464 = vmul.f32 %v2461, 1.442695
    %v2465 = vpow.pop %v2464
    %v2466 = vadd.f32 %v2463, 1.0
    %v2467 = vadd.f32 %v2465, 1.0
    %v2468 = vrcp.pop %v2466
    %v2469 = vmul.f32 1.0, %v2468
    %v2470 = vrcp.pop %v2467
    %v2471 = vmul.f32 1.0, %v2470
    %v2472 = vmul.f32 %v303, %v2453
    %v2473 = vmul.f32 %v308, %v2453
    %v2474 = vadd.f32 %v2472, %v315
    %v2475 = vadd.f32 %v2473, %v320
    %v2476 = vadd.f32 %v2474, %v2432
    %v2477 = vadd.f32 %v2475, %v2437
    %v2478 = vxor.u32 %v2476, 2147483648
    %v2479 = vxor.u32 %v2477, 2147483648
    %v2480 = vmul.f32 %v2478, 1.442695
    %v2481 = vpow.pop %v2480
    %v2482 = vmul.f32 %v2479, 1.442695
    %v2483 = vpow.pop %v2482
    %v2484 = vadd.f32 %v2481, 1.0
    %v2485 = vadd.f32 %v2483, 1.0
    %v2486 = vrcp.pop %v2484
    %v2487 = vmul.f32 1.0, %v2486
    %v2488 = vrcp.pop %v2485
    %v2489 = vmul.f32 1.0, %v2488
    %v2490 = vmul.f32 %v341, %v2453
    %v2491 = vmul.f32 %v346, %v2453
    %v2492 = vadd.f32 %v2490, %v353
    %v2493 = vadd.f32 %v2491, %v358
    %v2494 = vadd.f32 %v2442, %v365
    %v2495 = vadd.f32 %v2447, %v370
    %v2496 = vmul.f32 %v2469, %v2494
    %v2497 = vmul.f32 %v2471, %v2495
    %v2498 = vadd.f32 %v2492, %v2496
    %v2499 = vadd.f32 %v2493, %v2497
    %v2500 = vtanh.pop %v2498
    %v2501 = vtanh.pop %v2499
    %v2502 = vsub.f32 1.0, %v2487
    %v2503 = vsub.f32 1.0, %v2489
    %v2504 = vmul.f32 %v2502, %v2500
    %v2505 = vmul.f32 %v2503, %v2501
    %v2506 = vmul.f32 %v2487, %v2346
    %v2507 = vmul.f32 %v2489, %v2347
    %v2508 = vadd.f32 %v2504, %v2506
    %v2509 = vadd.f32 %v2505, %v2507
    %v2510 = vld [vmem:[%s0 + $0xe] sm:$0x1]
    %v2511 = vmul.f32 %v2510, %v890
    %v2512 = vmul.f32 %v394, %v2511
    %v2513 = vmul.f32 %v397, %v2352
    %v2514 = vadd.f32 %v2512, %v2513
    %v2515 = vrcp.pop %v2514
    %v2516 = vmul.f32 %v2511, %v2515
    %2517 = vmatprep.subr.mxu0 0.0
    %2518 = vmatpush1.msra.mxu0 %v2508
    %2519 = vmatprep.subr.mxu0 0.0
    %2520 = vmatpush1.msra.mxu0 %v2509
    %2521 = vmatprep.subr.mxu0 0.0
    %2522 = vmatpush1.msra.mxu0 0.0
    %2523 = vmatprep.subr.mxu0 0.0
    %2524 = vmatpush1.msra.mxu0 0.0
    %2525 = vmatprep.subr.mxu0 0.0
    %2526 = vmatpush1.msra.mxu0 0.0
    %2527 = vmatprep.subr.mxu0 0.0
    %2528 = vmatpush1.msra.mxu0 0.0
    %2529 = vmatprep.subr.mxu0 0.0
    %2530 = vmatpush1.msra.mxu0 0.0
    %2531 = vmatprep.subr.mxu0 0.0
    %2532 = vmatpush1.msra.mxu0 0.0
    %2533 = vmatprep.subr.mxu0 0.0
    %2534 = vmatpush1.msra.mxu0 0.0
    %2535 = vmatprep.subr.mxu0 0.0
    %2536 = vmatpush1.msra.mxu0 0.0
    %2537 = vmatprep.subr.mxu0 0.0
    %2538 = vmatpush1.msra.mxu0 0.0
    %2539 = vmatprep.subr.mxu0 0.0
    %2540 = vmatpush1.msra.mxu0 0.0
    %2541 = vmatprep.subr.mxu0 0.0
    %2542 = vmatpush1.msra.mxu0 0.0
    %2543 = vmatprep.subr.mxu0 0.0
    %2544 = vmatpush1.msra.mxu0 0.0
    %2545 = vmatprep.subr.mxu0 0.0
    %2546 = vmatpush1.msra.mxu0 0.0
    %2547 = vmatprep.subr.mxu0 0.0
    %2548 = vmatpush1.msra.mxu0 0.0
    %2549 = vmatprep.subr.mxu0 0.0
    %2550 = vmatpush1.msra.mxu0 0.0
    %2551 = vmatprep.subr.mxu0 0.0
    %2552 = vmatpush1.msra.mxu0 0.0
    %2553 = vmatprep.subr.mxu0 0.0
    %2554 = vmatpush1.msra.mxu0 0.0
    %2555 = vmatprep.subr.mxu0 0.0
    %2556 = vmatpush1.msra.mxu0 0.0
    %2557 = vmatprep.subr.mxu0 0.0
    %2558 = vmatpush1.msra.mxu0 0.0
    %2559 = vmatprep.subr.mxu0 0.0
    %2560 = vmatpush1.msra.mxu0 0.0
    %2561 = vmatprep.subr.mxu0 0.0
    %2562 = vmatpush1.msra.mxu0 0.0
    %2563 = vmatprep.subr.mxu0 0.0
    %2564 = vmatpush1.msra.mxu0 0.0
    %2565 = vmatprep.subr.mxu0 0.0
    %2566 = vmatpush1.msra.mxu0 0.0
    %2567 = vmatprep.subr.mxu0 0.0
    %2568 = vmatpush1.msra.mxu0 0.0
    %2569 = vmatprep.subr.mxu0 0.0
    %2570 = vmatpush1.msra.mxu0 0.0
    %2571 = vmatprep.subr.mxu0 0.0
    %2572 = vmatpush1.msra.mxu0 0.0
    %2573 = vmatprep.subr.mxu0 0.0
    %2574 = vmatpush1.msra.mxu0 0.0
    %2575 = vmatprep.subr.mxu0 0.0
    %2576 = vmatpush1.msra.mxu0 0.0
    %2577 = vmatprep.subr.mxu0 0.0
    %2578 = vmatpush1.msra.mxu0 0.0
    %2579 = vmatprep.subr.mxu0 0.0
    %2580 = vmatpush1.msra.mxu0 0.0
    %2581 = vmatprep.mubr.f32.mxu0 0.0
    %2582 = vmatmul.mubr.f32.gmra.mrb[0].mxu0 %v146
    %v2583 = vpop.f32.mrb[0].mxu0
    %v2584 = vadd.f32 0.0, %v2583
    %v2585 = vpop.f32.mrb[0].mxu0
    %2586 = vmatprep.mubr.f32.mxu0 0.0
    %2587 = vmatmul.mubr.f32.gmra.mrb[0].mxu0 %v149
    %v2588 = vpop.f32.mrb[0].mxu0
    %v2589 = vadd.f32 0.0, %v2588
    %v2590 = vpop.f32.mrb[0].mxu0
    %2591 = vmatprep.mubr.f32.mxu0 0.0
    %2592 = vmatmul.mubr.f32.gmra.mrb[0].mxu0 %v152
    %v2593 = vpop.f32.mrb[0].mxu0
    %v2594 = vadd.f32 0.0, %v2593
    %v2595 = vpop.f32.mrb[0].mxu0
    %2596 = vmatprep.mubr.f32.mxu0 0.0
    %2597 = vmatmul.mubr.f32.gmra.mrb[0].mxu0 %v155
    %v2598 = vpop.f32.mrb[0].mxu0
    %v2599 = vadd.f32 0.0, %v2598
    %v2600 = vpop.f32.mrb[0].mxu0
    %2601 = vmatprep.mubr.f32.mxu0 0.0
    %2602 = vmatmul.mubr.f32.gmra.mrb[0].mxu0 %v158
    %v2603 = vpop.f32.mrb[0].mxu0
    %v2604 = vadd.f32 0.0, %v2603
    %v2605 = vpop.f32.mrb[0].mxu0
    %2606 = vmatprep.mubr.f32.mxu0 0.0
    %2607 = vmatmul.mubr.f32.gmra.mrb[0].mxu0 %v161
    %v2608 = vpop.f32.mrb[0].mxu0
    %v2609 = vadd.f32 0.0, %v2608
    %v2610 = vpop.f32.mrb[0].mxu0
    %2611 = vdwg.mxu0
    %v2612 = vlaneseq
    %v2613 = vshrl.u32 %v2612, 7
    %v2614 = vsub.s32 0, %v2613
    %v2615 = vrot.slane %v2516, %v2614
    %v2616 = vmul.f32 %v261, %v2615
    %v2617 = vmul.f32 %v266, %v2615
    %v2618 = vadd.f32 %v2616, %v277
    %v2619 = vadd.f32 %v2617, %v282
    %v2620 = vadd.f32 %v2618, %v2584
    %v2621 = vadd.f32 %v2619, %v2589
    %v2622 = vxor.u32 %v2620, 2147483648
    %v2623 = vxor.u32 %v2621, 2147483648
    %v2624 = vmul.f32 %v2622, 1.442695
    %v2625 = vpow.pop %v2624
    %v2626 = vmul.f32 %v2623, 1.442695
    %v2627 = vpow.pop %v2626
    %v2628 = vadd.f32 %v2625, 1.0
    %v2629 = vadd.f32 %v2627, 1.0
    %v2630 = vrcp.pop %v2628
    %v2631 = vmul.f32 1.0, %v2630
    %v2632 = vrcp.pop %v2629
    %v2633 = vmul.f32 1.0, %v2632
    %v2634 = vmul.f32 %v303, %v2615
    %v2635 = vmul.f32 %v308, %v2615
    %v2636 = vadd.f32 %v2634, %v315
    %v2637 = vadd.f32 %v2635, %v320
    %v2638 = vadd.f32 %v2636, %v2594
    %v2639 = vadd.f32 %v2637, %v2599
    %v2640 = vxor.u32 %v2638, 2147483648
    %v2641 = vxor.u32 %v2639, 2147483648
    %v2642 = vmul.f32 %v2640, 1.442695
    %v2643 = vpow.pop %v2642
    %v2644 = vmul.f32 %v2641, 1.442695
    %v2645 = vpow.pop %v2644
    %v2646 = vadd.f32 %v2643, 1.0
    %v2647 = vadd.f32 %v2645, 1.0
    %v2648 = vrcp.pop %v2646
    %v2649 = vmul.f32 1.0, %v2648
    %v2650 = vrcp.pop %v2647
    %v2651 = vmul.f32 1.0, %v2650
    %v2652 = vmul.f32 %v341, %v2615
    %v2653 = vmul.f32 %v346, %v2615
    %v2654 = vadd.f32 %v2652, %v353
    %v2655 = vadd.f32 %v2653, %v358
    %v2656 = vadd.f32 %v2604, %v365
    %v2657 = vadd.f32 %v2609, %v370
    %v2658 = vmul.f32 %v2631, %v2656
    %v2659 = vmul.f32 %v2633, %v2657
    %v2660 = vadd.f32 %v2654, %v2658
    %v2661 = vadd.f32 %v2655, %v2659
    %v2662 = vtanh.pop %v2660
    %v2663 = vtanh.pop %v2661
    %v2664 = vsub.f32 1.0, %v2649
    %v2665 = vsub.f32 1.0, %v2651
    %v2666 = vmul.f32 %v2664, %v2662
    %v2667 = vmul.f32 %v2665, %v2663
    %v2668 = vmul.f32 %v2649, %v2508
    %v2669 = vmul.f32 %v2651, %v2509
    %v2670 = vadd.f32 %v2666, %v2668
    %v2671 = vadd.f32 %v2667, %v2669
    %v2672 = vld [vmem:[%s0 + $0xf] sm:$0x1]
    %v2673 = vmul.f32 %v2672, %v140
    %v2674 = vmul.f32 %v394, %v2673
    %v2675 = vmul.f32 %v397, %v2514
    %v2676 = vadd.f32 %v2674, %v2675
    %v2677 = vrcp.pop %v2676
    %v2678 = vmul.f32 %v2673, %v2677
    %2679 = vmatprep.subr.mxu0 0.0
    %2680 = vmatpush1.msra.mxu0 %v2670
    %2681 = vmatprep.subr.mxu0 0.0
    %2682 = vmatpush1.msra.mxu0 %v2671
    %2683 = vmatprep.subr.mxu0 0.0
    %2684 = vmatpush1.msra.mxu0 0.0
    %2685 = vmatprep.subr.mxu0 0.0
    %2686 = vmatpush1.msra.mxu0 0.0
    %2687 = vmatprep.subr.mxu0 0.0
    %2688 = vmatpush1.msra.mxu0 0.0
    %2689 = vmatprep.subr.mxu0 0.0
    %2690 = vmatpush1.msra.mxu0 0.0
    %2691 = vmatprep.subr.mxu0 0.0
    %2692 = vmatpush1.msra.mxu0 0.0
    %2693 = vmatprep.subr.mxu0 0.0
    %2694 = vmatpush1.msra.mxu0 0.0
    %2695 = vmatprep.subr.mxu0 0.0
    %2696 = vmatpush1.msra.mxu0 0.0
    %2697 = vmatprep.subr.mxu0 0.0
    %2698 = vmatpush1.msra.mxu0 0.0
    %2699 = vmatprep.subr.mxu0 0.0
    %2700 = vmatpush1.msra.mxu0 0.0
    %2701 = vmatprep.subr.mxu0 0.0
    %2702 = vmatpush1.msra.mxu0 0.0
    %2703 = vmatprep.subr.mxu0 0.0
    %2704 = vmatpush1.msra.mxu0 0.0
    %2705 = vmatprep.subr.mxu0 0.0
    %2706 = vmatpush1.msra.mxu0 0.0
    %2707 = vmatprep.subr.mxu0 0.0
    %2708 = vmatpush1.msra.mxu0 0.0
    %2709 = vmatprep.subr.mxu0 0.0
    %2710 = vmatpush1.msra.mxu0 0.0
    %2711 = vmatprep.subr.mxu0 0.0
    %2712 = vmatpush1.msra.mxu0 0.0
    %2713 = vmatprep.subr.mxu0 0.0
    %2714 = vmatpush1.msra.mxu0 0.0
    %2715 = vmatprep.subr.mxu0 0.0
    %2716 = vmatpush1.msra.mxu0 0.0
    %2717 = vmatprep.subr.mxu0 0.0
    %2718 = vmatpush1.msra.mxu0 0.0
    %2719 = vmatprep.subr.mxu0 0.0
    %2720 = vmatpush1.msra.mxu0 0.0
    %2721 = vmatprep.subr.mxu0 0.0
    %2722 = vmatpush1.msra.mxu0 0.0
    %2723 = vmatprep.subr.mxu0 0.0
    %2724 = vmatpush1.msra.mxu0 0.0
    %2725 = vmatprep.subr.mxu0 0.0
    %2726 = vmatpush1.msra.mxu0 0.0
    %2727 = vmatprep.subr.mxu0 0.0
    %2728 = vmatpush1.msra.mxu0 0.0
    %2729 = vmatprep.subr.mxu0 0.0
    %2730 = vmatpush1.msra.mxu0 0.0
    %2731 = vmatprep.subr.mxu0 0.0
    %2732 = vmatpush1.msra.mxu0 0.0
    %2733 = vmatprep.subr.mxu0 0.0
    %2734 = vmatpush1.msra.mxu0 0.0
    %2735 = vmatprep.subr.mxu0 0.0
    %2736 = vmatpush1.msra.mxu0 0.0
    %2737 = vmatprep.subr.mxu0 0.0
    %2738 = vmatpush1.msra.mxu0 0.0
    %2739 = vmatprep.subr.mxu0 0.0
    %2740 = vmatpush1.msra.mxu0 0.0
    %2741 = vmatprep.subr.mxu0 0.0
    %2742 = vmatpush1.msra.mxu0 0.0
    %2743 = vmatprep.mubr.f32.mxu0 0.0
    %2744 = vmatmul.mubr.f32.gmra.mrb[0].mxu0 %v146
    %v2745 = vpop.f32.mrb[0].mxu0
    %v2746 = vadd.f32 0.0, %v2745
    %v2747 = vpop.f32.mrb[0].mxu0
    %2748 = vmatprep.mubr.f32.mxu0 0.0
    %2749 = vmatmul.mubr.f32.gmra.mrb[0].mxu0 %v149
    %v2750 = vpop.f32.mrb[0].mxu0
    %v2751 = vadd.f32 0.0, %v2750
    %v2752 = vpop.f32.mrb[0].mxu0
    %2753 = vmatprep.mubr.f32.mxu0 0.0
    %2754 = vmatmul.mubr.f32.gmra.mrb[0].mxu0 %v152
    %v2755 = vpop.f32.mrb[0].mxu0
    %v2756 = vadd.f32 0.0, %v2755
    %v2757 = vpop.f32.mrb[0].mxu0
    %2758 = vmatprep.mubr.f32.mxu0 0.0
    %2759 = vmatmul.mubr.f32.gmra.mrb[0].mxu0 %v155
    %v2760 = vpop.f32.mrb[0].mxu0
    %v2761 = vadd.f32 0.0, %v2760
    %v2762 = vpop.f32.mrb[0].mxu0
    %2763 = vmatprep.mubr.f32.mxu0 0.0
    %2764 = vmatmul.mubr.f32.gmra.mrb[0].mxu0 %v158
    %v2765 = vpop.f32.mrb[0].mxu0
    %v2766 = vadd.f32 0.0, %v2765
    %v2767 = vpop.f32.mrb[0].mxu0
    %2768 = vmatprep.mubr.f32.mxu0 0.0
    %2769 = vmatmul.mubr.f32.gmra.mrb[0].mxu0 %v161
    %v2770 = vpop.f32.mrb[0].mxu0
    %v2771 = vadd.f32 0.0, %v2770
    %v2772 = vpop.f32.mrb[0].mxu0
    %2773 = vdwg.mxu0
    %v2774 = vlaneseq
    %v2775 = vshrl.u32 %v2774, 7
    %v2776 = vsub.s32 0, %v2775
    %v2777 = vrot.slane %v2678, %v2776
    %v2778 = vmul.f32 %v261, %v2777
    %v2779 = vmul.f32 %v266, %v2777
    %v2780 = vadd.f32 %v2778, %v277
    %v2781 = vadd.f32 %v2779, %v282
    %v2782 = vadd.f32 %v2780, %v2746
    %v2783 = vadd.f32 %v2781, %v2751
    %v2784 = vxor.u32 %v2782, 2147483648
    %v2785 = vxor.u32 %v2783, 2147483648
    %v2786 = vmul.f32 %v2784, 1.442695
    %v2787 = vpow.pop %v2786
    %v2788 = vmul.f32 %v2785, 1.442695
    %v2789 = vpow.pop %v2788
    %v2790 = vadd.f32 %v2787, 1.0
    %v2791 = vadd.f32 %v2789, 1.0
    %v2792 = vrcp.pop %v2790
    %v2793 = vmul.f32 1.0, %v2792
    %v2794 = vrcp.pop %v2791
    %v2795 = vmul.f32 1.0, %v2794
    %v2796 = vmul.f32 %v303, %v2777
    %v2797 = vmul.f32 %v308, %v2777
    %v2798 = vadd.f32 %v2796, %v315
    %v2799 = vadd.f32 %v2797, %v320
    %v2800 = vadd.f32 %v2798, %v2756
    %v2801 = vadd.f32 %v2799, %v2761
    %v2802 = vxor.u32 %v2800, 2147483648
    %v2803 = vxor.u32 %v2801, 2147483648
    %v2804 = vmul.f32 %v2802, 1.442695
    %v2805 = vpow.pop %v2804
    %v2806 = vmul.f32 %v2803, 1.442695
    %v2807 = vpow.pop %v2806
    %v2808 = vadd.f32 %v2805, 1.0
    %v2809 = vadd.f32 %v2807, 1.0
    %v2810 = vrcp.pop %v2808
    %v2811 = vmul.f32 1.0, %v2810
    %v2812 = vrcp.pop %v2809
    %v2813 = vmul.f32 1.0, %v2812
    %v2814 = vmul.f32 %v341, %v2777
    %v2815 = vmul.f32 %v346, %v2777
    %v2816 = vadd.f32 %v2814, %v353
    %v2817 = vadd.f32 %v2815, %v358
    %v2818 = vadd.f32 %v2766, %v365
    %v2819 = vadd.f32 %v2771, %v370
    %v2820 = vmul.f32 %v2793, %v2818
    %v2821 = vmul.f32 %v2795, %v2819
    %v2822 = vadd.f32 %v2816, %v2820
    %v2823 = vadd.f32 %v2817, %v2821
    %v2824 = vtanh.pop %v2822
    %v2825 = vtanh.pop %v2823
    %v2826 = vsub.f32 1.0, %v2811
    %v2827 = vsub.f32 1.0, %v2813
    %v2828 = vmul.f32 %v2826, %v2824
    %v2829 = vmul.f32 %v2827, %v2825
    %v2830 = vmul.f32 %v2811, %v2670
    %v2831 = vmul.f32 %v2813, %v2671
    %v2832 = vadd.f32 %v2828, %v2830
    %v2833 = vadd.f32 %v2829, %v2831
    %v2834 = vld [vmem:[%s0 + $0x10] sm:$0x1]
    %v2835 = vmul.f32 %v2834, %v392
    %v2836 = vmul.f32 %v394, %v2835
    %v2837 = vmul.f32 %v397, %v2676
    %v2838 = vadd.f32 %v2836, %v2837
    %v2839 = vrcp.pop %v2838
    %v2840 = vmul.f32 %v2835, %v2839
    %2841 = vmatprep.subr.mxu0 0.0
    %2842 = vmatpush1.msra.mxu0 %v2832
    %2843 = vmatprep.subr.mxu0 0.0
    %2844 = vmatpush1.msra.mxu0 %v2833
    %2845 = vmatprep.subr.mxu0 0.0
    %2846 = vmatpush1.msra.mxu0 0.0
    %2847 = vmatprep.subr.mxu0 0.0
    %2848 = vmatpush1.msra.mxu0 0.0
    %2849 = vmatprep.subr.mxu0 0.0
    %2850 = vmatpush1.msra.mxu0 0.0
    %2851 = vmatprep.subr.mxu0 0.0
    %2852 = vmatpush1.msra.mxu0 0.0
    %2853 = vmatprep.subr.mxu0 0.0
    %2854 = vmatpush1.msra.mxu0 0.0
    %2855 = vmatprep.subr.mxu0 0.0
    %2856 = vmatpush1.msra.mxu0 0.0
    %2857 = vmatprep.subr.mxu0 0.0
    %2858 = vmatpush1.msra.mxu0 0.0
    %2859 = vmatprep.subr.mxu0 0.0
    %2860 = vmatpush1.msra.mxu0 0.0
    %2861 = vmatprep.subr.mxu0 0.0
    %2862 = vmatpush1.msra.mxu0 0.0
    %2863 = vmatprep.subr.mxu0 0.0
    %2864 = vmatpush1.msra.mxu0 0.0
    %2865 = vmatprep.subr.mxu0 0.0
    %2866 = vmatpush1.msra.mxu0 0.0
    %2867 = vmatprep.subr.mxu0 0.0
    %2868 = vmatpush1.msra.mxu0 0.0
    %2869 = vmatprep.subr.mxu0 0.0
    %2870 = vmatpush1.msra.mxu0 0.0
    %2871 = vmatprep.subr.mxu0 0.0
    %2872 = vmatpush1.msra.mxu0 0.0
    %2873 = vmatprep.subr.mxu0 0.0
    %2874 = vmatpush1.msra.mxu0 0.0
    %2875 = vmatprep.subr.mxu0 0.0
    %2876 = vmatpush1.msra.mxu0 0.0
    %2877 = vmatprep.subr.mxu0 0.0
    %2878 = vmatpush1.msra.mxu0 0.0
    %2879 = vmatprep.subr.mxu0 0.0
    %2880 = vmatpush1.msra.mxu0 0.0
    %2881 = vmatprep.subr.mxu0 0.0
    %2882 = vmatpush1.msra.mxu0 0.0
    %2883 = vmatprep.subr.mxu0 0.0
    %2884 = vmatpush1.msra.mxu0 0.0
    %2885 = vmatprep.subr.mxu0 0.0
    %2886 = vmatpush1.msra.mxu0 0.0
    %2887 = vmatprep.subr.mxu0 0.0
    %2888 = vmatpush1.msra.mxu0 0.0
    %2889 = vmatprep.subr.mxu0 0.0
    %2890 = vmatpush1.msra.mxu0 0.0
    %2891 = vmatprep.subr.mxu0 0.0
    %2892 = vmatpush1.msra.mxu0 0.0
    %2893 = vmatprep.subr.mxu0 0.0
    %2894 = vmatpush1.msra.mxu0 0.0
    %2895 = vmatprep.subr.mxu0 0.0
    %2896 = vmatpush1.msra.mxu0 0.0
    %2897 = vmatprep.subr.mxu0 0.0
    %2898 = vmatpush1.msra.mxu0 0.0
    %2899 = vmatprep.subr.mxu0 0.0
    %2900 = vmatpush1.msra.mxu0 0.0
    %2901 = vmatprep.subr.mxu0 0.0
    %2902 = vmatpush1.msra.mxu0 0.0
    %2903 = vmatprep.subr.mxu0 0.0
    %2904 = vmatpush1.msra.mxu0 0.0
    %2905 = vmatprep.mubr.f32.mxu0 0.0
    %2906 = vmatmul.mubr.f32.gmra.mrb[0].mxu0 %v146
    %v2907 = vpop.f32.mrb[0].mxu0
    %v2908 = vadd.f32 0.0, %v2907
    %v2909 = vpop.f32.mrb[0].mxu0
    %2910 = vmatprep.mubr.f32.mxu0 0.0
    %2911 = vmatmul.mubr.f32.gmra.mrb[0].mxu0 %v149
    %v2912 = vpop.f32.mrb[0].mxu0
    %v2913 = vadd.f32 0.0, %v2912
    %v2914 = vpop.f32.mrb[0].mxu0
    %2915 = vmatprep.mubr.f32.mxu0 0.0
    %2916 = vmatmul.mubr.f32.gmra.mrb[0].mxu0 %v152
    %v2917 = vpop.f32.mrb[0].mxu0
    %v2918 = vadd.f32 0.0, %v2917
    %v2919 = vpop.f32.mrb[0].mxu0
    %2920 = vmatprep.mubr.f32.mxu0 0.0
    %2921 = vmatmul.mubr.f32.gmra.mrb[0].mxu0 %v155
    %v2922 = vpop.f32.mrb[0].mxu0
    %v2923 = vadd.f32 0.0, %v2922
    %v2924 = vpop.f32.mrb[0].mxu0
    %2925 = vmatprep.mubr.f32.mxu0 0.0
    %2926 = vmatmul.mubr.f32.gmra.mrb[0].mxu0 %v158
    %v2927 = vpop.f32.mrb[0].mxu0
    %v2928 = vadd.f32 0.0, %v2927
    %v2929 = vpop.f32.mrb[0].mxu0
    %2930 = vmatprep.mubr.f32.mxu0 0.0
    %2931 = vmatmul.mubr.f32.gmra.mrb[0].mxu0 %v161
    %v2932 = vpop.f32.mrb[0].mxu0
    %v2933 = vadd.f32 0.0, %v2932
    %v2934 = vpop.f32.mrb[0].mxu0
    %2935 = vdwg.mxu0
    %v2936 = vlaneseq
    %v2937 = vshrl.u32 %v2936, 7
    %v2938 = vsub.s32 0, %v2937
    %v2939 = vrot.slane %v2840, %v2938
    %v2940 = vmul.f32 %v261, %v2939
    %v2941 = vmul.f32 %v266, %v2939
    %v2942 = vadd.f32 %v2940, %v277
    %v2943 = vadd.f32 %v2941, %v282
    %v2944 = vadd.f32 %v2942, %v2908
    %v2945 = vadd.f32 %v2943, %v2913
    %v2946 = vxor.u32 %v2944, 2147483648
    %v2947 = vxor.u32 %v2945, 2147483648
    %v2948 = vmul.f32 %v2946, 1.442695
    %v2949 = vpow.pop %v2948
    %v2950 = vmul.f32 %v2947, 1.442695
    %v2951 = vpow.pop %v2950
    %v2952 = vadd.f32 %v2949, 1.0
    %v2953 = vadd.f32 %v2951, 1.0
    %v2954 = vrcp.pop %v2952
    %v2955 = vmul.f32 1.0, %v2954
    %v2956 = vrcp.pop %v2953
    %v2957 = vmul.f32 1.0, %v2956
    %v2958 = vmul.f32 %v303, %v2939
    %v2959 = vmul.f32 %v308, %v2939
    %v2960 = vadd.f32 %v2958, %v315
    %v2961 = vadd.f32 %v2959, %v320
    %v2962 = vadd.f32 %v2960, %v2918
    %v2963 = vadd.f32 %v2961, %v2923
    %v2964 = vxor.u32 %v2962, 2147483648
    %v2965 = vxor.u32 %v2963, 2147483648
    %v2966 = vmul.f32 %v2964, 1.442695
    %v2967 = vpow.pop %v2966
    %v2968 = vmul.f32 %v2965, 1.442695
    %v2969 = vpow.pop %v2968
    %v2970 = vadd.f32 %v2967, 1.0
    %v2971 = vadd.f32 %v2969, 1.0
    %v2972 = vrcp.pop %v2970
    %v2973 = vmul.f32 1.0, %v2972
    %v2974 = vrcp.pop %v2971
    %v2975 = vmul.f32 1.0, %v2974
    %v2976 = vmul.f32 %v341, %v2939
    %v2977 = vmul.f32 %v346, %v2939
    %v2978 = vadd.f32 %v2976, %v353
    %v2979 = vadd.f32 %v2977, %v358
    %v2980 = vadd.f32 %v2928, %v365
    %v2981 = vadd.f32 %v2933, %v370
    %v2982 = vmul.f32 %v2955, %v2980
    %v2983 = vmul.f32 %v2957, %v2981
    %v2984 = vadd.f32 %v2978, %v2982
    %v2985 = vadd.f32 %v2979, %v2983
    %v2986 = vtanh.pop %v2984
    %v2987 = vtanh.pop %v2985
    %v2988 = vsub.f32 1.0, %v2973
    %v2989 = vsub.f32 1.0, %v2975
    %v2990 = vmul.f32 %v2988, %v2986
    %v2991 = vmul.f32 %v2989, %v2987
    %v2992 = vmul.f32 %v2973, %v2832
    %v2993 = vmul.f32 %v2975, %v2833
    %v2994 = vadd.f32 %v2990, %v2992
    %v2995 = vadd.f32 %v2991, %v2993
    %v2996 = vld [vmem:[%s0 + $0x11] sm:$0x1]
    %v2997 = vmul.f32 %v2996, %v560
    %v2998 = vmul.f32 %v394, %v2997
    %v2999 = vmul.f32 %v397, %v2838
    %v3000 = vadd.f32 %v2998, %v2999
    %v3001 = vrcp.pop %v3000
    %v3002 = vmul.f32 %v2997, %v3001
    %3003 = vmatprep.subr.mxu0 0.0
    %3004 = vmatpush1.msra.mxu0 %v2994
    %3005 = vmatprep.subr.mxu0 0.0
    %3006 = vmatpush1.msra.mxu0 %v2995
    %3007 = vmatprep.subr.mxu0 0.0
    %3008 = vmatpush1.msra.mxu0 0.0
    %3009 = vmatprep.subr.mxu0 0.0
    %3010 = vmatpush1.msra.mxu0 0.0
    %3011 = vmatprep.subr.mxu0 0.0
    %3012 = vmatpush1.msra.mxu0 0.0
    %3013 = vmatprep.subr.mxu0 0.0
    %3014 = vmatpush1.msra.mxu0 0.0
    %3015 = vmatprep.subr.mxu0 0.0
    %3016 = vmatpush1.msra.mxu0 0.0
    %3017 = vmatprep.subr.mxu0 0.0
    %3018 = vmatpush1.msra.mxu0 0.0
    %3019 = vmatprep.subr.mxu0 0.0
    %3020 = vmatpush1.msra.mxu0 0.0
    %3021 = vmatprep.subr.mxu0 0.0
    %3022 = vmatpush1.msra.mxu0 0.0
    %3023 = vmatprep.subr.mxu0 0.0
    %3024 = vmatpush1.msra.mxu0 0.0
    %3025 = vmatprep.subr.mxu0 0.0
    %3026 = vmatpush1.msra.mxu0 0.0
    %3027 = vmatprep.subr.mxu0 0.0
    %3028 = vmatpush1.msra.mxu0 0.0
    %3029 = vmatprep.subr.mxu0 0.0
    %3030 = vmatpush1.msra.mxu0 0.0
    %3031 = vmatprep.subr.mxu0 0.0
    %3032 = vmatpush1.msra.mxu0 0.0
    %3033 = vmatprep.subr.mxu0 0.0
    %3034 = vmatpush1.msra.mxu0 0.0
    %3035 = vmatprep.subr.mxu0 0.0
    %3036 = vmatpush1.msra.mxu0 0.0
    %3037 = vmatprep.subr.mxu0 0.0
    %3038 = vmatpush1.msra.mxu0 0.0
    %3039 = vmatprep.subr.mxu0 0.0
    %3040 = vmatpush1.msra.mxu0 0.0
    %3041 = vmatprep.subr.mxu0 0.0
    %3042 = vmatpush1.msra.mxu0 0.0
    %3043 = vmatprep.subr.mxu0 0.0
    %3044 = vmatpush1.msra.mxu0 0.0
    %3045 = vmatprep.subr.mxu0 0.0
    %3046 = vmatpush1.msra.mxu0 0.0
    %3047 = vmatprep.subr.mxu0 0.0
    %3048 = vmatpush1.msra.mxu0 0.0
    %3049 = vmatprep.subr.mxu0 0.0
    %3050 = vmatpush1.msra.mxu0 0.0
    %3051 = vmatprep.subr.mxu0 0.0
    %3052 = vmatpush1.msra.mxu0 0.0
    %3053 = vmatprep.subr.mxu0 0.0
    %3054 = vmatpush1.msra.mxu0 0.0
    %3055 = vmatprep.subr.mxu0 0.0
    %3056 = vmatpush1.msra.mxu0 0.0
    %3057 = vmatprep.subr.mxu0 0.0
    %3058 = vmatpush1.msra.mxu0 0.0
    %3059 = vmatprep.subr.mxu0 0.0
    %3060 = vmatpush1.msra.mxu0 0.0
    %3061 = vmatprep.subr.mxu0 0.0
    %3062 = vmatpush1.msra.mxu0 0.0
    %3063 = vmatprep.subr.mxu0 0.0
    %3064 = vmatpush1.msra.mxu0 0.0
    %3065 = vmatprep.subr.mxu0 0.0
    %3066 = vmatpush1.msra.mxu0 0.0
    %3067 = vmatprep.mubr.f32.mxu0 0.0
    %3068 = vmatmul.mubr.f32.gmra.mrb[0].mxu0 %v146
    %v3069 = vpop.f32.mrb[0].mxu0
    %v3070 = vadd.f32 0.0, %v3069
    %v3071 = vpop.f32.mrb[0].mxu0
    %3072 = vmatprep.mubr.f32.mxu0 0.0
    %3073 = vmatmul.mubr.f32.gmra.mrb[0].mxu0 %v149
    %v3074 = vpop.f32.mrb[0].mxu0
    %v3075 = vadd.f32 0.0, %v3074
    %v3076 = vpop.f32.mrb[0].mxu0
    %3077 = vmatprep.mubr.f32.mxu0 0.0
    %3078 = vmatmul.mubr.f32.gmra.mrb[0].mxu0 %v152
    %v3079 = vpop.f32.mrb[0].mxu0
    %v3080 = vadd.f32 0.0, %v3079
    %v3081 = vpop.f32.mrb[0].mxu0
    %3082 = vmatprep.mubr.f32.mxu0 0.0
    %3083 = vmatmul.mubr.f32.gmra.mrb[0].mxu0 %v155
    %v3084 = vpop.f32.mrb[0].mxu0
    %v3085 = vadd.f32 0.0, %v3084
    %v3086 = vpop.f32.mrb[0].mxu0
    %3087 = vmatprep.mubr.f32.mxu0 0.0
    %3088 = vmatmul.mubr.f32.gmra.mrb[0].mxu0 %v158
    %v3089 = vpop.f32.mrb[0].mxu0
    %v3090 = vadd.f32 0.0, %v3089
    %v3091 = vpop.f32.mrb[0].mxu0
    %3092 = vmatprep.mubr.f32.mxu0 0.0
    %3093 = vmatmul.mubr.f32.gmra.mrb[0].mxu0 %v161
    %v3094 = vpop.f32.mrb[0].mxu0
    %v3095 = vadd.f32 0.0, %v3094
    %v3096 = vpop.f32.mrb[0].mxu0
    %3097 = vdwg.mxu0
    %v3098 = vlaneseq
    %v3099 = vshrl.u32 %v3098, 7
    %v3100 = vsub.s32 0, %v3099
    %v3101 = vrot.slane %v3002, %v3100
    %v3102 = vmul.f32 %v261, %v3101
    %v3103 = vmul.f32 %v266, %v3101
    %v3104 = vadd.f32 %v3102, %v277
    %v3105 = vadd.f32 %v3103, %v282
    %v3106 = vadd.f32 %v3104, %v3070
    %v3107 = vadd.f32 %v3105, %v3075
    %v3108 = vxor.u32 %v3106, 2147483648
    %v3109 = vxor.u32 %v3107, 2147483648
    %v3110 = vmul.f32 %v3108, 1.442695
    %v3111 = vpow.pop %v3110
    %v3112 = vmul.f32 %v3109, 1.442695
    %v3113 = vpow.pop %v3112
    %v3114 = vadd.f32 %v3111, 1.0
    %v3115 = vadd.f32 %v3113, 1.0
    %v3116 = vrcp.pop %v3114
    %v3117 = vmul.f32 1.0, %v3116
    %v3118 = vrcp.pop %v3115
    %v3119 = vmul.f32 1.0, %v3118
    %v3120 = vmul.f32 %v303, %v3101
    %v3121 = vmul.f32 %v308, %v3101
    %v3122 = vadd.f32 %v3120, %v315
    %v3123 = vadd.f32 %v3121, %v320
    %v3124 = vadd.f32 %v3122, %v3080
    %v3125 = vadd.f32 %v3123, %v3085
    %v3126 = vxor.u32 %v3124, 2147483648
    %v3127 = vxor.u32 %v3125, 2147483648
    %v3128 = vmul.f32 %v3126, 1.442695
    %v3129 = vpow.pop %v3128
    %v3130 = vmul.f32 %v3127, 1.442695
    %v3131 = vpow.pop %v3130
    %v3132 = vadd.f32 %v3129, 1.0
    %v3133 = vadd.f32 %v3131, 1.0
    %v3134 = vrcp.pop %v3132
    %v3135 = vmul.f32 1.0, %v3134
    %v3136 = vrcp.pop %v3133
    %v3137 = vmul.f32 1.0, %v3136
    %v3138 = vmul.f32 %v341, %v3101
    %v3139 = vmul.f32 %v346, %v3101
    %v3140 = vadd.f32 %v3138, %v353
    %v3141 = vadd.f32 %v3139, %v358
    %v3142 = vadd.f32 %v3090, %v365
    %v3143 = vadd.f32 %v3095, %v370
    %v3144 = vmul.f32 %v3117, %v3142
    %v3145 = vmul.f32 %v3119, %v3143
    %v3146 = vadd.f32 %v3140, %v3144
    %v3147 = vadd.f32 %v3141, %v3145
    %v3148 = vtanh.pop %v3146
    %v3149 = vtanh.pop %v3147
    %v3150 = vsub.f32 1.0, %v3135
    %v3151 = vsub.f32 1.0, %v3137
    %v3152 = vmul.f32 %v3150, %v3148
    %v3153 = vmul.f32 %v3151, %v3149
    %v3154 = vmul.f32 %v3135, %v2994
    %v3155 = vmul.f32 %v3137, %v2995
    %v3156 = vadd.f32 %v3152, %v3154
    %v3157 = vadd.f32 %v3153, %v3155
    %v3158 = vld [vmem:[%s0 + $0x12] sm:$0x1]
    %v3159 = vmul.f32 %v3158, %v725
    %v3160 = vmul.f32 %v394, %v3159
    %v3161 = vmul.f32 %v397, %v3000
    %v3162 = vadd.f32 %v3160, %v3161
    %v3163 = vrcp.pop %v3162
    %v3164 = vmul.f32 %v3159, %v3163
    %3165 = vmatprep.subr.mxu0 0.0
    %3166 = vmatpush1.msra.mxu0 %v3156
    %3167 = vmatprep.subr.mxu0 0.0
    %3168 = vmatpush1.msra.mxu0 %v3157
    %3169 = vmatprep.subr.mxu0 0.0
    %3170 = vmatpush1.msra.mxu0 0.0
    %3171 = vmatprep.subr.mxu0 0.0
    %3172 = vmatpush1.msra.mxu0 0.0
    %3173 = vmatprep.subr.mxu0 0.0
    %3174 = vmatpush1.msra.mxu0 0.0
    %3175 = vmatprep.subr.mxu0 0.0
    %3176 = vmatpush1.msra.mxu0 0.0
    %3177 = vmatprep.subr.mxu0 0.0
    %3178 = vmatpush1.msra.mxu0 0.0
    %3179 = vmatprep.subr.mxu0 0.0
    %3180 = vmatpush1.msra.mxu0 0.0
    %3181 = vmatprep.subr.mxu0 0.0
    %3182 = vmatpush1.msra.mxu0 0.0
    %3183 = vmatprep.subr.mxu0 0.0
    %3184 = vmatpush1.msra.mxu0 0.0
    %3185 = vmatprep.subr.mxu0 0.0
    %3186 = vmatpush1.msra.mxu0 0.0
    %3187 = vmatprep.subr.mxu0 0.0
    %3188 = vmatpush1.msra.mxu0 0.0
    %3189 = vmatprep.subr.mxu0 0.0
    %3190 = vmatpush1.msra.mxu0 0.0
    %3191 = vmatprep.subr.mxu0 0.0
    %3192 = vmatpush1.msra.mxu0 0.0
    %3193 = vmatprep.subr.mxu0 0.0
    %3194 = vmatpush1.msra.mxu0 0.0
    %3195 = vmatprep.subr.mxu0 0.0
    %3196 = vmatpush1.msra.mxu0 0.0
    %3197 = vmatprep.subr.mxu0 0.0
    %3198 = vmatpush1.msra.mxu0 0.0
    %3199 = vmatprep.subr.mxu0 0.0
    %3200 = vmatpush1.msra.mxu0 0.0
    %3201 = vmatprep.subr.mxu0 0.0
    %3202 = vmatpush1.msra.mxu0 0.0
    %3203 = vmatprep.subr.mxu0 0.0
    %3204 = vmatpush1.msra.mxu0 0.0
    %3205 = vmatprep.subr.mxu0 0.0
    %3206 = vmatpush1.msra.mxu0 0.0
    %3207 = vmatprep.subr.mxu0 0.0
    %3208 = vmatpush1.msra.mxu0 0.0
    %3209 = vmatprep.subr.mxu0 0.0
    %3210 = vmatpush1.msra.mxu0 0.0
    %3211 = vmatprep.subr.mxu0 0.0
    %3212 = vmatpush1.msra.mxu0 0.0
    %3213 = vmatprep.subr.mxu0 0.0
    %3214 = vmatpush1.msra.mxu0 0.0
    %3215 = vmatprep.subr.mxu0 0.0
    %3216 = vmatpush1.msra.mxu0 0.0
    %3217 = vmatprep.subr.mxu0 0.0
    %3218 = vmatpush1.msra.mxu0 0.0
    %3219 = vmatprep.subr.mxu0 0.0
    %3220 = vmatpush1.msra.mxu0 0.0
    %3221 = vmatprep.subr.mxu0 0.0
    %3222 = vmatpush1.msra.mxu0 0.0
    %3223 = vmatprep.subr.mxu0 0.0
    %3224 = vmatpush1.msra.mxu0 0.0
    %3225 = vmatprep.subr.mxu0 0.0
    %3226 = vmatpush1.msra.mxu0 0.0
    %3227 = vmatprep.subr.mxu0 0.0
    %3228 = vmatpush1.msra.mxu0 0.0
    %3229 = vmatprep.mubr.f32.mxu0 0.0
    %3230 = vmatmul.mubr.f32.gmra.mrb[0].mxu0 %v146
    %v3231 = vpop.f32.mrb[0].mxu0
    %v3232 = vadd.f32 0.0, %v3231
    %v3233 = vpop.f32.mrb[0].mxu0
    %3234 = vmatprep.mubr.f32.mxu0 0.0
    %3235 = vmatmul.mubr.f32.gmra.mrb[0].mxu0 %v149
    %v3236 = vpop.f32.mrb[0].mxu0
    %v3237 = vadd.f32 0.0, %v3236
    %v3238 = vpop.f32.mrb[0].mxu0
    %3239 = vmatprep.mubr.f32.mxu0 0.0
    %3240 = vmatmul.mubr.f32.gmra.mrb[0].mxu0 %v152
    %v3241 = vpop.f32.mrb[0].mxu0
    %v3242 = vadd.f32 0.0, %v3241
    %v3243 = vpop.f32.mrb[0].mxu0
    %3244 = vmatprep.mubr.f32.mxu0 0.0
    %3245 = vmatmul.mubr.f32.gmra.mrb[0].mxu0 %v155
    %v3246 = vpop.f32.mrb[0].mxu0
    %v3247 = vadd.f32 0.0, %v3246
    %v3248 = vpop.f32.mrb[0].mxu0
    %3249 = vmatprep.mubr.f32.mxu0 0.0
    %3250 = vmatmul.mubr.f32.gmra.mrb[0].mxu0 %v158
    %v3251 = vpop.f32.mrb[0].mxu0
    %v3252 = vadd.f32 0.0, %v3251
    %v3253 = vpop.f32.mrb[0].mxu0
    %3254 = vmatprep.mubr.f32.mxu0 0.0
    %3255 = vmatmul.mubr.f32.gmra.mrb[0].mxu0 %v161
    %v3256 = vpop.f32.mrb[0].mxu0
    %v3257 = vadd.f32 0.0, %v3256
    %v3258 = vpop.f32.mrb[0].mxu0
    %3259 = vdwg.mxu0
    %v3260 = vlaneseq
    %v3261 = vshrl.u32 %v3260, 7
    %v3262 = vsub.s32 0, %v3261
    %v3263 = vrot.slane %v3164, %v3262
    %v3264 = vmul.f32 %v261, %v3263
    %v3265 = vmul.f32 %v266, %v3263
    %v3266 = vadd.f32 %v3264, %v277
    %v3267 = vadd.f32 %v3265, %v282
    %v3268 = vadd.f32 %v3266, %v3232
    %v3269 = vadd.f32 %v3267, %v3237
    %v3270 = vxor.u32 %v3268, 2147483648
    %v3271 = vxor.u32 %v3269, 2147483648
    %v3272 = vmul.f32 %v3270, 1.442695
    %v3273 = vpow.pop %v3272
    %v3274 = vmul.f32 %v3271, 1.442695
    %v3275 = vpow.pop %v3274
    %v3276 = vadd.f32 %v3273, 1.0
    %v3277 = vadd.f32 %v3275, 1.0
    %v3278 = vrcp.pop %v3276
    %v3279 = vmul.f32 1.0, %v3278
    %v3280 = vrcp.pop %v3277
    %v3281 = vmul.f32 1.0, %v3280
    %v3282 = vmul.f32 %v303, %v3263
    %v3283 = vmul.f32 %v308, %v3263
    %v3284 = vadd.f32 %v3282, %v315
    %v3285 = vadd.f32 %v3283, %v320
    %v3286 = vadd.f32 %v3284, %v3242
    %v3287 = vadd.f32 %v3285, %v3247
    %v3288 = vxor.u32 %v3286, 2147483648
    %v3289 = vxor.u32 %v3287, 2147483648
    %v3290 = vmul.f32 %v3288, 1.442695
    %v3291 = vpow.pop %v3290
    %v3292 = vmul.f32 %v3289, 1.442695
    %v3293 = vpow.pop %v3292
    %v3294 = vadd.f32 %v3291, 1.0
    %v3295 = vadd.f32 %v3293, 1.0
    %v3296 = vrcp.pop %v3294
    %v3297 = vmul.f32 1.0, %v3296
    %v3298 = vrcp.pop %v3295
    %v3299 = vmul.f32 1.0, %v3298
    %v3300 = vmul.f32 %v341, %v3263
    %v3301 = vmul.f32 %v346, %v3263
    %v3302 = vadd.f32 %v3300, %v353
    %v3303 = vadd.f32 %v3301, %v358
    %v3304 = vadd.f32 %v3252, %v365
    %v3305 = vadd.f32 %v3257, %v370
    %v3306 = vmul.f32 %v3279, %v3304
    %v3307 = vmul.f32 %v3281, %v3305
    %v3308 = vadd.f32 %v3302, %v3306
    %v3309 = vadd.f32 %v3303, %v3307
    %v3310 = vtanh.pop %v3308
    %v3311 = vtanh.pop %v3309
    %v3312 = vsub.f32 1.0, %v3297
    %v3313 = vsub.f32 1.0, %v3299
    %v3314 = vmul.f32 %v3312, %v3310
    %v3315 = vmul.f32 %v3313, %v3311
    %v3316 = vmul.f32 %v3297, %v3156
    %v3317 = vmul.f32 %v3299, %v3157
    %v3318 = vadd.f32 %v3314, %v3316
    %v3319 = vadd.f32 %v3315, %v3317
    %v3320 = vld [vmem:[%s0 + $0x13] sm:$0x1]
    %v3321 = vmul.f32 %v3320, %v890
    %v3322 = vmul.f32 %v394, %v3321
    %v3323 = vmul.f32 %v397, %v3162
    %v3324 = vadd.f32 %v3322, %v3323
    %v3325 = vrcp.pop %v3324
    %v3326 = vmul.f32 %v3321, %v3325
    %3327 = vmatprep.subr.mxu0 0.0
    %3328 = vmatpush1.msra.mxu0 %v3318
    %3329 = vmatprep.subr.mxu0 0.0
    %3330 = vmatpush1.msra.mxu0 %v3319
    %3331 = vmatprep.subr.mxu0 0.0
    %3332 = vmatpush1.msra.mxu0 0.0
    %3333 = vmatprep.subr.mxu0 0.0
    %3334 = vmatpush1.msra.mxu0 0.0
    %3335 = vmatprep.subr.mxu0 0.0
    %3336 = vmatpush1.msra.mxu0 0.0
    %3337 = vmatprep.subr.mxu0 0.0
    %3338 = vmatpush1.msra.mxu0 0.0
    %3339 = vmatprep.subr.mxu0 0.0
    %3340 = vmatpush1.msra.mxu0 0.0
    %3341 = vmatprep.subr.mxu0 0.0
    %3342 = vmatpush1.msra.mxu0 0.0
    %3343 = vmatprep.subr.mxu0 0.0
    %3344 = vmatpush1.msra.mxu0 0.0
    %3345 = vmatprep.subr.mxu0 0.0
    %3346 = vmatpush1.msra.mxu0 0.0
    %3347 = vmatprep.subr.mxu0 0.0
    %3348 = vmatpush1.msra.mxu0 0.0
    %3349 = vmatprep.subr.mxu0 0.0
    %3350 = vmatpush1.msra.mxu0 0.0
    %3351 = vmatprep.subr.mxu0 0.0
    %3352 = vmatpush1.msra.mxu0 0.0
    %3353 = vmatprep.subr.mxu0 0.0
    %3354 = vmatpush1.msra.mxu0 0.0
    %3355 = vmatprep.subr.mxu0 0.0
    %3356 = vmatpush1.msra.mxu0 0.0
    %3357 = vmatprep.subr.mxu0 0.0
    %3358 = vmatpush1.msra.mxu0 0.0
    %3359 = vmatprep.subr.mxu0 0.0
    %3360 = vmatpush1.msra.mxu0 0.0
    %3361 = vmatprep.subr.mxu0 0.0
    %3362 = vmatpush1.msra.mxu0 0.0
    %3363 = vmatprep.subr.mxu0 0.0
    %3364 = vmatpush1.msra.mxu0 0.0
    %3365 = vmatprep.subr.mxu0 0.0
    %3366 = vmatpush1.msra.mxu0 0.0
    %3367 = vmatprep.subr.mxu0 0.0
    %3368 = vmatpush1.msra.mxu0 0.0
    %3369 = vmatprep.subr.mxu0 0.0
    %3370 = vmatpush1.msra.mxu0 0.0
    %3371 = vmatprep.subr.mxu0 0.0
    %3372 = vmatpush1.msra.mxu0 0.0
    %3373 = vmatprep.subr.mxu0 0.0
    %3374 = vmatpush1.msra.mxu0 0.0
    %3375 = vmatprep.subr.mxu0 0.0
    %3376 = vmatpush1.msra.mxu0 0.0
    %3377 = vmatprep.subr.mxu0 0.0
    %3378 = vmatpush1.msra.mxu0 0.0
    %3379 = vmatprep.subr.mxu0 0.0
    %3380 = vmatpush1.msra.mxu0 0.0
    %3381 = vmatprep.subr.mxu0 0.0
    %3382 = vmatpush1.msra.mxu0 0.0
    %3383 = vmatprep.subr.mxu0 0.0
    %3384 = vmatpush1.msra.mxu0 0.0
    %3385 = vmatprep.subr.mxu0 0.0
    %3386 = vmatpush1.msra.mxu0 0.0
    %3387 = vmatprep.subr.mxu0 0.0
    %3388 = vmatpush1.msra.mxu0 0.0
    %3389 = vmatprep.subr.mxu0 0.0
    %3390 = vmatpush1.msra.mxu0 0.0
    %3391 = vmatprep.mubr.f32.mxu0 0.0
    %3392 = vmatmul.mubr.f32.gmra.mrb[0].mxu0 %v146
    %v3393 = vpop.f32.mrb[0].mxu0
    %v3394 = vadd.f32 0.0, %v3393
    %v3395 = vpop.f32.mrb[0].mxu0
    %3396 = vmatprep.mubr.f32.mxu0 0.0
    %3397 = vmatmul.mubr.f32.gmra.mrb[0].mxu0 %v149
    %v3398 = vpop.f32.mrb[0].mxu0
    %v3399 = vadd.f32 0.0, %v3398
    %v3400 = vpop.f32.mrb[0].mxu0
    %3401 = vmatprep.mubr.f32.mxu0 0.0
    %3402 = vmatmul.mubr.f32.gmra.mrb[0].mxu0 %v152
    %v3403 = vpop.f32.mrb[0].mxu0
    %v3404 = vadd.f32 0.0, %v3403
    %v3405 = vpop.f32.mrb[0].mxu0
    %3406 = vmatprep.mubr.f32.mxu0 0.0
    %3407 = vmatmul.mubr.f32.gmra.mrb[0].mxu0 %v155
    %v3408 = vpop.f32.mrb[0].mxu0
    %v3409 = vadd.f32 0.0, %v3408
    %v3410 = vpop.f32.mrb[0].mxu0
    %3411 = vmatprep.mubr.f32.mxu0 0.0
    %3412 = vmatmul.mubr.f32.gmra.mrb[0].mxu0 %v158
    %v3413 = vpop.f32.mrb[0].mxu0
    %v3414 = vadd.f32 0.0, %v3413
    %v3415 = vpop.f32.mrb[0].mxu0
    %3416 = vmatprep.mubr.f32.mxu0 0.0
    %3417 = vmatmul.mubr.f32.gmra.mrb[0].mxu0 %v161
    %v3418 = vpop.f32.mrb[0].mxu0
    %v3419 = vadd.f32 0.0, %v3418
    %v3420 = vpop.f32.mrb[0].mxu0
    %3421 = vdwg.mxu0
    %v3422 = vlaneseq
    %v3423 = vshrl.u32 %v3422, 7
    %v3424 = vsub.s32 0, %v3423
    %v3425 = vrot.slane %v3326, %v3424
    %v3426 = vmul.f32 %v261, %v3425
    %v3427 = vmul.f32 %v266, %v3425
    %v3428 = vadd.f32 %v3426, %v277
    %v3429 = vadd.f32 %v3427, %v282
    %v3430 = vadd.f32 %v3428, %v3394
    %v3431 = vadd.f32 %v3429, %v3399
    %v3432 = vxor.u32 %v3430, 2147483648
    %v3433 = vxor.u32 %v3431, 2147483648
    %v3434 = vmul.f32 %v3432, 1.442695
    %v3435 = vpow.pop %v3434
    %v3436 = vmul.f32 %v3433, 1.442695
    %v3437 = vpow.pop %v3436
    %v3438 = vadd.f32 %v3435, 1.0
    %v3439 = vadd.f32 %v3437, 1.0
    %v3440 = vrcp.pop %v3438
    %v3441 = vmul.f32 1.0, %v3440
    %v3442 = vrcp.pop %v3439
    %v3443 = vmul.f32 1.0, %v3442
    %v3444 = vmul.f32 %v303, %v3425
    %v3445 = vmul.f32 %v308, %v3425
    %v3446 = vadd.f32 %v3444, %v315
    %v3447 = vadd.f32 %v3445, %v320
    %v3448 = vadd.f32 %v3446, %v3404
    %v3449 = vadd.f32 %v3447, %v3409
    %v3450 = vxor.u32 %v3448, 2147483648
    %v3451 = vxor.u32 %v3449, 2147483648
    %v3452 = vmul.f32 %v3450, 1.442695
    %v3453 = vpow.pop %v3452
    %v3454 = vmul.f32 %v3451, 1.442695
    %v3455 = vpow.pop %v3454
    %v3456 = vadd.f32 %v3453, 1.0
    %v3457 = vadd.f32 %v3455, 1.0
    %v3458 = vrcp.pop %v3456
    %v3459 = vmul.f32 1.0, %v3458
    %v3460 = vrcp.pop %v3457
    %v3461 = vmul.f32 1.0, %v3460
    %v3462 = vmul.f32 %v341, %v3425
    %v3463 = vmul.f32 %v346, %v3425
    %v3464 = vadd.f32 %v3462, %v353
    %v3465 = vadd.f32 %v3463, %v358
    %v3466 = vadd.f32 %v3414, %v365
    %v3467 = vadd.f32 %v3419, %v370
    %v3468 = vmul.f32 %v3441, %v3466
    %v3469 = vmul.f32 %v3443, %v3467
    %v3470 = vadd.f32 %v3464, %v3468
    %v3471 = vadd.f32 %v3465, %v3469
    %v3472 = vtanh.pop %v3470
    %v3473 = vtanh.pop %v3471
    %v3474 = vsub.f32 1.0, %v3459
    %v3475 = vsub.f32 1.0, %v3461
    %v3476 = vmul.f32 %v3474, %v3472
    %v3477 = vmul.f32 %v3475, %v3473
    %v3478 = vmul.f32 %v3459, %v3318
    %v3479 = vmul.f32 %v3461, %v3319
    %v3480 = vadd.f32 %v3476, %v3478
    %v3481 = vadd.f32 %v3477, %v3479
    %v3482 = vld [vmem:[%s6] sm:$0xff]
    %v3483 = vld [vmem:[%s6 + $0x8] sm:$0x3f]
    %v3484 = vld [vmem:[%s7] sm:$0xff]
    %v3485 = vld [vmem:[%s7 + $0x8] sm:$0x3f]
    %3487 = vset.pattern.permute.xlu0 0
    %3488 = vperm.xlu0 %3487, %v3484
    %v3489 = vpop.permute.xlu0 %3488
    %3492 = vset.pattern.permute.xlu0 0
    %3493 = vperm.xlu0 %3492, %v3485
    %v3494 = vpop.permute.xlu0 %3493
    %v3497 = vsel %vm144, %v3482, 0
    %v3500 = vsel %vm144, %v3483, 0
    %3502 = vmatprep.subr.mxu0 0.0
    %3503 = vmatpush1.msra.mxu0 %v3480
    %3504 = vmatprep.subr.mxu0 0.0
    %3505 = vmatpush1.msra.mxu0 %v3481
    %3506 = vmatprep.subr.mxu0 0.0
    %3507 = vmatpush1.msra.mxu0 0.0
    %3508 = vmatprep.subr.mxu0 0.0
    %3509 = vmatpush1.msra.mxu0 0.0
    %3510 = vmatprep.subr.mxu0 0.0
    %3511 = vmatpush1.msra.mxu0 0.0
    %3512 = vmatprep.subr.mxu0 0.0
    %3513 = vmatpush1.msra.mxu0 0.0
    %3514 = vmatprep.subr.mxu0 0.0
    %3515 = vmatpush1.msra.mxu0 0.0
    %3516 = vmatprep.subr.mxu0 0.0
    %3517 = vmatpush1.msra.mxu0 0.0
    %3518 = vmatprep.subr.mxu0 0.0
    %3519 = vmatpush1.msra.mxu0 0.0
    %3520 = vmatprep.subr.mxu0 0.0
    %3521 = vmatpush1.msra.mxu0 0.0
    %3522 = vmatprep.subr.mxu0 0.0
    %3523 = vmatpush1.msra.mxu0 0.0
    %3524 = vmatprep.subr.mxu0 0.0
    %3525 = vmatpush1.msra.mxu0 0.0
    %3526 = vmatprep.subr.mxu0 0.0
    %3527 = vmatpush1.msra.mxu0 0.0
    %3528 = vmatprep.subr.mxu0 0.0
    %3529 = vmatpush1.msra.mxu0 0.0
    %3530 = vmatprep.subr.mxu0 0.0
    %3531 = vmatpush1.msra.mxu0 0.0
    %3532 = vmatprep.subr.mxu0 0.0
    %3533 = vmatpush1.msra.mxu0 0.0
    %3534 = vmatprep.subr.mxu0 0.0
    %3535 = vmatpush1.msra.mxu0 0.0
    %3536 = vmatprep.subr.mxu0 0.0
    %3537 = vmatpush1.msra.mxu0 0.0
    %3538 = vmatprep.subr.mxu0 0.0
    %3539 = vmatpush1.msra.mxu0 0.0
    %3540 = vmatprep.subr.mxu0 0.0
    %3541 = vmatpush1.msra.mxu0 0.0
    %3542 = vmatprep.subr.mxu0 0.0
    %3543 = vmatpush1.msra.mxu0 0.0
    %3544 = vmatprep.subr.mxu0 0.0
    %3545 = vmatpush1.msra.mxu0 0.0
    %3546 = vmatprep.subr.mxu0 0.0
    %3547 = vmatpush1.msra.mxu0 0.0
    %3548 = vmatprep.subr.mxu0 0.0
    %3549 = vmatpush1.msra.mxu0 0.0
    %3550 = vmatprep.subr.mxu0 0.0
    %3551 = vmatpush1.msra.mxu0 0.0
    %3552 = vmatprep.subr.mxu0 0.0
    %3553 = vmatpush1.msra.mxu0 0.0
    %3554 = vmatprep.subr.mxu0 0.0
    %3555 = vmatpush1.msra.mxu0 0.0
    %3556 = vmatprep.subr.mxu0 0.0
    %3557 = vmatpush1.msra.mxu0 0.0
    %3558 = vmatprep.subr.mxu0 0.0
    %3559 = vmatpush1.msra.mxu0 0.0
    %3560 = vmatprep.subr.mxu0 0.0
    %3561 = vmatpush1.msra.mxu0 0.0
    %3562 = vmatprep.subr.mxu0 0.0
    %3563 = vmatpush1.msra.mxu0 0.0
    %3564 = vmatprep.subr.mxu0 0.0
    %3565 = vmatpush1.msra.mxu0 0.0
    %3566 = vmatprep.mubr.f32.mxu0 0.0
    %3567 = vmatmul.mubr.f32.gmra.mrb[0].mxu0 %v3497
    %v3568 = vpop.f32.mrb[0].mxu0
    %v3569 = vadd.f32 %v3489, %v3568
    %v3570 = vpop.f32.mrb[0].mxu0
    %3571 = vmatprep.mubr.f32.mxu0 0.0
    %3572 = vmatmul.mubr.f32.gmra.mrb[0].mxu0 %v3500
    %v3573 = vpop.f32.mrb[0].mxu0
    %v3574 = vadd.f32 %v3494, %v3573
    %v3575 = vpop.f32.mrb[0].mxu0
    %3576 = vdwg.mxu0
    %v3577 = vadd.s32 %v53, 8
    %vm3578 = vcmp.lt.s32.totalorder %v3577, 0
    %v3579 = vsub.s32 0, %v3577
    %v3580 = vsel %vm3578, %v3579, %v3577
    %v3581 = vmul.u32.u64.compose %v3580, 3435973837
    %v3582 = vextract.low.u32 %v3581
    %v3583 = vextract.high.u32 %v3581
    %v3584 = vshrl.u32 %v3583, 2
    %v3585 = vmul.u32 %v3584, 5
    %v3586 = vsub.s32 %v3580, %v3585
    %v3587 = vsub.s32 0, %v3586
    %v3588 = vsel %vm3578, %v3587, %v3586
    %vm3589 = vcmp.ne.s32.totalorder %v3588, 0
    %vm3590 = vcmp.lt.s32.totalorder %v3588, 0
    %vm3591 = vmand %vm3590, %vm3589
    %v3592 = vadd.s32 %v3588, 5
    %v3593 = vsel %vm3591, %v3592, %v3588
    %v3594 = vsub.s32 %v3593, %v73
    %vm3595 = vcmp.lt.s32.totalorder %v3594, 0
    %v3596 = vsub.s32 0, %v3594
    %v3597 = vsel %vm3595, %v3596, %v3594
    %v3598 = vmul.u32.u64.compose %v3597, 3435973837
    %v3599 = vextract.low.u32 %v3598
    %v3600 = vextract.high.u32 %v3598
    %v3601 = vshrl.u32 %v3600, 2
    %v3602 = vmul.u32 %v3601, 5
    %v3603 = vsub.s32 %v3597, %v3602
    %v3604 = vsub.s32 0, %v3603
    %v3605 = vsel %vm3595, %v3604, %v3603
    %vm3606 = vcmp.ne.s32.totalorder %v3605, 0
    %vm3607 = vcmp.lt.s32.totalorder %v3605, 0
    %vm3608 = vmand %vm3607, %vm3606
    %v3609 = vadd.s32 %v3605, 5
    %v3610 = vsel %vm3608, %v3609, %v3605
    %vm3611 = vcmp.eq.s32.totalorder %v3610, 0
    %v3612 = vsel %vm3611, %v93, 0.0
    %vm3613 = vcmp.eq.s32.totalorder %v3610, 1
    %v3614 = vsel %vm3613, %v97, %v3612
    %vm3615 = vcmp.eq.s32.totalorder %v3610, 2
    %v3616 = vsel %vm3615, %v101, %v3614
    %vm3617 = vcmp.eq.s32.totalorder %v3610, 3
    %v3618 = vsel %vm3617, %v105, %v3616
    %vm3619 = vcmp.eq.s32.totalorder %v3610, 4
    %v3620 = vsel %vm3619, %v109, %v3618
    %v3621 = vlaneseq
    %v3622 = vshrl.u32 %v3621, 7
    %v3623 = vsub.s32 0, %v3622
    %v3624 = vrot.slane %v3324, %v3623
    %v3625 = vmul.f32 %v3624, %v110
    %v3626 = vmul.f32 %v3624, %v3620
    %v3627 = vmul.f32 %v3625, %v3569
    %v3628 = vmul.f32 %v3626, %v3574
    %3629 = vst [vmem:[#allocation6] sm:$0xff] %v3627
    %3630 = vst [vmem:[#allocation6 + $0x8] sm:$0x3f] %v3628
    // Predicated region
    $region46: #{tpu_custom_call.1} parent=1 // pred_check
      _
    $region47: #{tpu_custom_call.1} parent=1 // pred_check_branch
      %3632 = sbr.rel (0) target = $region49
    $region48: #{tpu_custom_call.1} parent=1 // pred_region
      %s3634 = ssub.s32 256, 256
      %3635 = vsyncadd [#allocation4], %s3634
      %s3636 = sshll.u32 [#allocation6], 4
      %s3637 = int_to_ptr.vmem [resolvable:$true] %s3636
      %3642 = dma.vmem_to_hbm [thread:$0]  %s3637, 256, %s10, [#allocation4], 128, 128, 8
    $region49: #{tpu_custom_call.1} parent=1 // pred_fallthru
      _
    // Predicated region
    $region50: #{tpu_custom_call.1} parent=1 // pred_check
      _
    $region51: #{tpu_custom_call.1} parent=1 // pred_check_branch
      %3644 = sbr.rel (0) target = $region53
    $region52: #{tpu_custom_call.1} parent=1 // pred_region
      %3645 = dma.done [#allocation4], 256
    $region53: #{tpu_custom_call.1} parent=1 // pred_fallthru
      _
    %3646 = vsyncpa [#allocation4], 1
    %3647 = vsyncpa [#allocation5], 1

</llo_original>
